<compile_context>
chip_gen: v6e
topology: v6e:2x2x1
jax: 0.10.0
libtpu: 0.0.40
codegen_flags: <defaults>
</compile_context>

<pallas_src>
import functools
import math

import jax
import jax.numpy as jnp
from jax.experimental import pallas as pl
from jax.experimental.pallas import tpu as pltpu


# ----------------------------------------------------------------------------
# Small helpers (padding to TPU-friendly shapes)
# ----------------------------------------------------------------------------
def _round_up(n, m):
    return ((n + m - 1) // m) * m


def _pad_axis(a, axis, target):
    if a.shape[axis] == target:
        return a
    pad = [(0, 0)] * a.ndim
    pad[axis] = (0, target - a.shape[axis])
    return jnp.pad(a, pad)


def _pad_gate_cols(a, H, Hp, n_gates):
    """(..., n_gates*H) -> (..., n_gates*Hp); each gate zero-padded to Hp lanes."""
    if H == Hp:
        return a
    parts = []
    for g in range(n_gates):
        parts.append(_pad_axis(a[..., g * H:(g + 1) * H], a.ndim - 1, Hp))
    return jnp.concatenate(parts, axis=-1)


def _pick_time_block(T, max_tc=16):
    tc = min(T, max_tc)
    while T % tc:
        tc -= 1
    return tc


# ----------------------------------------------------------------------------
# Kernel 1: single-layer LSTM (the pre_model). Grid walks time in chunks of Tc;
# the input projection is precomputed, so each step is one h@Whh matmul.
# ----------------------------------------------------------------------------
def _lstm_kernel(gx_ref, whh_ref, out_ref, h_sc, c_sc, *, Tc, Hp):
    ci = pl.program_id(0)

    @pl.when(ci == 0)
    def _():
        h_sc[...] = jnp.zeros_like(h_sc)
        c_sc[...] = jnp.zeros_like(c_sc)

    h = h_sc[...]                         # (NBp, Hp)
    c = c_sc[...]
    whh = whh_ref[...]                    # (Hp, 4*Hp)
    for s in range(Tc):                   # short, fully unrolled
        gates = gx_ref[s] + jnp.dot(h, whh, preferred_element_type=jnp.float32)
        i_g = jax.nn.sigmoid(gates[:, 0 * Hp:1 * Hp])
        f_g = jax.nn.sigmoid(gates[:, 1 * Hp:2 * Hp])
        g_g = jnp.tanh(gates[:, 2 * Hp:3 * Hp])
        o_g = jax.nn.sigmoid(gates[:, 3 * Hp:4 * Hp])
        c = f_g * c + i_g * g_g
        h = o_g * jnp.tanh(c)
        out_ref[s] = h
    h_sc[...] = h
    c_sc[...] = c


def lstm_forward(gx, whhT_pad, *, Tc):
    T, NBp, G = gx.shape                  # G == 4*Hp
    Hp = G // 4
    n_chunks = T // Tc
    return pl.pallas_call(
        functools.partial(_lstm_kernel, Tc=Tc, Hp=Hp),
        out_shape=jax.ShapeDtypeStruct((T, NBp, Hp), jnp.float32),
        grid_spec=pltpu.PrefetchScalarGridSpec(
            num_scalar_prefetch=0,
            grid=(n_chunks,),
            in_specs=[
                pl.BlockSpec((Tc, NBp, 4 * Hp), lambda ci: (ci, 0, 0)),
                pl.BlockSpec((Hp, 4 * Hp), lambda ci: (0, 0)),
            ],
            out_specs=pl.BlockSpec((Tc, NBp, Hp), lambda ci: (ci, 0, 0)),
            scratch_shapes=[pltpu.VMEM((NBp, Hp), jnp.float32),
                            pltpu.VMEM((NBp, Hp), jnp.float32)],
        ),
        compiler_params=pltpu.CompilerParams(dimension_semantics=("arbitrary",)),
    )(gx, whhT_pad)


# ----------------------------------------------------------------------------
# Kernel 2: MILSTMCell chain + fused final linear filter.
#   gx holds the precomputed [Y@W_ih+b4 | P@W_ih_p+b2] projection (6*Hp wide);
#   whh is the fused [W_hh | W_hh_p]^T (Hp, 6*Hp). The filter input rows
#   (replicating torch.cat(output,0).view(B,T,H)[:, -1, :]) are captured into
#   a VMEM scratch as they are produced, and the final linear runs at the
#   last grid step.
# ----------------------------------------------------------------------------
def _milstm_kernel(gx_ref, whh_ref, wa_ref, ba_ref, fw_ref, fb_ref,
                   out_ref, h_sc, c_sc, filt_sc, *, Tc, Hp, capture):
    ci = pl.program_id(0)

    @pl.when(ci == 0)
    def _():
        h_sc[...] = jnp.zeros_like(h_sc)      # == initHidden() zeros
        c_sc[...] = jnp.zeros_like(c_sc)
        filt_sc[...] = jnp.zeros_like(filt_sc)

    h = h_sc[...]                             # (Bp, Hp)
    c = c_sc[...]
    whh = whh_ref[...]                        # (Hp, 6*Hp)
    wa = wa_ref[...]                          # (1, Hp)
    ba = ba_ref[0, 0]                         # b_a scalar from SMEM

    for s in range(Tc):
        gates = gx_ref[s] + jnp.dot(h, whh, preferred_element_type=jnp.float32)
        i_g = jax.nn.sigmoid(gates[:, 0 * Hp:1 * Hp])
        f_g = jax.nn.sigmoid(gates[:, 1 * Hp:2 * Hp])
        g_g = jnp.tanh(gates[:, 2 * Hp:3 * Hp])
        o_g = jax.nn.sigmoid(gates[:, 3 * Hp:4 * Hp])
        ip_g = jax.nn.sigmoid(gates[:, 4 * Hp:5 * Hp])
        gp_g = jnp.tanh(gates[:, 5 * Hp:6 * Hp])

        l = i_g * g_g                          # (Bp, Hp)
        l_p = ip_g * gp_g
        u = jnp.tanh(jnp.sum(l * wa, axis=-1, keepdims=True) + ba)     # (Bp, 1)
        u_p = jnp.tanh(jnp.sum(l_p * wa, axis=-1, keepdims=True) + ba)
        a0 = jax.nn.sigmoid(u - u_p)           # == softmax([u, u_p]) weight of l
        L = l_p + a0 * (l - l_p)               # a0*l + (1-a0)*l_p

        c = f_g * c + L
        h = o_g * jnp.tanh(c)

        # Capture the hidden rows that feed the final linear layer.
        for (row_out, t_glob, b_src) in capture:
            if t_glob % Tc == s:
                h_row = h[b_src:b_src + 1, :]

                @pl.when(ci == t_glob // Tc)
                def _(h_row=h_row, row_out=row_out):
                    filt_sc[row_out:row_out + 1, :] = h_row

    h_sc[...] = h
    c_sc[...] = c

    @pl.when(ci == pl.num_programs(0) - 1)
    def _():
        out_ref[...] = (jnp.dot(filt_sc[...], fw_ref[...],
                                preferred_element_type=jnp.float32)
                        + fb_ref[...])


def milstm_chain_filter_forward(gx, whh_cat, wa_pad, ba, fw_pad, fb_pad,
                                *, Tc, capture):
    T, Bp, G = gx.shape                   # G == 6*Hp
    Hp = G // 6
    Op = fw_pad.shape[1]
    n_chunks = T // Tc
    return pl.pallas_call(
        functools.partial(_milstm_kernel, Tc=Tc, Hp=Hp, capture=tuple(capture)),
        out_shape=jax.ShapeDtypeStruct((Bp, Op), jnp.float32),
        grid_spec=pltpu.PrefetchScalarGridSpec(
            num_scalar_prefetch=0,
            grid=(n_chunks,),
            in_specs=[
                pl.BlockSpec((Tc, Bp, 6 * Hp), lambda ci: (ci, 0, 0)),
                pl.BlockSpec((Hp, 6 * Hp), lambda ci: (0, 0)),
                pl.BlockSpec((1, Hp), lambda ci: (0, 0)),
                pl.BlockSpec(memory_space=pltpu.MemorySpace.SMEM),   # b_a scalar
                pl.BlockSpec((Hp, Op), lambda ci: (0, 0)),
                pl.BlockSpec((1, Op), lambda ci: (0, 0)),
            ],
            out_specs=pl.BlockSpec((Bp, Op), lambda ci: (0, 0)),
            scratch_shapes=[pltpu.VMEM((Bp, Hp), jnp.float32),
                            pltpu.VMEM((Bp, Hp), jnp.float32),
                            pltpu.VMEM((Bp, Hp), jnp.float32)],
        ),
        compiler_params=pltpu.CompilerParams(dimension_semantics=("arbitrary",)),
    )(gx, whh_cat, wa_pad, ba, fw_pad, fb_pad)


# ----------------------------------------------------------------------------
# Parameter init (deterministic; mirrors module shapes & reset semantics)
# ----------------------------------------------------------------------------
def init_params(key, input_size, hidden_size, num_output):
    H, I, O = hidden_size, input_size, num_output
    stdv = 1.0 / math.sqrt(H)
    ks = jax.random.split(key, 16)

    def u(k, shape, s=stdv):
        return jax.random.uniform(k, shape, jnp.float32, minval=-s, maxval=s)

    p = {}
    # nn.LSTM(input_size, hidden_size, num_layers=1)
    p["lstm_wihT"] = u(ks[0], (4 * H, I)).T                          # (I, 4H)
    p["lstm_whhT"] = u(ks[1], (4 * H, H)).T                          # (H, 4H)
    p["lstm_b"] = (u(ks[2], (4 * H,)) + u(ks[3], (4 * H,)))[None, :]  # b_ih + b_hh

    # MILSTMCell
    p["mi_wihT"] = u(ks[4], (4 * H, H)).T                            # (H, 4H)
    p["mi_whhT"] = u(ks[5], (4 * H, H)).T                            # (H, 4H)
    p["mi_wihpT"] = jnp.zeros((H, 2 * H), jnp.float32)               # uniform(-0, 0)
    p["mi_whhpT"] = jnp.zeros((H, 2 * H), jnp.float32)
    p["mi_wa"] = u(ks[6], (1, H))
    p["mi_b4"] = (u(ks[7], (4 * H,)) + u(ks[8], (4 * H,)))[None, :]  # b_ih + b_hh
    p["mi_b2"] = jnp.zeros((1, 2 * H), jnp.float32)                  # b_ih_p + b_hh_p
    p["mi_ba"] = u(ks[9], (1, 1))

    # nn.Linear(hidden_size, num_output)
    p["f_wT"] = u(ks[10], (O, H)).T                                  # (H, O)
    p["f_b"] = u(ks[11], (O,))[None, :]                              # (1, O)
    return p


# ----------------------------------------------------------------------------
# Full MILSTM forward (hoisted projections in plain JAX, recurrences in Pallas)
# ----------------------------------------------------------------------------
def milstm_forward(x, params):
    # x: (B, topK+1, T, I)
    B, Kp1, T, I = x.shape
    H = params["mi_wa"].shape[1]
    O = params["f_wT"].shape[1]
    NB = Kp1 * B

    Hp = _round_up(H, 128)
    Op = _round_up(O, 128)
    NBp = _round_up(NB, 8)
    Bp = _round_up(B, 8)
    Tc = _pick_time_block(T)

    # time-major, branch-major layout: (T, (K+1)*B, I), row = branch*B + b
    x_tm = jnp.transpose(x, (2, 1, 0, 3)).reshape(T, NB, I)

    # --- pre-LSTM: hoist input projection out of the recurrence ---------------
    lstm_wihT_p = _pad_gate_cols(params["lstm_wihT"], H, Hp, 4)      # (I, 4Hp)
    lstm_whhT_p = _pad_axis(_pad_gate_cols(params["lstm_whhT"], H, Hp, 4), 0, Hp)
    lstm_b_p = _pad_gate_cols(params["lstm_b"], H, Hp, 4)            # (1, 4Hp)
    gx_lstm = jnp.einsum("tni,ig->tng", x_tm, lstm_wihT_p,
                         precision="highest") + lstm_b_p
    gx_lstm = _pad_axis(gx_lstm, 1, NBp)                             # (T, NBp, 4Hp)

    lstm_out = lstm_forward(gx_lstm, lstm_whhT_p, Tc=Tc)             # (T, NBp, Hp)

    # --- Y / P split + hoisted MILSTM input projections (concat to 6*Hp) -----
    Y = lstm_out[:, :B]                                              # (T, B, Hp)
    P = jnp.mean(lstm_out[:, B:NB], axis=1)                          # (T, Hp)

    mi_wihT_p = _pad_axis(_pad_gate_cols(params["mi_wihT"], H, Hp, 4), 0, Hp)
    mi_wihpT_p = _pad_axis(_pad_gate_cols(params["mi_wihpT"], H, Hp, 2), 0, Hp)
    mi_whhT_p = _pad_axis(_pad_gate_cols(params["mi_whhT"], H, Hp, 4), 0, Hp)
    mi_whhpT_p = _pad_axis(_pad_gate_cols(params["mi_whhpT"], H, Hp, 2), 0, Hp)
    mi_b4_p = _pad_gate_cols(params["mi_b4"], H, Hp, 4)
    mi_b2_p = _pad_gate_cols(params["mi_b2"], H, Hp, 2)

    gY = jnp.einsum("tbh,hg->tbg", Y, mi_wihT_p,
                    precision="highest") + mi_b4_p                   # (T, B, 4Hp)
    gP = jnp.dot(P, mi_wihpT_p, precision="highest") + mi_b2_p       # (T, 2Hp)
    gx_mi = jnp.concatenate(
        [gY, jnp.broadcast_to(gP[:, None, :], (T, B, 2 * Hp))], axis=-1)
    gx_mi = _pad_axis(gx_mi, 1, Bp)                                  # (T, Bp, 6Hp)

    whh_cat = jnp.concatenate([mi_whhT_p, mi_whhpT_p], axis=-1)      # (Hp, 6Hp)
    wa_p = _pad_axis(params["mi_wa"], 1, Hp)                         # (1, Hp)
    ba = params["mi_ba"].reshape(1, 1)

    fw_p = _pad_axis(_pad_axis(params["f_wT"], 0, Hp), 1, Op)        # (Hp, Op)
    fb_p = _pad_axis(params["f_b"], 1, Op)                           # (1, Op)

    # Rows of the time-major MILSTM output feeding the final linear; this
    # replicates torch.cat(output, 0).view(B, T, H)[:, -1, :].
    capture = []
    for b in range(B):
        flat = b * T + (T - 1)
        capture.append((b, flat // B, flat % B))

    out2 = milstm_chain_filter_forward(gx_mi, whh_cat, wa_p, ba, fw_p, fb_p,
                                       Tc=Tc, capture=capture)       # (Bp, Op)
    return out2[:B, :O]


if __name__ == "__main__":
    # Small deterministic config: batch=2, topK=2 (-> 3 branches), seq=8,
    # input_size=4, hidden=32, num_output=3, num_layers=1, drop_out=0.0.
    # TODO(synk): nn.LSTM inter-layer dropout is a no-op with num_layers=1, so it
    # is intentionally omitted.
    B, topK, T, I, H, O = 2, 2, 8, 4, 32, 3
    key = jax.random.PRNGKey(0)
    kx, kp = jax.random.split(key)
    x = jax.random.normal(kx, (B, topK + 1, T, I), dtype=jnp.float32)
    params = init_params(kp, I, H, O)

    fwd = jax.jit(milstm_forward)
    result = fwd(x, params)
    jax.block_until_ready(result)
    assert result.shape == (B, O)
    print("KERNEL_OK")
</pallas_src>

<mosaic_0001>
module attributes {stable_mosaic.version = 11 : i64} {
  func.func @_lstm_kernel(%arg0: i32, %arg1: memref<8x8x512xf32, #tpu.memory_space<vmem>>, %arg2: memref<128x512xf32, #tpu.memory_space<vmem>>, %arg3: memref<8x8x128xf32, #tpu.memory_space<vmem>>, %arg4: memref<8x128xf32, #tpu.memory_space<vmem>>, %arg5: memref<8x128xf32, #tpu.memory_space<vmem>>) attributes {dimension_semantics = [#tpu.dimension_semantics<arbitrary>], iteration_bounds = array<i64: 1>, scalar_prefetch = 0 : i64, scratch_operands = 2 : i64, tpu.core_type = #tpu.core_type<tc>, window_params = [{transform_indices = @transform_0, window_bounds = array<i64: 8, 8, 512>}, {pipeline_mode = #tpu.pipeline_mode<synchronous>, transform_indices = @transform_1, window_bounds = array<i64: 128, 512>}, {transform_indices = @transform_2, window_bounds = array<i64: 8, 8, 128>}]} {
    %c0_i32 = arith.constant 0 : i32
    %0 = arith.cmpi eq, %arg0, %c0_i32 : i32
    %1 = arith.extui %0 : i1 to i32
    %c0_i32_0 = arith.constant 0 : i32
    %2 = arith.cmpi ne, %1, %c0_i32_0 : i32
    scf.if %2 {
      %cst_82 = arith.constant 0.000000e+00 : f32
      %264 = vector.broadcast %cst_82 : f32 to vector<8x128xf32>
      %c0_83 = arith.constant 0 : index
      %c0_84 = arith.constant 0 : index
      %265 = vector.load %arg4[%c0_83, %c0_84] : memref<8x128xf32, #tpu.memory_space<vmem>>, vector<8x128xf32>
      tpu.vector_store %arg4[%c0_83, %c0_84], %264 {strides = array<i32>} : memref<8x128xf32, #tpu.memory_space<vmem>>, vector<8x128xf32>,
      %cst_85 = arith.constant 0.000000e+00 : f32
      %266 = vector.broadcast %cst_85 : f32 to vector<8x128xf32>
      %c0_86 = arith.constant 0 : index
      %c0_87 = arith.constant 0 : index
      %267 = vector.load %arg5[%c0_86, %c0_87] : memref<8x128xf32, #tpu.memory_space<vmem>>, vector<8x128xf32>
      tpu.vector_store %arg5[%c0_86, %c0_87], %266 {strides = array<i32>} : memref<8x128xf32, #tpu.memory_space<vmem>>, vector<8x128xf32>,
    } else {
    }
    %c0 = arith.constant 0 : index
    %c0_1 = arith.constant 0 : index
    %3 = vector.load %arg4[%c0, %c0_1] : memref<8x128xf32, #tpu.memory_space<vmem>>, vector<8x128xf32>
    %c0_2 = arith.constant 0 : index
    %c0_3 = arith.constant 0 : index
    %4 = vector.load %arg5[%c0_2, %c0_3] : memref<8x128xf32, #tpu.memory_space<vmem>>, vector<8x128xf32>
    %c0_4 = arith.constant 0 : index
    %c0_5 = arith.constant 0 : index
    %5 = vector.load %arg2[%c0_4, %c0_5] : memref<128x512xf32, #tpu.memory_space<vmem>>, vector<128x512xf32>
    %c0_6 = arith.constant 0 : index
    %c0_7 = arith.constant 0 : index
    %c0_8 = arith.constant 0 : index
    %6 = vector.load %arg1[%c0_6, %c0_7, %c0_8] : memref<8x8x512xf32, #tpu.memory_space<vmem>>, vector<1x8x512xf32>
    %7 = vector.shape_cast %6 : vector<1x8x512xf32> to vector<8x512xf32>
    %cst = arith.constant dense<0.000000e+00> : vector<8x512xf32>
    %8 = tpu.matmul %3, %5, %cst {dimension_numbers = #tpu.dot_dimension_numbers<[1], [0], [0], [1], [0, 0, 1, 1], [], []>} : vector<8x128xf32>, vector<128x512xf32>, vector<8x512xf32> -> vector<8x512xf32>
    %9 = arith.addf %7, %8 : vector<8x512xf32>
    %10 = vector.extract_strided_slice %9 {offsets = [0, 0], sizes = [8, 128], strides = [1, 1]} : vector<8x512xf32> to vector<8x128xf32>
    %11 = arith.negf %10 : vector<8x128xf32>
    %12 = math.exp %11 : vector<8x128xf32>
    %cst_9 = arith.constant 1.000000e+00 : f32
    %13 = vector.broadcast %cst_9 : f32 to vector<8x128xf32>
    %14 = arith.addf %13, %12 : vector<8x128xf32>
    %15 = arith.divf %13, %14 : vector<8x128xf32>
    %16 = vector.extract_strided_slice %9 {offsets = [0, 128], sizes = [8, 128], strides = [1, 1]} : vector<8x512xf32> to vector<8x128xf32>
    %17 = arith.negf %16 : vector<8x128xf32>
    %18 = math.exp %17 : vector<8x128xf32>
    %cst_10 = arith.constant 1.000000e+00 : f32
    %19 = vector.broadcast %cst_10 : f32 to vector<8x128xf32>
    %20 = arith.addf %19, %18 : vector<8x128xf32>
    %21 = arith.divf %19, %20 : vector<8x128xf32>
    %22 = vector.extract_strided_slice %9 {offsets = [0, 256], sizes = [8, 128], strides = [1, 1]} : vector<8x512xf32> to vector<8x128xf32>
    %23 = math.tanh %22 : vector<8x128xf32>
    %24 = vector.extract_strided_slice %9 {offsets = [0, 384], sizes = [8, 128], strides = [1, 1]} : vector<8x512xf32> to vector<8x128xf32>
    %25 = arith.negf %24 : vector<8x128xf32>
    %26 = math.exp %25 : vector<8x128xf32>
    %cst_11 = arith.constant 1.000000e+00 : f32
    %27 = vector.broadcast %cst_11 : f32 to vector<8x128xf32>
    %28 = arith.addf %27, %26 : vector<8x128xf32>
    %29 = arith.divf %27, %28 : vector<8x128xf32>
    %30 = arith.mulf %21, %4 : vector<8x128xf32>
    %31 = arith.mulf %15, %23 : vector<8x128xf32>
    %32 = arith.addf %30, %31 : vector<8x128xf32>
    %33 = math.tanh %32 : vector<8x128xf32>
    %34 = arith.mulf %29, %33 : vector<8x128xf32>
    %c0_12 = arith.constant 0 : index
    %c0_13 = arith.constant 0 : index
    %c0_14 = arith.constant 0 : index
    %35 = vector.load %arg3[%c0_12, %c0_13, %c0_14] : memref<8x8x128xf32, #tpu.memory_space<vmem>>, vector<1x8x128xf32>
    %36 = vector.shape_cast %35 : vector<1x8x128xf32> to vector<8x128xf32>
    %37 = vector.shape_cast %34 : vector<8x128xf32> to vector<1x8x128xf32>
    tpu.vector_store %arg3[%c0_12, %c0_13, %c0_14], %37 {strides = array<i32>} : memref<8x8x128xf32, #tpu.memory_space<vmem>>, vector<1x8x128xf32>,
    %c1 = arith.constant 1 : index
    %c0_15 = arith.constant 0 : index
    %c0_16 = arith.constant 0 : index
    %38 = vector.load %arg1[%c1, %c0_15, %c0_16] : memref<8x8x512xf32, #tpu.memory_space<vmem>>, vector<1x8x512xf32>
    %39 = vector.shape_cast %38 : vector<1x8x512xf32> to vector<8x512xf32>
    %cst_17 = arith.constant dense<0.000000e+00> : vector<8x512xf32>
    %40 = tpu.matmul %34, %5, %cst_17 {dimension_numbers = #tpu.dot_dimension_numbers<[1], [0], [0], [1], [0, 0, 1, 1], [], []>} : vector<8x128xf32>, vector<128x512xf32>, vector<8x512xf32> -> vector<8x512xf32>
    %41 = arith.addf %39, %40 : vector<8x512xf32>
    %42 = vector.extract_strided_slice %41 {offsets = [0, 0], sizes = [8, 128], strides = [1, 1]} : vector<8x512xf32> to vector<8x128xf32>
    %43 = arith.negf %42 : vector<8x128xf32>
    %44 = math.exp %43 : vector<8x128xf32>
    %cst_18 = arith.constant 1.000000e+00 : f32
    %45 = vector.broadcast %cst_18 : f32 to vector<8x128xf32>
    %46 = arith.addf %45, %44 : vector<8x128xf32>
    %47 = arith.divf %45, %46 : vector<8x128xf32>
    %48 = vector.extract_strided_slice %41 {offsets = [0, 128], sizes = [8, 128], strides = [1, 1]} : vector<8x512xf32> to vector<8x128xf32>
    %49 = arith.negf %48 : vector<8x128xf32>
    %50 = math.exp %49 : vector<8x128xf32>
    %cst_19 = arith.constant 1.000000e+00 : f32
    %51 = vector.broadcast %cst_19 : f32 to vector<8x128xf32>
    %52 = arith.addf %51, %50 : vector<8x128xf32>
    %53 = arith.divf %51, %52 : vector<8x128xf32>
    %54 = vector.extract_strided_slice %41 {offsets = [0, 256], sizes = [8, 128], strides = [1, 1]} : vector<8x512xf32> to vector<8x128xf32>
    %55 = math.tanh %54 : vector<8x128xf32>
    %56 = vector.extract_strided_slice %41 {offsets = [0, 384], sizes = [8, 128], strides = [1, 1]} : vector<8x512xf32> to vector<8x128xf32>
    %57 = arith.negf %56 : vector<8x128xf32>
    %58 = math.exp %57 : vector<8x128xf32>
    %cst_20 = arith.constant 1.000000e+00 : f32
    %59 = vector.broadcast %cst_20 : f32 to vector<8x128xf32>
    %60 = arith.addf %59, %58 : vector<8x128xf32>
    %61 = arith.divf %59, %60 : vector<8x128xf32>
    %62 = arith.mulf %53, %32 : vector<8x128xf32>
    %63 = arith.mulf %47, %55 : vector<8x128xf32>
    %64 = arith.addf %62, %63 : vector<8x128xf32>
    %65 = math.tanh %64 : vector<8x128xf32>
    %66 = arith.mulf %61, %65 : vector<8x128xf32>
    %c1_21 = arith.constant 1 : index
    %c0_22 = arith.constant 0 : index
    %c0_23 = arith.constant 0 : index
    %67 = vector.load %arg3[%c1_21, %c0_22, %c0_23] : memref<8x8x128xf32, #tpu.memory_space<vmem>>, vector<1x8x128xf32>
    %68 = vector.shape_cast %67 : vector<1x8x128xf32> to vector<8x128xf32>
    %69 = vector.shape_cast %66 : vector<8x128xf32> to vector<1x8x128xf32>
    tpu.vector_store %arg3[%c1_21, %c0_22, %c0_23], %69 {strides = array<i32>} : memref<8x8x128xf32, #tpu.memory_space<vmem>>, vector<1x8x128xf32>,
    %c2 = arith.constant 2 : index
    %c0_24 = arith.constant 0 : index
    %c0_25 = arith.constant 0 : index
    %70 = vector.load %arg1[%c2, %c0_24, %c0_25] : memref<8x8x512xf32, #tpu.memory_space<vmem>>, vector<1x8x512xf32>
    %71 = vector.shape_cast %70 : vector<1x8x512xf32> to vector<8x512xf32>
    %cst_26 = arith.constant dense<0.000000e+00> : vector<8x512xf32>
    %72 = tpu.matmul %66, %5, %cst_26 {dimension_numbers = #tpu.dot_dimension_numbers<[1], [0], [0], [1], [0, 0, 1, 1], [], []>} : vector<8x128xf32>, vector<128x512xf32>, vector<8x512xf32> -> vector<8x512xf32>
    %73 = arith.addf %71, %72 : vector<8x512xf32>
    %74 = vector.extract_strided_slice %73 {offsets = [0, 0], sizes = [8, 128], strides = [1, 1]} : vector<8x512xf32> to vector<8x128xf32>
    %75 = arith.negf %74 : vector<8x128xf32>
    %76 = math.exp %75 : vector<8x128xf32>
    %cst_27 = arith.constant 1.000000e+00 : f32
    %77 = vector.broadcast %cst_27 : f32 to vector<8x128xf32>
    %78 = arith.addf %77, %76 : vector<8x128xf32>
    %79 = arith.divf %77, %78 : vector<8x128xf32>
    %80 = vector.extract_strided_slice %73 {offsets = [0, 128], sizes = [8, 128], strides = [1, 1]} : vector<8x512xf32> to vector<8x128xf32>
    %81 = arith.negf %80 : vector<8x128xf32>
    %82 = math.exp %81 : vector<8x128xf32>
    %cst_28 = arith.constant 1.000000e+00 : f32
    %83 = vector.broadcast %cst_28 : f32 to vector<8x128xf32>
    %84 = arith.addf %83, %82 : vector<8x128xf32>
    %85 = arith.divf %83, %84 : vector<8x128xf32>
    %86 = vector.extract_strided_slice %73 {offsets = [0, 256], sizes = [8, 128], strides = [1, 1]} : vector<8x512xf32> to vector<8x128xf32>
    %87 = math.tanh %86 : vector<8x128xf32>
    %88 = vector.extract_strided_slice %73 {offsets = [0, 384], sizes = [8, 128], strides = [1, 1]} : vector<8x512xf32> to vector<8x128xf32>
    %89 = arith.negf %88 : vector<8x128xf32>
    %90 = math.exp %89 : vector<8x128xf32>
    %cst_29 = arith.constant 1.000000e+00 : f32
    %91 = vector.broadcast %cst_29 : f32 to vector<8x128xf32>
    %92 = arith.addf %91, %90 : vector<8x128xf32>
    %93 = arith.divf %91, %92 : vector<8x128xf32>
    %94 = arith.mulf %85, %64 : vector<8x128xf32>
    %95 = arith.mulf %79, %87 : vector<8x128xf32>
    %96 = arith.addf %94, %95 : vector<8x128xf32>
    %97 = math.tanh %96 : vector<8x128xf32>
    %98 = arith.mulf %93, %97 : vector<8x128xf32>
    %c2_30 = arith.constant 2 : index
    %c0_31 = arith.constant 0 : index
    %c0_32 = arith.constant 0 : index
    %99 = vector.load %arg3[%c2_30, %c0_31, %c0_32] : memref<8x8x128xf32, #tpu.memory_space<vmem>>, vector<1x8x128xf32>
    %100 = vector.shape_cast %99 : vector<1x8x128xf32> to vector<8x128xf32>
    %101 = vector.shape_cast %98 : vector<8x128xf32> to vector<1x8x128xf32>
    tpu.vector_store %arg3[%c2_30, %c0_31, %c0_32], %101 {strides = array<i32>} : memref<8x8x128xf32, #tpu.memory_space<vmem>>, vector<1x8x128xf32>,
    %c3 = arith.constant 3 : index
    %c0_33 = arith.constant 0 : index
    %c0_34 = arith.constant 0 : index
    %102 = vector.load %arg1[%c3, %c0_33, %c0_34] : memref<8x8x512xf32, #tpu.memory_space<vmem>>, vector<1x8x512xf32>
    %103 = vector.shape_cast %102 : vector<1x8x512xf32> to vector<8x512xf32>
    %cst_35 = arith.constant dense<0.000000e+00> : vector<8x512xf32>
    %104 = tpu.matmul %98, %5, %cst_35 {dimension_numbers = #tpu.dot_dimension_numbers<[1], [0], [0], [1], [0, 0, 1, 1], [], []>} : vector<8x128xf32>, vector<128x512xf32>, vector<8x512xf32> -> vector<8x512xf32>
    %105 = arith.addf %103, %104 : vector<8x512xf32>
    %106 = vector.extract_strided_slice %105 {offsets = [0, 0], sizes = [8, 128], strides = [1, 1]} : vector<8x512xf32> to vector<8x128xf32>
    %107 = arith.negf %106 : vector<8x128xf32>
    %108 = math.exp %107 : vector<8x128xf32>
    %cst_36 = arith.constant 1.000000e+00 : f32
    %109 = vector.broadcast %cst_36 : f32 to vector<8x128xf32>
    %110 = arith.addf %109, %108 : vector<8x128xf32>
    %111 = arith.divf %109, %110 : vector<8x128xf32>
    %112 = vector.extract_strided_slice %105 {offsets = [0, 128], sizes = [8, 128], strides = [1, 1]} : vector<8x512xf32> to vector<8x128xf32>
    %113 = arith.negf %112 : vector<8x128xf32>
    %114 = math.exp %113 : vector<8x128xf32>
    %cst_37 = arith.constant 1.000000e+00 : f32
    %115 = vector.broadcast %cst_37 : f32 to vector<8x128xf32>
    %116 = arith.addf %115, %114 : vector<8x128xf32>
    %117 = arith.divf %115, %116 : vector<8x128xf32>
    %118 = vector.extract_strided_slice %105 {offsets = [0, 256], sizes = [8, 128], strides = [1, 1]} : vector<8x512xf32> to vector<8x128xf32>
    %119 = math.tanh %118 : vector<8x128xf32>
    %120 = vector.extract_strided_slice %105 {offsets = [0, 384], sizes = [8, 128], strides = [1, 1]} : vector<8x512xf32> to vector<8x128xf32>
    %121 = arith.negf %120 : vector<8x128xf32>
    %122 = math.exp %121 : vector<8x128xf32>
    %cst_38 = arith.constant 1.000000e+00 : f32
    %123 = vector.broadcast %cst_38 : f32 to vector<8x128xf32>
    %124 = arith.addf %123, %122 : vector<8x128xf32>
    %125 = arith.divf %123, %124 : vector<8x128xf32>
    %126 = arith.mulf %117, %96 : vector<8x128xf32>
    %127 = arith.mulf %111, %119 : vector<8x128xf32>
    %128 = arith.addf %126, %127 : vector<8x128xf32>
    %129 = math.tanh %128 : vector<8x128xf32>
    %130 = arith.mulf %125, %129 : vector<8x128xf32>
    %c3_39 = arith.constant 3 : index
    %c0_40 = arith.constant 0 : index
    %c0_41 = arith.constant 0 : index
    %131 = vector.load %arg3[%c3_39, %c0_40, %c0_41] : memref<8x8x128xf32, #tpu.memory_space<vmem>>, vector<1x8x128xf32>
    %132 = vector.shape_cast %131 : vector<1x8x128xf32> to vector<8x128xf32>
    %133 = vector.shape_cast %130 : vector<8x128xf32> to vector<1x8x128xf32>
    tpu.vector_store %arg3[%c3_39, %c0_40, %c0_41], %133 {strides = array<i32>} : memref<8x8x128xf32, #tpu.memory_space<vmem>>, vector<1x8x128xf32>,
    %c4 = arith.constant 4 : index
    %c0_42 = arith.constant 0 : index
    %c0_43 = arith.constant 0 : index
    %134 = vector.load %arg1[%c4, %c0_42, %c0_43] : memref<8x8x512xf32, #tpu.memory_space<vmem>>, vector<1x8x512xf32>
    %135 = vector.shape_cast %134 : vector<1x8x512xf32> to vector<8x512xf32>
    %cst_44 = arith.constant dense<0.000000e+00> : vector<8x512xf32>
    %136 = tpu.matmul %130, %5, %cst_44 {dimension_numbers = #tpu.dot_dimension_numbers<[1], [0], [0], [1], [0, 0, 1, 1], [], []>} : vector<8x128xf32>, vector<128x512xf32>, vector<8x512xf32> -> vector<8x512xf32>
    %137 = arith.addf %135, %136 : vector<8x512xf32>
    %138 = vector.extract_strided_slice %137 {offsets = [0, 0], sizes = [8, 128], strides = [1, 1]} : vector<8x512xf32> to vector<8x128xf32>
    %139 = arith.negf %138 : vector<8x128xf32>
    %140 = math.exp %139 : vector<8x128xf32>
    %cst_45 = arith.constant 1.000000e+00 : f32
    %141 = vector.broadcast %cst_45 : f32 to vector<8x128xf32>
    %142 = arith.addf %141, %140 : vector<8x128xf32>
    %143 = arith.divf %141, %142 : vector<8x128xf32>
    %144 = vector.extract_strided_slice %137 {offsets = [0, 128], sizes = [8, 128], strides = [1, 1]} : vector<8x512xf32> to vector<8x128xf32>
    %145 = arith.negf %144 : vector<8x128xf32>
    %146 = math.exp %145 : vector<8x128xf32>
    %cst_46 = arith.constant 1.000000e+00 : f32
    %147 = vector.broadcast %cst_46 : f32 to vector<8x128xf32>
    %148 = arith.addf %147, %146 : vector<8x128xf32>
    %149 = arith.divf %147, %148 : vector<8x128xf32>
    %150 = vector.extract_strided_slice %137 {offsets = [0, 256], sizes = [8, 128], strides = [1, 1]} : vector<8x512xf32> to vector<8x128xf32>
    %151 = math.tanh %150 : vector<8x128xf32>
    %152 = vector.extract_strided_slice %137 {offsets = [0, 384], sizes = [8, 128], strides = [1, 1]} : vector<8x512xf32> to vector<8x128xf32>
    %153 = arith.negf %152 : vector<8x128xf32>
    %154 = math.exp %153 : vector<8x128xf32>
    %cst_47 = arith.constant 1.000000e+00 : f32
    %155 = vector.broadcast %cst_47 : f32 to vector<8x128xf32>
    %156 = arith.addf %155, %154 : vector<8x128xf32>
    %157 = arith.divf %155, %156 : vector<8x128xf32>
    %158 = arith.mulf %149, %128 : vector<8x128xf32>
    %159 = arith.mulf %143, %151 : vector<8x128xf32>
    %160 = arith.addf %158, %159 : vector<8x128xf32>
    %161 = math.tanh %160 : vector<8x128xf32>
    %162 = arith.mulf %157, %161 : vector<8x128xf32>
    %c4_48 = arith.constant 4 : index
    %c0_49 = arith.constant 0 : index
    %c0_50 = arith.constant 0 : index
    %163 = vector.load %arg3[%c4_48, %c0_49, %c0_50] : memref<8x8x128xf32, #tpu.memory_space<vmem>>, vector<1x8x128xf32>
    %164 = vector.shape_cast %163 : vector<1x8x128xf32> to vector<8x128xf32>
    %165 = vector.shape_cast %162 : vector<8x128xf32> to vector<1x8x128xf32>
    tpu.vector_store %arg3[%c4_48, %c0_49, %c0_50], %165 {strides = array<i32>} : memref<8x8x128xf32, #tpu.memory_space<vmem>>, vector<1x8x128xf32>,
    %c5 = arith.constant 5 : index
    %c0_51 = arith.constant 0 : index
    %c0_52 = arith.constant 0 : index
    %166 = vector.load %arg1[%c5, %c0_51, %c0_52] : memref<8x8x512xf32, #tpu.memory_space<vmem>>, vector<1x8x512xf32>
    %167 = vector.shape_cast %166 : vector<1x8x512xf32> to vector<8x512xf32>
    %cst_53 = arith.constant dense<0.000000e+00> : vector<8x512xf32>
    %168 = tpu.matmul %162, %5, %cst_53 {dimension_numbers = #tpu.dot_dimension_numbers<[1], [0], [0], [1], [0, 0, 1, 1], [], []>} : vector<8x128xf32>, vector<128x512xf32>, vector<8x512xf32> -> vector<8x512xf32>
    %169 = arith.addf %167, %168 : vector<8x512xf32>
    %170 = vector.extract_strided_slice %169 {offsets = [0, 0], sizes = [8, 128], strides = [1, 1]} : vector<8x512xf32> to vector<8x128xf32>
    %171 = arith.negf %170 : vector<8x128xf32>
    %172 = math.exp %171 : vector<8x128xf32>
    %cst_54 = arith.constant 1.000000e+00 : f32
    %173 = vector.broadcast %cst_54 : f32 to vector<8x128xf32>
    %174 = arith.addf %173, %172 : vector<8x128xf32>
    %175 = arith.divf %173, %174 : vector<8x128xf32>
    %176 = vector.extract_strided_slice %169 {offsets = [0, 128], sizes = [8, 128], strides = [1, 1]} : vector<8x512xf32> to vector<8x128xf32>
    %177 = arith.negf %176 : vector<8x128xf32>
    %178 = math.exp %177 : vector<8x128xf32>
    %cst_55 = arith.constant 1.000000e+00 : f32
    %179 = vector.broadcast %cst_55 : f32 to vector<8x128xf32>
    %180 = arith.addf %179, %178 : vector<8x128xf32>
    %181 = arith.divf %179, %180 : vector<8x128xf32>
    %182 = vector.extract_strided_slice %169 {offsets = [0, 256], sizes = [8, 128], strides = [1, 1]} : vector<8x512xf32> to vector<8x128xf32>
    %183 = math.tanh %182 : vector<8x128xf32>
    %184 = vector.extract_strided_slice %169 {offsets = [0, 384], sizes = [8, 128], strides = [1, 1]} : vector<8x512xf32> to vector<8x128xf32>
    %185 = arith.negf %184 : vector<8x128xf32>
    %186 = math.exp %185 : vector<8x128xf32>
    %cst_56 = arith.constant 1.000000e+00 : f32
    %187 = vector.broadcast %cst_56 : f32 to vector<8x128xf32>
    %188 = arith.addf %187, %186 : vector<8x128xf32>
    %189 = arith.divf %187, %188 : vector<8x128xf32>
    %190 = arith.mulf %181, %160 : vector<8x128xf32>
    %191 = arith.mulf %175, %183 : vector<8x128xf32>
    %192 = arith.addf %190, %191 : vector<8x128xf32>
    %193 = math.tanh %192 : vector<8x128xf32>
    %194 = arith.mulf %189, %193 : vector<8x128xf32>
    %c5_57 = arith.constant 5 : index
    %c0_58 = arith.constant 0 : index
    %c0_59 = arith.constant 0 : index
    %195 = vector.load %arg3[%c5_57, %c0_58, %c0_59] : memref<8x8x128xf32, #tpu.memory_space<vmem>>, vector<1x8x128xf32>
    %196 = vector.shape_cast %195 : vector<1x8x128xf32> to vector<8x128xf32>
    %197 = vector.shape_cast %194 : vector<8x128xf32> to vector<1x8x128xf32>
    tpu.vector_store %arg3[%c5_57, %c0_58, %c0_59], %197 {strides = array<i32>} : memref<8x8x128xf32, #tpu.memory_space<vmem>>, vector<1x8x128xf32>,
    %c6 = arith.constant 6 : index
    %c0_60 = arith.constant 0 : index
    %c0_61 = arith.constant 0 : index
    %198 = vector.load %arg1[%c6, %c0_60, %c0_61] : memref<8x8x512xf32, #tpu.memory_space<vmem>>, vector<1x8x512xf32>
    %199 = vector.shape_cast %198 : vector<1x8x512xf32> to vector<8x512xf32>
    %cst_62 = arith.constant dense<0.000000e+00> : vector<8x512xf32>
    %200 = tpu.matmul %194, %5, %cst_62 {dimension_numbers = #tpu.dot_dimension_numbers<[1], [0], [0], [1], [0, 0, 1, 1], [], []>} : vector<8x128xf32>, vector<128x512xf32>, vector<8x512xf32> -> vector<8x512xf32>
    %201 = arith.addf %199, %200 : vector<8x512xf32>
    %202 = vector.extract_strided_slice %201 {offsets = [0, 0], sizes = [8, 128], strides = [1, 1]} : vector<8x512xf32> to vector<8x128xf32>
    %203 = arith.negf %202 : vector<8x128xf32>
    %204 = math.exp %203 : vector<8x128xf32>
    %cst_63 = arith.constant 1.000000e+00 : f32
    %205 = vector.broadcast %cst_63 : f32 to vector<8x128xf32>
    %206 = arith.addf %205, %204 : vector<8x128xf32>
    %207 = arith.divf %205, %206 : vector<8x128xf32>
    %208 = vector.extract_strided_slice %201 {offsets = [0, 128], sizes = [8, 128], strides = [1, 1]} : vector<8x512xf32> to vector<8x128xf32>
    %209 = arith.negf %208 : vector<8x128xf32>
    %210 = math.exp %209 : vector<8x128xf32>
    %cst_64 = arith.constant 1.000000e+00 : f32
    %211 = vector.broadcast %cst_64 : f32 to vector<8x128xf32>
    %212 = arith.addf %211, %210 : vector<8x128xf32>
    %213 = arith.divf %211, %212 : vector<8x128xf32>
    %214 = vector.extract_strided_slice %201 {offsets = [0, 256], sizes = [8, 128], strides = [1, 1]} : vector<8x512xf32> to vector<8x128xf32>
    %215 = math.tanh %214 : vector<8x128xf32>
    %216 = vector.extract_strided_slice %201 {offsets = [0, 384], sizes = [8, 128], strides = [1, 1]} : vector<8x512xf32> to vector<8x128xf32>
    %217 = arith.negf %216 : vector<8x128xf32>
    %218 = math.exp %217 : vector<8x128xf32>
    %cst_65 = arith.constant 1.000000e+00 : f32
    %219 = vector.broadcast %cst_65 : f32 to vector<8x128xf32>
    %220 = arith.addf %219, %218 : vector<8x128xf32>
    %221 = arith.divf %219, %220 : vector<8x128xf32>
    %222 = arith.mulf %213, %192 : vector<8x128xf32>
    %223 = arith.mulf %207, %215 : vector<8x128xf32>
    %224 = arith.addf %222, %223 : vector<8x128xf32>
    %225 = math.tanh %224 : vector<8x128xf32>
    %226 = arith.mulf %221, %225 : vector<8x128xf32>
    %c6_66 = arith.constant 6 : index
    %c0_67 = arith.constant 0 : index
    %c0_68 = arith.constant 0 : index
    %227 = vector.load %arg3[%c6_66, %c0_67, %c0_68] : memref<8x8x128xf32, #tpu.memory_space<vmem>>, vector<1x8x128xf32>
    %228 = vector.shape_cast %227 : vector<1x8x128xf32> to vector<8x128xf32>
    %229 = vector.shape_cast %226 : vector<8x128xf32> to vector<1x8x128xf32>
    tpu.vector_store %arg3[%c6_66, %c0_67, %c0_68], %229 {strides = array<i32>} : memref<8x8x128xf32, #tpu.memory_space<vmem>>, vector<1x8x128xf32>,
    %c7 = arith.constant 7 : index
    %c0_69 = arith.constant 0 : index
    %c0_70 = arith.constant 0 : index
    %230 = vector.load %arg1[%c7, %c0_69, %c0_70] : memref<8x8x512xf32, #tpu.memory_space<vmem>>, vector<1x8x512xf32>
    %231 = vector.shape_cast %230 : vector<1x8x512xf32> to vector<8x512xf32>
    %cst_71 = arith.constant dense<0.000000e+00> : vector<8x512xf32>
    %232 = tpu.matmul %226, %5, %cst_71 {dimension_numbers = #tpu.dot_dimension_numbers<[1], [0], [0], [1], [0, 0, 1, 1], [], []>} : vector<8x128xf32>, vector<128x512xf32>, vector<8x512xf32> -> vector<8x512xf32>
    %233 = arith.addf %231, %232 : vector<8x512xf32>
    %234 = vector.extract_strided_slice %233 {offsets = [0, 0], sizes = [8, 128], strides = [1, 1]} : vector<8x512xf32> to vector<8x128xf32>
    %235 = arith.negf %234 : vector<8x128xf32>
    %236 = math.exp %235 : vector<8x128xf32>
    %cst_72 = arith.constant 1.000000e+00 : f32
    %237 = vector.broadcast %cst_72 : f32 to vector<8x128xf32>
    %238 = arith.addf %237, %236 : vector<8x128xf32>
    %239 = arith.divf %237, %238 : vector<8x128xf32>
    %240 = vector.extract_strided_slice %233 {offsets = [0, 128], sizes = [8, 128], strides = [1, 1]} : vector<8x512xf32> to vector<8x128xf32>
    %241 = arith.negf %240 : vector<8x128xf32>
    %242 = math.exp %241 : vector<8x128xf32>
    %cst_73 = arith.constant 1.000000e+00 : f32
    %243 = vector.broadcast %cst_73 : f32 to vector<8x128xf32>
    %244 = arith.addf %243, %242 : vector<8x128xf32>
    %245 = arith.divf %243, %244 : vector<8x128xf32>
    %246 = vector.extract_strided_slice %233 {offsets = [0, 256], sizes = [8, 128], strides = [1, 1]} : vector<8x512xf32> to vector<8x128xf32>
    %247 = math.tanh %246 : vector<8x128xf32>
    %248 = vector.extract_strided_slice %233 {offsets = [0, 384], sizes = [8, 128], strides = [1, 1]} : vector<8x512xf32> to vector<8x128xf32>
    %249 = arith.negf %248 : vector<8x128xf32>
    %250 = math.exp %249 : vector<8x128xf32>
    %cst_74 = arith.constant 1.000000e+00 : f32
    %251 = vector.broadcast %cst_74 : f32 to vector<8x128xf32>
    %252 = arith.addf %251, %250 : vector<8x128xf32>
    %253 = arith.divf %251, %252 : vector<8x128xf32>
    %254 = arith.mulf %245, %224 : vector<8x128xf32>
    %255 = arith.mulf %239, %247 : vector<8x128xf32>
    %256 = arith.addf %254, %255 : vector<8x128xf32>
    %257 = math.tanh %256 : vector<8x128xf32>
    %258 = arith.mulf %253, %257 : vector<8x128xf32>
    %c7_75 = arith.constant 7 : index
    %c0_76 = arith.constant 0 : index
    %c0_77 = arith.constant 0 : index
    %259 = vector.load %arg3[%c7_75, %c0_76, %c0_77] : memref<8x8x128xf32, #tpu.memory_space<vmem>>, vector<1x8x128xf32>
    %260 = vector.shape_cast %259 : vector<1x8x128xf32> to vector<8x128xf32>
    %261 = vector.shape_cast %258 : vector<8x128xf32> to vector<1x8x128xf32>
    tpu.vector_store %arg3[%c7_75, %c0_76, %c0_77], %261 {strides = array<i32>} : memref<8x8x128xf32, #tpu.memory_space<vmem>>, vector<1x8x128xf32>,
    %c0_78 = arith.constant 0 : index
    %c0_79 = arith.constant 0 : index
    %262 = vector.load %arg4[%c0_78, %c0_79] : memref<8x128xf32, #tpu.memory_space<vmem>>, vector<8x128xf32>
    tpu.vector_store %arg4[%c0_78, %c0_79], %258 {strides = array<i32>} : memref<8x128xf32, #tpu.memory_space<vmem>>, vector<8x128xf32>,
    %c0_80 = arith.constant 0 : index
    %c0_81 = arith.constant 0 : index
    %263 = vector.load %arg5[%c0_80, %c0_81] : memref<8x128xf32, #tpu.memory_space<vmem>>, vector<8x128xf32>
    tpu.vector_store %arg5[%c0_80, %c0_81], %256 {strides = array<i32>} : memref<8x128xf32, #tpu.memory_space<vmem>>, vector<8x128xf32>,
    return
  }
  func.func @transform_0(%arg0: i32) -> (i32, i32, i32) {
    %c0_i32 = arith.constant 0 : i32
    %c0_i32_0 = arith.constant 0 : i32
    %c0_i32_1 = arith.constant 0 : i32
    return %arg0, %c0_i32, %c0_i32_0 : i32, i32, i32
  }
  func.func @transform_1(%arg0: i32) -> (i32, i32) {
    %c0_i32 = arith.constant 0 : i32
    %c0_i32_0 = arith.constant 0 : i32
    %c0_i32_1 = arith.constant 0 : i32
    return %c0_i32, %c0_i32_0 : i32, i32
  }
  func.func @transform_2(%arg0: i32) -> (i32, i32, i32) {
    %c0_i32 = arith.constant 0 : i32
    %c0_i32_0 = arith.constant 0 : i32
    %c0_i32_1 = arith.constant 0 : i32
    return %arg0, %c0_i32, %c0_i32_0 : i32, i32, i32
  }
}

module attributes {stable_mosaic.version = 11 : i64} {
  func.func @_milstm_kernel(%arg0: i32, %arg1: memref<8x8x768xf32, #tpu.memory_space<vmem>>, %arg2: memref<128x768xf32, #tpu.memory_space<vmem>>, %arg3: memref<1x128xf32, #tpu.memory_space<vmem>>, %arg4: memref<1x1xf32, #tpu.memory_space<smem>>, %arg5: memref<128x128xf32, #tpu.memory_space<vmem>>, %arg6: memref<1x128xf32, #tpu.memory_space<vmem>>, %arg7: memref<8x128xf32, #tpu.memory_space<vmem>>, %arg8: memref<8x128xf32, #tpu.memory_space<vmem>>, %arg9: memref<8x128xf32, #tpu.memory_space<vmem>>, %arg10: memref<8x128xf32, #tpu.memory_space<vmem>>) attributes {dimension_semantics = [#tpu.dimension_semantics<arbitrary>], iteration_bounds = array<i64: 1>, scalar_prefetch = 0 : i64, scratch_operands = 3 : i64, tpu.core_type = #tpu.core_type<tc>, window_params = [{transform_indices = @transform_0, window_bounds = array<i64: 8, 8, 768>}, {pipeline_mode = #tpu.pipeline_mode<synchronous>, transform_indices = @transform_1, window_bounds = array<i64: 128, 768>}, {pipeline_mode = #tpu.pipeline_mode<synchronous>, transform_indices = @transform_2, window_bounds = array<i64: 1, 128>}, {transform_indices = @transform_3, window_bounds = array<i64: 1, 1>}, {pipeline_mode = #tpu.pipeline_mode<synchronous>, transform_indices = @transform_4, window_bounds = array<i64: 128, 128>}, {pipeline_mode = #tpu.pipeline_mode<synchronous>, transform_indices = @transform_5, window_bounds = array<i64: 1, 128>}, {pipeline_mode = #tpu.pipeline_mode<synchronous>, transform_indices = @transform_6, window_bounds = array<i64: 8, 128>}]} {
    %c0_i32 = arith.constant 0 : i32
    %0 = arith.cmpi eq, %arg0, %c0_i32 : i32
    %1 = arith.extui %0 : i1 to i32
    %c0_i32_0 = arith.constant 0 : i32
    %2 = arith.cmpi ne, %1, %c0_i32_0 : i32
    scf.if %2 {
      %cst_100 = arith.constant 0.000000e+00 : f32
      %517 = vector.broadcast %cst_100 : f32 to vector<8x128xf32>
      %c0_101 = arith.constant 0 : index
      %c0_102 = arith.constant 0 : index
      %518 = vector.load %arg8[%c0_101, %c0_102] : memref<8x128xf32, #tpu.memory_space<vmem>>, vector<8x128xf32>
      tpu.vector_store %arg8[%c0_101, %c0_102], %517 {strides = array<i32>} : memref<8x128xf32, #tpu.memory_space<vmem>>, vector<8x128xf32>,
      %cst_103 = arith.constant 0.000000e+00 : f32
      %519 = vector.broadcast %cst_103 : f32 to vector<8x128xf32>
      %c0_104 = arith.constant 0 : index
      %c0_105 = arith.constant 0 : index
      %520 = vector.load %arg9[%c0_104, %c0_105] : memref<8x128xf32, #tpu.memory_space<vmem>>, vector<8x128xf32>
      tpu.vector_store %arg9[%c0_104, %c0_105], %519 {strides = array<i32>} : memref<8x128xf32, #tpu.memory_space<vmem>>, vector<8x128xf32>,
      %cst_106 = arith.constant 0.000000e+00 : f32
      %521 = vector.broadcast %cst_106 : f32 to vector<8x128xf32>
      %c0_107 = arith.constant 0 : index
      %c0_108 = arith.constant 0 : index
      %522 = vector.load %arg10[%c0_107, %c0_108] : memref<8x128xf32, #tpu.memory_space<vmem>>, vector<8x128xf32>
      tpu.vector_store %arg10[%c0_107, %c0_108], %521 {strides = array<i32>} : memref<8x128xf32, #tpu.memory_space<vmem>>, vector<8x128xf32>,
    } else {
    }
    %c0 = arith.constant 0 : index
    %c0_1 = arith.constant 0 : index
    %3 = vector.load %arg8[%c0, %c0_1] : memref<8x128xf32, #tpu.memory_space<vmem>>, vector<8x128xf32>
    %c0_2 = arith.constant 0 : index
    %c0_3 = arith.constant 0 : index
    %4 = vector.load %arg9[%c0_2, %c0_3] : memref<8x128xf32, #tpu.memory_space<vmem>>, vector<8x128xf32>
    %c0_4 = arith.constant 0 : index
    %c0_5 = arith.constant 0 : index
    %5 = vector.load %arg2[%c0_4, %c0_5] : memref<128x768xf32, #tpu.memory_space<vmem>>, vector<128x768xf32>
    %c0_6 = arith.constant 0 : index
    %c0_7 = arith.constant 0 : index
    %6 = vector.load %arg3[%c0_6, %c0_7] : memref<1x128xf32, #tpu.memory_space<vmem>>, vector<1x128xf32>
    %c0_8 = arith.constant 0 : index
    %c0_9 = arith.constant 0 : index
    %7 = memref.load %arg4[%c0_8, %c0_9] : memref<1x1xf32, #tpu.memory_space<smem>>
    %c0_10 = arith.constant 0 : index
    %c0_11 = arith.constant 0 : index
    %c0_12 = arith.constant 0 : index
    %8 = vector.load %arg1[%c0_10, %c0_11, %c0_12] : memref<8x8x768xf32, #tpu.memory_space<vmem>>, vector<1x8x768xf32>
    %9 = vector.shape_cast %8 : vector<1x8x768xf32> to vector<8x768xf32>
    %cst = arith.constant dense<0.000000e+00> : vector<8x768xf32>
    %10 = tpu.matmul %3, %5, %cst {dimension_numbers = #tpu.dot_dimension_numbers<[1], [0], [0], [1], [0, 0, 1, 1], [], []>} : vector<8x128xf32>, vector<128x768xf32>, vector<8x768xf32> -> vector<8x768xf32>
    %11 = arith.addf %9, %10 : vector<8x768xf32>
    %12 = vector.extract_strided_slice %11 {offsets = [0, 0], sizes = [8, 128], strides = [1, 1]} : vector<8x768xf32> to vector<8x128xf32>
    %13 = arith.negf %12 : vector<8x128xf32>
    %14 = math.exp %13 : vector<8x128xf32>
    %cst_13 = arith.constant 1.000000e+00 : f32
    %15 = vector.broadcast %cst_13 : f32 to vector<8x128xf32>
    %16 = arith.addf %15, %14 : vector<8x128xf32>
    %17 = arith.divf %15, %16 : vector<8x128xf32>
    %18 = vector.extract_strided_slice %11 {offsets = [0, 128], sizes = [8, 128], strides = [1, 1]} : vector<8x768xf32> to vector<8x128xf32>
    %19 = arith.negf %18 : vector<8x128xf32>
    %20 = math.exp %19 : vector<8x128xf32>
    %cst_14 = arith.constant 1.000000e+00 : f32
    %21 = vector.broadcast %cst_14 : f32 to vector<8x128xf32>
    %22 = arith.addf %21, %20 : vector<8x128xf32>
    %23 = arith.divf %21, %22 : vector<8x128xf32>
    %24 = vector.extract_strided_slice %11 {offsets = [0, 256], sizes = [8, 128], strides = [1, 1]} : vector<8x768xf32> to vector<8x128xf32>
    %25 = math.tanh %24 : vector<8x128xf32>
    %26 = vector.extract_strided_slice %11 {offsets = [0, 384], sizes = [8, 128], strides = [1, 1]} : vector<8x768xf32> to vector<8x128xf32>
    %27 = arith.negf %26 : vector<8x128xf32>
    %28 = math.exp %27 : vector<8x128xf32>
    %cst_15 = arith.constant 1.000000e+00 : f32
    %29 = vector.broadcast %cst_15 : f32 to vector<8x128xf32>
    %30 = arith.addf %29, %28 : vector<8x128xf32>
    %31 = arith.divf %29, %30 : vector<8x128xf32>
    %32 = vector.extract_strided_slice %11 {offsets = [0, 512], sizes = [8, 128], strides = [1, 1]} : vector<8x768xf32> to vector<8x128xf32>
    %33 = arith.negf %32 : vector<8x128xf32>
    %34 = math.exp %33 : vector<8x128xf32>
    %cst_16 = arith.constant 1.000000e+00 : f32
    %35 = vector.broadcast %cst_16 : f32 to vector<8x128xf32>
    %36 = arith.addf %35, %34 : vector<8x128xf32>
    %37 = arith.divf %35, %36 : vector<8x128xf32>
    %38 = vector.extract_strided_slice %11 {offsets = [0, 640], sizes = [8, 128], strides = [1, 1]} : vector<8x768xf32> to vector<8x128xf32>
    %39 = math.tanh %38 : vector<8x128xf32>
    %40 = arith.mulf %17, %25 : vector<8x128xf32>
    %41 = arith.mulf %37, %39 : vector<8x128xf32>
    %42 = vector.broadcast %6 : vector<1x128xf32> to vector<8x128xf32>
    %43 = arith.mulf %40, %42 : vector<8x128xf32>
    %cst_17 = arith.constant dense<0.000000e+00> : vector<8xf32>
    %44 = vector.multi_reduction <add>, %43, %cst_17 [1] : vector<8x128xf32> to vector<8xf32>
    %45 = vector.shape_cast %44 : vector<8xf32> to vector<8x1xf32>
    %46 = vector.broadcast %7 : f32 to vector<8x1xf32>
    %47 = arith.addf %45, %46 : vector<8x1xf32>
    %48 = math.tanh %47 : vector<8x1xf32>
    %49 = vector.broadcast %6 : vector<1x128xf32> to vector<8x128xf32>
    %50 = arith.mulf %41, %49 : vector<8x128xf32>
    %cst_18 = arith.constant dense<0.000000e+00> : vector<8xf32>
    %51 = vector.multi_reduction <add>, %50, %cst_18 [1] : vector<8x128xf32> to vector<8xf32>
    %52 = vector.shape_cast %51 : vector<8xf32> to vector<8x1xf32>
    %53 = vector.broadcast %7 : f32 to vector<8x1xf32>
    %54 = arith.addf %52, %53 : vector<8x1xf32>
    %55 = math.tanh %54 : vector<8x1xf32>
    %56 = arith.subf %48, %55 : vector<8x1xf32>
    %57 = arith.negf %56 : vector<8x1xf32>
    %58 = math.exp %57 : vector<8x1xf32>
    %cst_19 = arith.constant 1.000000e+00 : f32
    %59 = vector.broadcast %cst_19 : f32 to vector<8x1xf32>
    %60 = arith.addf %59, %58 : vector<8x1xf32>
    %61 = arith.divf %59, %60 : vector<8x1xf32>
    %62 = arith.subf %40, %41 : vector<8x128xf32>
    %63 = vector.broadcast %61 : vector<8x1xf32> to vector<8x128xf32>
    %64 = arith.mulf %63, %62 : vector<8x128xf32>
    %65 = arith.addf %41, %64 : vector<8x128xf32>
    %66 = arith.mulf %23, %4 : vector<8x128xf32>
    %67 = arith.addf %66, %65 : vector<8x128xf32>
    %68 = math.tanh %67 : vector<8x128xf32>
    %69 = arith.mulf %31, %68 : vector<8x128xf32>
    %c1 = arith.constant 1 : index
    %c0_20 = arith.constant 0 : index
    %c0_21 = arith.constant 0 : index
    %70 = vector.load %arg1[%c1, %c0_20, %c0_21] : memref<8x8x768xf32, #tpu.memory_space<vmem>>, vector<1x8x768xf32>
    %71 = vector.shape_cast %70 : vector<1x8x768xf32> to vector<8x768xf32>
    %cst_22 = arith.constant dense<0.000000e+00> : vector<8x768xf32>
    %72 = tpu.matmul %69, %5, %cst_22 {dimension_numbers = #tpu.dot_dimension_numbers<[1], [0], [0], [1], [0, 0, 1, 1], [], []>} : vector<8x128xf32>, vector<128x768xf32>, vector<8x768xf32> -> vector<8x768xf32>
    %73 = arith.addf %71, %72 : vector<8x768xf32>
    %74 = vector.extract_strided_slice %73 {offsets = [0, 0], sizes = [8, 128], strides = [1, 1]} : vector<8x768xf32> to vector<8x128xf32>
    %75 = arith.negf %74 : vector<8x128xf32>
    %76 = math.exp %75 : vector<8x128xf32>
    %cst_23 = arith.constant 1.000000e+00 : f32
    %77 = vector.broadcast %cst_23 : f32 to vector<8x128xf32>
    %78 = arith.addf %77, %76 : vector<8x128xf32>
    %79 = arith.divf %77, %78 : vector<8x128xf32>
    %80 = vector.extract_strided_slice %73 {offsets = [0, 128], sizes = [8, 128], strides = [1, 1]} : vector<8x768xf32> to vector<8x128xf32>
    %81 = arith.negf %80 : vector<8x128xf32>
    %82 = math.exp %81 : vector<8x128xf32>
    %cst_24 = arith.constant 1.000000e+00 : f32
    %83 = vector.broadcast %cst_24 : f32 to vector<8x128xf32>
    %84 = arith.addf %83, %82 : vector<8x128xf32>
    %85 = arith.divf %83, %84 : vector<8x128xf32>
    %86 = vector.extract_strided_slice %73 {offsets = [0, 256], sizes = [8, 128], strides = [1, 1]} : vector<8x768xf32> to vector<8x128xf32>
    %87 = math.tanh %86 : vector<8x128xf32>
    %88 = vector.extract_strided_slice %73 {offsets = [0, 384], sizes = [8, 128], strides = [1, 1]} : vector<8x768xf32> to vector<8x128xf32>
    %89 = arith.negf %88 : vector<8x128xf32>
    %90 = math.exp %89 : vector<8x128xf32>
    %cst_25 = arith.constant 1.000000e+00 : f32
    %91 = vector.broadcast %cst_25 : f32 to vector<8x128xf32>
    %92 = arith.addf %91, %90 : vector<8x128xf32>
    %93 = arith.divf %91, %92 : vector<8x128xf32>
    %94 = vector.extract_strided_slice %73 {offsets = [0, 512], sizes = [8, 128], strides = [1, 1]} : vector<8x768xf32> to vector<8x128xf32>
    %95 = arith.negf %94 : vector<8x128xf32>
    %96 = math.exp %95 : vector<8x128xf32>
    %cst_26 = arith.constant 1.000000e+00 : f32
    %97 = vector.broadcast %cst_26 : f32 to vector<8x128xf32>
    %98 = arith.addf %97, %96 : vector<8x128xf32>
    %99 = arith.divf %97, %98 : vector<8x128xf32>
    %100 = vector.extract_strided_slice %73 {offsets = [0, 640], sizes = [8, 128], strides = [1, 1]} : vector<8x768xf32> to vector<8x128xf32>
    %101 = math.tanh %100 : vector<8x128xf32>
    %102 = arith.mulf %79, %87 : vector<8x128xf32>
    %103 = arith.mulf %99, %101 : vector<8x128xf32>
    %104 = vector.broadcast %6 : vector<1x128xf32> to vector<8x128xf32>
    %105 = arith.mulf %102, %104 : vector<8x128xf32>
    %cst_27 = arith.constant dense<0.000000e+00> : vector<8xf32>
    %106 = vector.multi_reduction <add>, %105, %cst_27 [1] : vector<8x128xf32> to vector<8xf32>
    %107 = vector.shape_cast %106 : vector<8xf32> to vector<8x1xf32>
    %108 = vector.broadcast %7 : f32 to vector<8x1xf32>
    %109 = arith.addf %107, %108 : vector<8x1xf32>
    %110 = math.tanh %109 : vector<8x1xf32>
    %111 = vector.broadcast %6 : vector<1x128xf32> to vector<8x128xf32>
    %112 = arith.mulf %103, %111 : vector<8x128xf32>
    %cst_28 = arith.constant dense<0.000000e+00> : vector<8xf32>
    %113 = vector.multi_reduction <add>, %112, %cst_28 [1] : vector<8x128xf32> to vector<8xf32>
    %114 = vector.shape_cast %113 : vector<8xf32> to vector<8x1xf32>
    %115 = vector.broadcast %7 : f32 to vector<8x1xf32>
    %116 = arith.addf %114, %115 : vector<8x1xf32>
    %117 = math.tanh %116 : vector<8x1xf32>
    %118 = arith.subf %110, %117 : vector<8x1xf32>
    %119 = arith.negf %118 : vector<8x1xf32>
    %120 = math.exp %119 : vector<8x1xf32>
    %cst_29 = arith.constant 1.000000e+00 : f32
    %121 = vector.broadcast %cst_29 : f32 to vector<8x1xf32>
    %122 = arith.addf %121, %120 : vector<8x1xf32>
    %123 = arith.divf %121, %122 : vector<8x1xf32>
    %124 = arith.subf %102, %103 : vector<8x128xf32>
    %125 = vector.broadcast %123 : vector<8x1xf32> to vector<8x128xf32>
    %126 = arith.mulf %125, %124 : vector<8x128xf32>
    %127 = arith.addf %103, %126 : vector<8x128xf32>
    %128 = arith.mulf %85, %67 : vector<8x128xf32>
    %129 = arith.addf %128, %127 : vector<8x128xf32>
    %130 = math.tanh %129 : vector<8x128xf32>
    %131 = arith.mulf %93, %130 : vector<8x128xf32>
    %c2 = arith.constant 2 : index
    %c0_30 = arith.constant 0 : index
    %c0_31 = arith.constant 0 : index
    %132 = vector.load %arg1[%c2, %c0_30, %c0_31] : memref<8x8x768xf32, #tpu.memory_space<vmem>>, vector<1x8x768xf32>
    %133 = vector.shape_cast %132 : vector<1x8x768xf32> to vector<8x768xf32>
    %cst_32 = arith.constant dense<0.000000e+00> : vector<8x768xf32>
    %134 = tpu.matmul %131, %5, %cst_32 {dimension_numbers = #tpu.dot_dimension_numbers<[1], [0], [0], [1], [0, 0, 1, 1], [], []>} : vector<8x128xf32>, vector<128x768xf32>, vector<8x768xf32> -> vector<8x768xf32>
    %135 = arith.addf %133, %134 : vector<8x768xf32>
    %136 = vector.extract_strided_slice %135 {offsets = [0, 0], sizes = [8, 128], strides = [1, 1]} : vector<8x768xf32> to vector<8x128xf32>
    %137 = arith.negf %136 : vector<8x128xf32>
    %138 = math.exp %137 : vector<8x128xf32>
    %cst_33 = arith.constant 1.000000e+00 : f32
    %139 = vector.broadcast %cst_33 : f32 to vector<8x128xf32>
    %140 = arith.addf %139, %138 : vector<8x128xf32>
    %141 = arith.divf %139, %140 : vector<8x128xf32>
    %142 = vector.extract_strided_slice %135 {offsets = [0, 128], sizes = [8, 128], strides = [1, 1]} : vector<8x768xf32> to vector<8x128xf32>
    %143 = arith.negf %142 : vector<8x128xf32>
    %144 = math.exp %143 : vector<8x128xf32>
    %cst_34 = arith.constant 1.000000e+00 : f32
    %145 = vector.broadcast %cst_34 : f32 to vector<8x128xf32>
    %146 = arith.addf %145, %144 : vector<8x128xf32>
    %147 = arith.divf %145, %146 : vector<8x128xf32>
    %148 = vector.extract_strided_slice %135 {offsets = [0, 256], sizes = [8, 128], strides = [1, 1]} : vector<8x768xf32> to vector<8x128xf32>
    %149 = math.tanh %148 : vector<8x128xf32>
    %150 = vector.extract_strided_slice %135 {offsets = [0, 384], sizes = [8, 128], strides = [1, 1]} : vector<8x768xf32> to vector<8x128xf32>
    %151 = arith.negf %150 : vector<8x128xf32>
    %152 = math.exp %151 : vector<8x128xf32>
    %cst_35 = arith.constant 1.000000e+00 : f32
    %153 = vector.broadcast %cst_35 : f32 to vector<8x128xf32>
    %154 = arith.addf %153, %152 : vector<8x128xf32>
    %155 = arith.divf %153, %154 : vector<8x128xf32>
    %156 = vector.extract_strided_slice %135 {offsets = [0, 512], sizes = [8, 128], strides = [1, 1]} : vector<8x768xf32> to vector<8x128xf32>
    %157 = arith.negf %156 : vector<8x128xf32>
    %158 = math.exp %157 : vector<8x128xf32>
    %cst_36 = arith.constant 1.000000e+00 : f32
    %159 = vector.broadcast %cst_36 : f32 to vector<8x128xf32>
    %160 = arith.addf %159, %158 : vector<8x128xf32>
    %161 = arith.divf %159, %160 : vector<8x128xf32>
    %162 = vector.extract_strided_slice %135 {offsets = [0, 640], sizes = [8, 128], strides = [1, 1]} : vector<8x768xf32> to vector<8x128xf32>
    %163 = math.tanh %162 : vector<8x128xf32>
    %164 = arith.mulf %141, %149 : vector<8x128xf32>
    %165 = arith.mulf %161, %163 : vector<8x128xf32>
    %166 = vector.broadcast %6 : vector<1x128xf32> to vector<8x128xf32>
    %167 = arith.mulf %164, %166 : vector<8x128xf32>
    %cst_37 = arith.constant dense<0.000000e+00> : vector<8xf32>
    %168 = vector.multi_reduction <add>, %167, %cst_37 [1] : vector<8x128xf32> to vector<8xf32>
    %169 = vector.shape_cast %168 : vector<8xf32> to vector<8x1xf32>
    %170 = vector.broadcast %7 : f32 to vector<8x1xf32>
    %171 = arith.addf %169, %170 : vector<8x1xf32>
    %172 = math.tanh %171 : vector<8x1xf32>
    %173 = vector.broadcast %6 : vector<1x128xf32> to vector<8x128xf32>
    %174 = arith.mulf %165, %173 : vector<8x128xf32>
    %cst_38 = arith.constant dense<0.000000e+00> : vector<8xf32>
    %175 = vector.multi_reduction <add>, %174, %cst_38 [1] : vector<8x128xf32> to vector<8xf32>
    %176 = vector.shape_cast %175 : vector<8xf32> to vector<8x1xf32>
    %177 = vector.broadcast %7 : f32 to vector<8x1xf32>
    %178 = arith.addf %176, %177 : vector<8x1xf32>
    %179 = math.tanh %178 : vector<8x1xf32>
    %180 = arith.subf %172, %179 : vector<8x1xf32>
    %181 = arith.negf %180 : vector<8x1xf32>
    %182 = math.exp %181 : vector<8x1xf32>
    %cst_39 = arith.constant 1.000000e+00 : f32
    %183 = vector.broadcast %cst_39 : f32 to vector<8x1xf32>
    %184 = arith.addf %183, %182 : vector<8x1xf32>
    %185 = arith.divf %183, %184 : vector<8x1xf32>
    %186 = arith.subf %164, %165 : vector<8x128xf32>
    %187 = vector.broadcast %185 : vector<8x1xf32> to vector<8x128xf32>
    %188 = arith.mulf %187, %186 : vector<8x128xf32>
    %189 = arith.addf %165, %188 : vector<8x128xf32>
    %190 = arith.mulf %147, %129 : vector<8x128xf32>
    %191 = arith.addf %190, %189 : vector<8x128xf32>
    %192 = math.tanh %191 : vector<8x128xf32>
    %193 = arith.mulf %155, %192 : vector<8x128xf32>
    %c3 = arith.constant 3 : index
    %c0_40 = arith.constant 0 : index
    %c0_41 = arith.constant 0 : index
    %194 = vector.load %arg1[%c3, %c0_40, %c0_41] : memref<8x8x768xf32, #tpu.memory_space<vmem>>, vector<1x8x768xf32>
    %195 = vector.shape_cast %194 : vector<1x8x768xf32> to vector<8x768xf32>
    %cst_42 = arith.constant dense<0.000000e+00> : vector<8x768xf32>
    %196 = tpu.matmul %193, %5, %cst_42 {dimension_numbers = #tpu.dot_dimension_numbers<[1], [0], [0], [1], [0, 0, 1, 1], [], []>} : vector<8x128xf32>, vector<128x768xf32>, vector<8x768xf32> -> vector<8x768xf32>
    %197 = arith.addf %195, %196 : vector<8x768xf32>
    %198 = vector.extract_strided_slice %197 {offsets = [0, 0], sizes = [8, 128], strides = [1, 1]} : vector<8x768xf32> to vector<8x128xf32>
    %199 = arith.negf %198 : vector<8x128xf32>
    %200 = math.exp %199 : vector<8x128xf32>
    %cst_43 = arith.constant 1.000000e+00 : f32
    %201 = vector.broadcast %cst_43 : f32 to vector<8x128xf32>
    %202 = arith.addf %201, %200 : vector<8x128xf32>
    %203 = arith.divf %201, %202 : vector<8x128xf32>
    %204 = vector.extract_strided_slice %197 {offsets = [0, 128], sizes = [8, 128], strides = [1, 1]} : vector<8x768xf32> to vector<8x128xf32>
    %205 = arith.negf %204 : vector<8x128xf32>
    %206 = math.exp %205 : vector<8x128xf32>
    %cst_44 = arith.constant 1.000000e+00 : f32
    %207 = vector.broadcast %cst_44 : f32 to vector<8x128xf32>
    %208 = arith.addf %207, %206 : vector<8x128xf32>
    %209 = arith.divf %207, %208 : vector<8x128xf32>
    %210 = vector.extract_strided_slice %197 {offsets = [0, 256], sizes = [8, 128], strides = [1, 1]} : vector<8x768xf32> to vector<8x128xf32>
    %211 = math.tanh %210 : vector<8x128xf32>
    %212 = vector.extract_strided_slice %197 {offsets = [0, 384], sizes = [8, 128], strides = [1, 1]} : vector<8x768xf32> to vector<8x128xf32>
    %213 = arith.negf %212 : vector<8x128xf32>
    %214 = math.exp %213 : vector<8x128xf32>
    %cst_45 = arith.constant 1.000000e+00 : f32
    %215 = vector.broadcast %cst_45 : f32 to vector<8x128xf32>
    %216 = arith.addf %215, %214 : vector<8x128xf32>
    %217 = arith.divf %215, %216 : vector<8x128xf32>
    %218 = vector.extract_strided_slice %197 {offsets = [0, 512], sizes = [8, 128], strides = [1, 1]} : vector<8x768xf32> to vector<8x128xf32>
    %219 = arith.negf %218 : vector<8x128xf32>
    %220 = math.exp %219 : vector<8x128xf32>
    %cst_46 = arith.constant 1.000000e+00 : f32
    %221 = vector.broadcast %cst_46 : f32 to vector<8x128xf32>
    %222 = arith.addf %221, %220 : vector<8x128xf32>
    %223 = arith.divf %221, %222 : vector<8x128xf32>
    %224 = vector.extract_strided_slice %197 {offsets = [0, 640], sizes = [8, 128], strides = [1, 1]} : vector<8x768xf32> to vector<8x128xf32>
    %225 = math.tanh %224 : vector<8x128xf32>
    %226 = arith.mulf %203, %211 : vector<8x128xf32>
    %227 = arith.mulf %223, %225 : vector<8x128xf32>
    %228 = vector.broadcast %6 : vector<1x128xf32> to vector<8x128xf32>
    %229 = arith.mulf %226, %228 : vector<8x128xf32>
    %cst_47 = arith.constant dense<0.000000e+00> : vector<8xf32>
    %230 = vector.multi_reduction <add>, %229, %cst_47 [1] : vector<8x128xf32> to vector<8xf32>
    %231 = vector.shape_cast %230 : vector<8xf32> to vector<8x1xf32>
    %232 = vector.broadcast %7 : f32 to vector<8x1xf32>
    %233 = arith.addf %231, %232 : vector<8x1xf32>
    %234 = math.tanh %233 : vector<8x1xf32>
    %235 = vector.broadcast %6 : vector<1x128xf32> to vector<8x128xf32>
    %236 = arith.mulf %227, %235 : vector<8x128xf32>
    %cst_48 = arith.constant dense<0.000000e+00> : vector<8xf32>
    %237 = vector.multi_reduction <add>, %236, %cst_48 [1] : vector<8x128xf32> to vector<8xf32>
    %238 = vector.shape_cast %237 : vector<8xf32> to vector<8x1xf32>
    %239 = vector.broadcast %7 : f32 to vector<8x1xf32>
    %240 = arith.addf %238, %239 : vector<8x1xf32>
    %241 = math.tanh %240 : vector<8x1xf32>
    %242 = arith.subf %234, %241 : vector<8x1xf32>
    %243 = arith.negf %242 : vector<8x1xf32>
    %244 = math.exp %243 : vector<8x1xf32>
    %cst_49 = arith.constant 1.000000e+00 : f32
    %245 = vector.broadcast %cst_49 : f32 to vector<8x1xf32>
    %246 = arith.addf %245, %244 : vector<8x1xf32>
    %247 = arith.divf %245, %246 : vector<8x1xf32>
    %248 = arith.subf %226, %227 : vector<8x128xf32>
    %249 = vector.broadcast %247 : vector<8x1xf32> to vector<8x128xf32>
    %250 = arith.mulf %249, %248 : vector<8x128xf32>
    %251 = arith.addf %227, %250 : vector<8x128xf32>
    %252 = arith.mulf %209, %191 : vector<8x128xf32>
    %253 = arith.addf %252, %251 : vector<8x128xf32>
    %254 = math.tanh %253 : vector<8x128xf32>
    %255 = arith.mulf %217, %254 : vector<8x128xf32>
    %256 = vector.extract_strided_slice %255 {offsets = [1, 0], sizes = [1, 128], strides = [1, 1]} : vector<8x128xf32> to vector<1x128xf32>
    %c0_i32_50 = arith.constant 0 : i32
    %257 = arith.cmpi eq, %arg0, %c0_i32_50 : i32
    %258 = arith.extui %257 : i1 to i32
    %c0_i32_51 = arith.constant 0 : i32
    %259 = arith.cmpi ne, %258, %c0_i32_51 : i32
    scf.if %259 {
      %c0_100 = arith.constant 0 : index
      %c0_101 = arith.constant 0 : index
      %517 = vector.load %arg10[%c0_100, %c0_101] : memref<8x128xf32, #tpu.memory_space<vmem>>, vector<1x128xf32>
      tpu.vector_store %arg10[%c0_100, %c0_101], %256 {strides = array<i32>} : memref<8x128xf32, #tpu.memory_space<vmem>>, vector<1x128xf32>,
    } else {
    }
    %c4 = arith.constant 4 : index
    %c0_52 = arith.constant 0 : index
    %c0_53 = arith.constant 0 : index
    %260 = vector.load %arg1[%c4, %c0_52, %c0_53] : memref<8x8x768xf32, #tpu.memory_space<vmem>>, vector<1x8x768xf32>
    %261 = vector.shape_cast %260 : vector<1x8x768xf32> to vector<8x768xf32>
    %cst_54 = arith.constant dense<0.000000e+00> : vector<8x768xf32>
    %262 = tpu.matmul %255, %5, %cst_54 {dimension_numbers = #tpu.dot_dimension_numbers<[1], [0], [0], [1], [0, 0, 1, 1], [], []>} : vector<8x128xf32>, vector<128x768xf32>, vector<8x768xf32> -> vector<8x768xf32>
    %263 = arith.addf %261, %262 : vector<8x768xf32>
    %264 = vector.extract_strided_slice %263 {offsets = [0, 0], sizes = [8, 128], strides = [1, 1]} : vector<8x768xf32> to vector<8x128xf32>
    %265 = arith.negf %264 : vector<8x128xf32>
    %266 = math.exp %265 : vector<8x128xf32>
    %cst_55 = arith.constant 1.000000e+00 : f32
    %267 = vector.broadcast %cst_55 : f32 to vector<8x128xf32>
    %268 = arith.addf %267, %266 : vector<8x128xf32>
    %269 = arith.divf %267, %268 : vector<8x128xf32>
    %270 = vector.extract_strided_slice %263 {offsets = [0, 128], sizes = [8, 128], strides = [1, 1]} : vector<8x768xf32> to vector<8x128xf32>
    %271 = arith.negf %270 : vector<8x128xf32>
    %272 = math.exp %271 : vector<8x128xf32>
    %cst_56 = arith.constant 1.000000e+00 : f32
    %273 = vector.broadcast %cst_56 : f32 to vector<8x128xf32>
    %274 = arith.addf %273, %272 : vector<8x128xf32>
    %275 = arith.divf %273, %274 : vector<8x128xf32>
    %276 = vector.extract_strided_slice %263 {offsets = [0, 256], sizes = [8, 128], strides = [1, 1]} : vector<8x768xf32> to vector<8x128xf32>
    %277 = math.tanh %276 : vector<8x128xf32>
    %278 = vector.extract_strided_slice %263 {offsets = [0, 384], sizes = [8, 128], strides = [1, 1]} : vector<8x768xf32> to vector<8x128xf32>
    %279 = arith.negf %278 : vector<8x128xf32>
    %280 = math.exp %279 : vector<8x128xf32>
    %cst_57 = arith.constant 1.000000e+00 : f32
    %281 = vector.broadcast %cst_57 : f32 to vector<8x128xf32>
    %282 = arith.addf %281, %280 : vector<8x128xf32>
    %283 = arith.divf %281, %282 : vector<8x128xf32>
    %284 = vector.extract_strided_slice %263 {offsets = [0, 512], sizes = [8, 128], strides = [1, 1]} : vector<8x768xf32> to vector<8x128xf32>
    %285 = arith.negf %284 : vector<8x128xf32>
    %286 = math.exp %285 : vector<8x128xf32>
    %cst_58 = arith.constant 1.000000e+00 : f32
    %287 = vector.broadcast %cst_58 : f32 to vector<8x128xf32>
    %288 = arith.addf %287, %286 : vector<8x128xf32>
    %289 = arith.divf %287, %288 : vector<8x128xf32>
    %290 = vector.extract_strided_slice %263 {offsets = [0, 640], sizes = [8, 128], strides = [1, 1]} : vector<8x768xf32> to vector<8x128xf32>
    %291 = math.tanh %290 : vector<8x128xf32>
    %292 = arith.mulf %269, %277 : vector<8x128xf32>
    %293 = arith.mulf %289, %291 : vector<8x128xf32>
    %294 = vector.broadcast %6 : vector<1x128xf32> to vector<8x128xf32>
    %295 = arith.mulf %292, %294 : vector<8x128xf32>
    %cst_59 = arith.constant dense<0.000000e+00> : vector<8xf32>
    %296 = vector.multi_reduction <add>, %295, %cst_59 [1] : vector<8x128xf32> to vector<8xf32>
    %297 = vector.shape_cast %296 : vector<8xf32> to vector<8x1xf32>
    %298 = vector.broadcast %7 : f32 to vector<8x1xf32>
    %299 = arith.addf %297, %298 : vector<8x1xf32>
    %300 = math.tanh %299 : vector<8x1xf32>
    %301 = vector.broadcast %6 : vector<1x128xf32> to vector<8x128xf32>
    %302 = arith.mulf %293, %301 : vector<8x128xf32>
    %cst_60 = arith.constant dense<0.000000e+00> : vector<8xf32>
    %303 = vector.multi_reduction <add>, %302, %cst_60 [1] : vector<8x128xf32> to vector<8xf32>
    %304 = vector.shape_cast %303 : vector<8xf32> to vector<8x1xf32>
    %305 = vector.broadcast %7 : f32 to vector<8x1xf32>
    %306 = arith.addf %304, %305 : vector<8x1xf32>
    %307 = math.tanh %306 : vector<8x1xf32>
    %308 = arith.subf %300, %307 : vector<8x1xf32>
    %309 = arith.negf %308 : vector<8x1xf32>
    %310 = math.exp %309 : vector<8x1xf32>
    %cst_61 = arith.constant 1.000000e+00 : f32
    %311 = vector.broadcast %cst_61 : f32 to vector<8x1xf32>
    %312 = arith.addf %311, %310 : vector<8x1xf32>
    %313 = arith.divf %311, %312 : vector<8x1xf32>
    %314 = arith.subf %292, %293 : vector<8x128xf32>
    %315 = vector.broadcast %313 : vector<8x1xf32> to vector<8x128xf32>
    %316 = arith.mulf %315, %314 : vector<8x128xf32>
    %317 = arith.addf %293, %316 : vector<8x128xf32>
    %318 = arith.mulf %275, %253 : vector<8x128xf32>
    %319 = arith.addf %318, %317 : vector<8x128xf32>
    %320 = math.tanh %319 : vector<8x128xf32>
    %321 = arith.mulf %283, %320 : vector<8x128xf32>
    %c5 = arith.constant 5 : index
    %c0_62 = arith.constant 0 : index
    %c0_63 = arith.constant 0 : index
    %322 = vector.load %arg1[%c5, %c0_62, %c0_63] : memref<8x8x768xf32, #tpu.memory_space<vmem>>, vector<1x8x768xf32>
    %323 = vector.shape_cast %322 : vector<1x8x768xf32> to vector<8x768xf32>
    %cst_64 = arith.constant dense<0.000000e+00> : vector<8x768xf32>
    %324 = tpu.matmul %321, %5, %cst_64 {dimension_numbers = #tpu.dot_dimension_numbers<[1], [0], [0], [1], [0, 0, 1, 1], [], []>} : vector<8x128xf32>, vector<128x768xf32>, vector<8x768xf32> -> vector<8x768xf32>
    %325 = arith.addf %323, %324 : vector<8x768xf32>
    %326 = vector.extract_strided_slice %325 {offsets = [0, 0], sizes = [8, 128], strides = [1, 1]} : vector<8x768xf32> to vector<8x128xf32>
    %327 = arith.negf %326 : vector<8x128xf32>
    %328 = math.exp %327 : vector<8x128xf32>
    %cst_65 = arith.constant 1.000000e+00 : f32
    %329 = vector.broadcast %cst_65 : f32 to vector<8x128xf32>
    %330 = arith.addf %329, %328 : vector<8x128xf32>
    %331 = arith.divf %329, %330 : vector<8x128xf32>
    %332 = vector.extract_strided_slice %325 {offsets = [0, 128], sizes = [8, 128], strides = [1, 1]} : vector<8x768xf32> to vector<8x128xf32>
    %333 = arith.negf %332 : vector<8x128xf32>
    %334 = math.exp %333 : vector<8x128xf32>
    %cst_66 = arith.constant 1.000000e+00 : f32
    %335 = vector.broadcast %cst_66 : f32 to vector<8x128xf32>
    %336 = arith.addf %335, %334 : vector<8x128xf32>
    %337 = arith.divf %335, %336 : vector<8x128xf32>
    %338 = vector.extract_strided_slice %325 {offsets = [0, 256], sizes = [8, 128], strides = [1, 1]} : vector<8x768xf32> to vector<8x128xf32>
    %339 = math.tanh %338 : vector<8x128xf32>
    %340 = vector.extract_strided_slice %325 {offsets = [0, 384], sizes = [8, 128], strides = [1, 1]} : vector<8x768xf32> to vector<8x128xf32>
    %341 = arith.negf %340 : vector<8x128xf32>
    %342 = math.exp %341 : vector<8x128xf32>
    %cst_67 = arith.constant 1.000000e+00 : f32
    %343 = vector.broadcast %cst_67 : f32 to vector<8x128xf32>
    %344 = arith.addf %343, %342 : vector<8x128xf32>
    %345 = arith.divf %343, %344 : vector<8x128xf32>
    %346 = vector.extract_strided_slice %325 {offsets = [0, 512], sizes = [8, 128], strides = [1, 1]} : vector<8x768xf32> to vector<8x128xf32>
    %347 = arith.negf %346 : vector<8x128xf32>
    %348 = math.exp %347 : vector<8x128xf32>
    %cst_68 = arith.constant 1.000000e+00 : f32
    %349 = vector.broadcast %cst_68 : f32 to vector<8x128xf32>
    %350 = arith.addf %349, %348 : vector<8x128xf32>
    %351 = arith.divf %349, %350 : vector<8x128xf32>
    %352 = vector.extract_strided_slice %325 {offsets = [0, 640], sizes = [8, 128], strides = [1, 1]} : vector<8x768xf32> to vector<8x128xf32>
    %353 = math.tanh %352 : vector<8x128xf32>
    %354 = arith.mulf %331, %339 : vector<8x128xf32>
    %355 = arith.mulf %351, %353 : vector<8x128xf32>
    %356 = vector.broadcast %6 : vector<1x128xf32> to vector<8x128xf32>
    %357 = arith.mulf %354, %356 : vector<8x128xf32>
    %cst_69 = arith.constant dense<0.000000e+00> : vector<8xf32>
    %358 = vector.multi_reduction <add>, %357, %cst_69 [1] : vector<8x128xf32> to vector<8xf32>
    %359 = vector.shape_cast %358 : vector<8xf32> to vector<8x1xf32>
    %360 = vector.broadcast %7 : f32 to vector<8x1xf32>
    %361 = arith.addf %359, %360 : vector<8x1xf32>
    %362 = math.tanh %361 : vector<8x1xf32>
    %363 = vector.broadcast %6 : vector<1x128xf32> to vector<8x128xf32>
    %364 = arith.mulf %355, %363 : vector<8x128xf32>
    %cst_70 = arith.constant dense<0.000000e+00> : vector<8xf32>
    %365 = vector.multi_reduction <add>, %364, %cst_70 [1] : vector<8x128xf32> to vector<8xf32>
    %366 = vector.shape_cast %365 : vector<8xf32> to vector<8x1xf32>
    %367 = vector.broadcast %7 : f32 to vector<8x1xf32>
    %368 = arith.addf %366, %367 : vector<8x1xf32>
    %369 = math.tanh %368 : vector<8x1xf32>
    %370 = arith.subf %362, %369 : vector<8x1xf32>
    %371 = arith.negf %370 : vector<8x1xf32>
    %372 = math.exp %371 : vector<8x1xf32>
    %cst_71 = arith.constant 1.000000e+00 : f32
    %373 = vector.broadcast %cst_71 : f32 to vector<8x1xf32>
    %374 = arith.addf %373, %372 : vector<8x1xf32>
    %375 = arith.divf %373, %374 : vector<8x1xf32>
    %376 = arith.subf %354, %355 : vector<8x128xf32>
    %377 = vector.broadcast %375 : vector<8x1xf32> to vector<8x128xf32>
    %378 = arith.mulf %377, %376 : vector<8x128xf32>
    %379 = arith.addf %355, %378 : vector<8x128xf32>
    %380 = arith.mulf %337, %319 : vector<8x128xf32>
    %381 = arith.addf %380, %379 : vector<8x128xf32>
    %382 = math.tanh %381 : vector<8x128xf32>
    %383 = arith.mulf %345, %382 : vector<8x128xf32>
    %c6 = arith.constant 6 : index
    %c0_72 = arith.constant 0 : index
    %c0_73 = arith.constant 0 : index
    %384 = vector.load %arg1[%c6, %c0_72, %c0_73] : memref<8x8x768xf32, #tpu.memory_space<vmem>>, vector<1x8x768xf32>
    %385 = vector.shape_cast %384 : vector<1x8x768xf32> to vector<8x768xf32>
    %cst_74 = arith.constant dense<0.000000e+00> : vector<8x768xf32>
    %386 = tpu.matmul %383, %5, %cst_74 {dimension_numbers = #tpu.dot_dimension_numbers<[1], [0], [0], [1], [0, 0, 1, 1], [], []>} : vector<8x128xf32>, vector<128x768xf32>, vector<8x768xf32> -> vector<8x768xf32>
    %387 = arith.addf %385, %386 : vector<8x768xf32>
    %388 = vector.extract_strided_slice %387 {offsets = [0, 0], sizes = [8, 128], strides = [1, 1]} : vector<8x768xf32> to vector<8x128xf32>
    %389 = arith.negf %388 : vector<8x128xf32>
    %390 = math.exp %389 : vector<8x128xf32>
    %cst_75 = arith.constant 1.000000e+00 : f32
    %391 = vector.broadcast %cst_75 : f32 to vector<8x128xf32>
    %392 = arith.addf %391, %390 : vector<8x128xf32>
    %393 = arith.divf %391, %392 : vector<8x128xf32>
    %394 = vector.extract_strided_slice %387 {offsets = [0, 128], sizes = [8, 128], strides = [1, 1]} : vector<8x768xf32> to vector<8x128xf32>
    %395 = arith.negf %394 : vector<8x128xf32>
    %396 = math.exp %395 : vector<8x128xf32>
    %cst_76 = arith.constant 1.000000e+00 : f32
    %397 = vector.broadcast %cst_76 : f32 to vector<8x128xf32>
    %398 = arith.addf %397, %396 : vector<8x128xf32>
    %399 = arith.divf %397, %398 : vector<8x128xf32>
    %400 = vector.extract_strided_slice %387 {offsets = [0, 256], sizes = [8, 128], strides = [1, 1]} : vector<8x768xf32> to vector<8x128xf32>
    %401 = math.tanh %400 : vector<8x128xf32>
    %402 = vector.extract_strided_slice %387 {offsets = [0, 384], sizes = [8, 128], strides = [1, 1]} : vector<8x768xf32> to vector<8x128xf32>
    %403 = arith.negf %402 : vector<8x128xf32>
    %404 = math.exp %403 : vector<8x128xf32>
    %cst_77 = arith.constant 1.000000e+00 : f32
    %405 = vector.broadcast %cst_77 : f32 to vector<8x128xf32>
    %406 = arith.addf %405, %404 : vector<8x128xf32>
    %407 = arith.divf %405, %406 : vector<8x128xf32>
    %408 = vector.extract_strided_slice %387 {offsets = [0, 512], sizes = [8, 128], strides = [1, 1]} : vector<8x768xf32> to vector<8x128xf32>
    %409 = arith.negf %408 : vector<8x128xf32>
    %410 = math.exp %409 : vector<8x128xf32>
    %cst_78 = arith.constant 1.000000e+00 : f32
    %411 = vector.broadcast %cst_78 : f32 to vector<8x128xf32>
    %412 = arith.addf %411, %410 : vector<8x128xf32>
    %413 = arith.divf %411, %412 : vector<8x128xf32>
    %414 = vector.extract_strided_slice %387 {offsets = [0, 640], sizes = [8, 128], strides = [1, 1]} : vector<8x768xf32> to vector<8x128xf32>
    %415 = math.tanh %414 : vector<8x128xf32>
    %416 = arith.mulf %393, %401 : vector<8x128xf32>
    %417 = arith.mulf %413, %415 : vector<8x128xf32>
    %418 = vector.broadcast %6 : vector<1x128xf32> to vector<8x128xf32>
    %419 = arith.mulf %416, %418 : vector<8x128xf32>
    %cst_79 = arith.constant dense<0.000000e+00> : vector<8xf32>
    %420 = vector.multi_reduction <add>, %419, %cst_79 [1] : vector<8x128xf32> to vector<8xf32>
    %421 = vector.shape_cast %420 : vector<8xf32> to vector<8x1xf32>
    %422 = vector.broadcast %7 : f32 to vector<8x1xf32>
    %423 = arith.addf %421, %422 : vector<8x1xf32>
    %424 = math.tanh %423 : vector<8x1xf32>
    %425 = vector.broadcast %6 : vector<1x128xf32> to vector<8x128xf32>
    %426 = arith.mulf %417, %425 : vector<8x128xf32>
    %cst_80 = arith.constant dense<0.000000e+00> : vector<8xf32>
    %427 = vector.multi_reduction <add>, %426, %cst_80 [1] : vector<8x128xf32> to vector<8xf32>
    %428 = vector.shape_cast %427 : vector<8xf32> to vector<8x1xf32>
    %429 = vector.broadcast %7 : f32 to vector<8x1xf32>
    %430 = arith.addf %428, %429 : vector<8x1xf32>
    %431 = math.tanh %430 : vector<8x1xf32>
    %432 = arith.subf %424, %431 : vector<8x1xf32>
    %433 = arith.negf %432 : vector<8x1xf32>
    %434 = math.exp %433 : vector<8x1xf32>
    %cst_81 = arith.constant 1.000000e+00 : f32
    %435 = vector.broadcast %cst_81 : f32 to vector<8x1xf32>
    %436 = arith.addf %435, %434 : vector<8x1xf32>
    %437 = arith.divf %435, %436 : vector<8x1xf32>
    %438 = arith.subf %416, %417 : vector<8x128xf32>
    %439 = vector.broadcast %437 : vector<8x1xf32> to vector<8x128xf32>
    %440 = arith.mulf %439, %438 : vector<8x128xf32>
    %441 = arith.addf %417, %440 : vector<8x128xf32>
    %442 = arith.mulf %399, %381 : vector<8x128xf32>
    %443 = arith.addf %442, %441 : vector<8x128xf32>
    %444 = math.tanh %443 : vector<8x128xf32>
    %445 = arith.mulf %407, %444 : vector<8x128xf32>
    %c7 = arith.constant 7 : index
    %c0_82 = arith.constant 0 : index
    %c0_83 = arith.constant 0 : index
    %446 = vector.load %arg1[%c7, %c0_82, %c0_83] : memref<8x8x768xf32, #tpu.memory_space<vmem>>, vector<1x8x768xf32>
    %447 = vector.shape_cast %446 : vector<1x8x768xf32> to vector<8x768xf32>
    %cst_84 = arith.constant dense<0.000000e+00> : vector<8x768xf32>
    %448 = tpu.matmul %445, %5, %cst_84 {dimension_numbers = #tpu.dot_dimension_numbers<[1], [0], [0], [1], [0, 0, 1, 1], [], []>} : vector<8x128xf32>, vector<128x768xf32>, vector<8x768xf32> -> vector<8x768xf32>
    %449 = arith.addf %447, %448 : vector<8x768xf32>
    %450 = vector.extract_strided_slice %449 {offsets = [0, 0], sizes = [8, 128], strides = [1, 1]} : vector<8x768xf32> to vector<8x128xf32>
    %451 = arith.negf %450 : vector<8x128xf32>
    %452 = math.exp %451 : vector<8x128xf32>
    %cst_85 = arith.constant 1.000000e+00 : f32
    %453 = vector.broadcast %cst_85 : f32 to vector<8x128xf32>
    %454 = arith.addf %453, %452 : vector<8x128xf32>
    %455 = arith.divf %453, %454 : vector<8x128xf32>
    %456 = vector.extract_strided_slice %449 {offsets = [0, 128], sizes = [8, 128], strides = [1, 1]} : vector<8x768xf32> to vector<8x128xf32>
    %457 = arith.negf %456 : vector<8x128xf32>
    %458 = math.exp %457 : vector<8x128xf32>
    %cst_86 = arith.constant 1.000000e+00 : f32
    %459 = vector.broadcast %cst_86 : f32 to vector<8x128xf32>
    %460 = arith.addf %459, %458 : vector<8x128xf32>
    %461 = arith.divf %459, %460 : vector<8x128xf32>
    %462 = vector.extract_strided_slice %449 {offsets = [0, 256], sizes = [8, 128], strides = [1, 1]} : vector<8x768xf32> to vector<8x128xf32>
    %463 = math.tanh %462 : vector<8x128xf32>
    %464 = vector.extract_strided_slice %449 {offsets = [0, 384], sizes = [8, 128], strides = [1, 1]} : vector<8x768xf32> to vector<8x128xf32>
    %465 = arith.negf %464 : vector<8x128xf32>
    %466 = math.exp %465 : vector<8x128xf32>
    %cst_87 = arith.constant 1.000000e+00 : f32
    %467 = vector.broadcast %cst_87 : f32 to vector<8x128xf32>
    %468 = arith.addf %467, %466 : vector<8x128xf32>
    %469 = arith.divf %467, %468 : vector<8x128xf32>
    %470 = vector.extract_strided_slice %449 {offsets = [0, 512], sizes = [8, 128], strides = [1, 1]} : vector<8x768xf32> to vector<8x128xf32>
    %471 = arith.negf %470 : vector<8x128xf32>
    %472 = math.exp %471 : vector<8x128xf32>
    %cst_88 = arith.constant 1.000000e+00 : f32
    %473 = vector.broadcast %cst_88 : f32 to vector<8x128xf32>
    %474 = arith.addf %473, %472 : vector<8x128xf32>
    %475 = arith.divf %473, %474 : vector<8x128xf32>
    %476 = vector.extract_strided_slice %449 {offsets = [0, 640], sizes = [8, 128], strides = [1, 1]} : vector<8x768xf32> to vector<8x128xf32>
    %477 = math.tanh %476 : vector<8x128xf32>
    %478 = arith.mulf %455, %463 : vector<8x128xf32>
    %479 = arith.mulf %475, %477 : vector<8x128xf32>
    %480 = vector.broadcast %6 : vector<1x128xf32> to vector<8x128xf32>
    %481 = arith.mulf %478, %480 : vector<8x128xf32>
    %cst_89 = arith.constant dense<0.000000e+00> : vector<8xf32>
    %482 = vector.multi_reduction <add>, %481, %cst_89 [1] : vector<8x128xf32> to vector<8xf32>
    %483 = vector.shape_cast %482 : vector<8xf32> to vector<8x1xf32>
    %484 = vector.broadcast %7 : f32 to vector<8x1xf32>
    %485 = arith.addf %483, %484 : vector<8x1xf32>
    %486 = math.tanh %485 : vector<8x1xf32>
    %487 = vector.broadcast %6 : vector<1x128xf32> to vector<8x128xf32>
    %488 = arith.mulf %479, %487 : vector<8x128xf32>
    %cst_90 = arith.constant dense<0.000000e+00> : vector<8xf32>
    %489 = vector.multi_reduction <add>, %488, %cst_90 [1] : vector<8x128xf32> to vector<8xf32>
    %490 = vector.shape_cast %489 : vector<8xf32> to vector<8x1xf32>
    %491 = vector.broadcast %7 : f32 to vector<8x1xf32>
    %492 = arith.addf %490, %491 : vector<8x1xf32>
    %493 = math.tanh %492 : vector<8x1xf32>
    %494 = arith.subf %486, %493 : vector<8x1xf32>
    %495 = arith.negf %494 : vector<8x1xf32>
    %496 = math.exp %495 : vector<8x1xf32>
    %cst_91 = arith.constant 1.000000e+00 : f32
    %497 = vector.broadcast %cst_91 : f32 to vector<8x1xf32>
    %498 = arith.addf %497, %496 : vector<8x1xf32>
    %499 = arith.divf %497, %498 : vector<8x1xf32>
    %500 = arith.subf %478, %479 : vector<8x128xf32>
    %501 = vector.broadcast %499 : vector<8x1xf32> to vector<8x128xf32>
    %502 = arith.mulf %501, %500 : vector<8x128xf32>
    %503 = arith.addf %479, %502 : vector<8x128xf32>
    %504 = arith.mulf %461, %443 : vector<8x128xf32>
    %505 = arith.addf %504, %503 : vector<8x128xf32>
    %506 = math.tanh %505 : vector<8x128xf32>
    %507 = arith.mulf %469, %506 : vector<8x128xf32>
    %508 = vector.extract_strided_slice %507 {offsets = [1, 0], sizes = [1, 128], strides = [1, 1]} : vector<8x128xf32> to vector<1x128xf32>
    %c0_i32_92 = arith.constant 0 : i32
    %509 = arith.cmpi eq, %arg0, %c0_i32_92 : i32
    %510 = arith.extui %509 : i1 to i32
    %c0_i32_93 = arith.constant 0 : i32
    %511 = arith.cmpi ne, %510, %c0_i32_93 : i32
    scf.if %511 {
      %c1_100 = arith.constant 1 : index
      %c0_101 = arith.constant 0 : index
      %517 = vector.load %arg10[%c1_100, %c0_101] : memref<8x128xf32, #tpu.memory_space<vmem>>, vector<1x128xf32>
      tpu.vector_store %arg10[%c1_100, %c0_101], %508 {strides = array<i32>} : memref<8x128xf32, #tpu.memory_space<vmem>>, vector<1x128xf32>,
    } else {
    }
    %c0_94 = arith.constant 0 : index
    %c0_95 = arith.constant 0 : index
    %512 = vector.load %arg8[%c0_94, %c0_95] : memref<8x128xf32, #tpu.memory_space<vmem>>, vector<8x128xf32>
    tpu.vector_store %arg8[%c0_94, %c0_95], %507 {strides = array<i32>} : memref<8x128xf32, #tpu.memory_space<vmem>>, vector<8x128xf32>,
    %c0_96 = arith.constant 0 : index
    %c0_97 = arith.constant 0 : index
    %513 = vector.load %arg9[%c0_96, %c0_97] : memref<8x128xf32, #tpu.memory_space<vmem>>, vector<8x128xf32>
    tpu.vector_store %arg9[%c0_96, %c0_97], %505 {strides = array<i32>} : memref<8x128xf32, #tpu.memory_space<vmem>>, vector<8x128xf32>,
    %c0_i32_98 = arith.constant 0 : i32
    %514 = arith.cmpi eq, %arg0, %c0_i32_98 : i32
    %515 = arith.extui %514 : i1 to i32
    %c0_i32_99 = arith.constant 0 : i32
    %516 = arith.cmpi ne, %515, %c0_i32_99 : i32
    scf.if %516 {
      %c0_100 = arith.constant 0 : index
      %c0_101 = arith.constant 0 : index
      %517 = vector.load %arg10[%c0_100, %c0_101] : memref<8x128xf32, #tpu.memory_space<vmem>>, vector<8x128xf32>
      %c0_102 = arith.constant 0 : index
      %c0_103 = arith.constant 0 : index
      %518 = vector.load %arg5[%c0_102, %c0_103] : memref<128x128xf32, #tpu.memory_space<vmem>>, vector<128x128xf32>
      %cst_104 = arith.constant dense<0.000000e+00> : vector<8x128xf32>
      %519 = tpu.matmul %517, %518, %cst_104 {dimension_numbers = #tpu.dot_dimension_numbers<[1], [0], [0], [1], [0, 0, 1, 1], [], []>} : vector<8x128xf32>, vector<128x128xf32>, vector<8x128xf32> -> vector<8x128xf32>
      %c0_105 = arith.constant 0 : index
      %c0_106 = arith.constant 0 : index
      %520 = vector.load %arg6[%c0_105, %c0_106] : memref<1x128xf32, #tpu.memory_space<vmem>>, vector<1x128xf32>
      %521 = vector.broadcast %520 : vector<1x128xf32> to vector<8x128xf32>
      %522 = arith.addf %519, %521 : vector<8x128xf32>
      %c0_107 = arith.constant 0 : index
      %c0_108 = arith.constant 0 : index
      %523 = vector.load %arg7[%c0_107, %c0_108] : memref<8x128xf32, #tpu.memory_space<vmem>>, vector<8x128xf32>
      tpu.vector_store %arg7[%c0_107, %c0_108], %522 {strides = array<i32>} : memref<8x128xf32, #tpu.memory_space<vmem>>, vector<8x128xf32>,
    } else {
    }
    return
  }
  func.func @transform_0(%arg0: i32) -> (i32, i32, i32) {
    %c0_i32 = arith.constant 0 : i32
    %c0_i32_0 = arith.constant 0 : i32
    %c0_i32_1 = arith.constant 0 : i32
    return %arg0, %c0_i32, %c0_i32_0 : i32, i32, i32
  }
  func.func @transform_1(%arg0: i32) -> (i32, i32) {
    %c0_i32 = arith.constant 0 : i32
    %c0_i32_0 = arith.constant 0 : i32
    %c0_i32_1 = arith.constant 0 : i32
    return %c0_i32, %c0_i32_0 : i32, i32
  }
  func.func @transform_2(%arg0: i32) -> (i32, i32) {
    %c0_i32 = arith.constant 0 : i32
    %c0_i32_0 = arith.constant 0 : i32
    %c0_i32_1 = arith.constant 0 : i32
    return %c0_i32, %c0_i32_0 : i32, i32
  }
  func.func @transform_3(%arg0: i32) -> (i32, i32) {
    %c0_i32 = arith.constant 0 : i32
    %c0_i32_0 = arith.constant 0 : i32
    %c0_i32_1 = arith.constant 0 : i32
    return %c0_i32, %c0_i32_0 : i32, i32
  }
  func.func @transform_4(%arg0: i32) -> (i32, i32) {
    %c0_i32 = arith.constant 0 : i32
    %c0_i32_0 = arith.constant 0 : i32
    %c0_i32_1 = arith.constant 0 : i32
    return %c0_i32, %c0_i32_0 : i32, i32
  }
  func.func @transform_5(%arg0: i32) -> (i32, i32) {
    %c0_i32 = arith.constant 0 : i32
    %c0_i32_0 = arith.constant 0 : i32
    %c0_i32_1 = arith.constant 0 : i32
    return %c0_i32, %c0_i32_0 : i32, i32
  }
  func.func @transform_6(%arg0: i32) -> (i32, i32) {
    %c0_i32 = arith.constant 0 : i32
    %c0_i32_0 = arith.constant 0 : i32
    %c0_i32_1 = arith.constant 0 : i32
    return %c0_i32, %c0_i32_0 : i32, i32
  }
}

</mosaic_0001>

<llo_original>
// kernel: milstm_forward.2
$region0: #{milstm_forward.2}
  #allocation0 [shape = 'u32[]', space=smem, size = 0x4, offset = 0x4, fixed_abs, tag = 'smem constant byte address 0x4 - core index']
  #allocation1 [shape = 'u32[144,128]{1,0:T(1,128)}', space=vmem, size = 0x12000, scoped, tag = 'internal scratch']
  #allocation2 [shape = 'f32[8,128]{1,0:T(8,128)}', space=vmem, size = 0x1000, scoped, tag = 'scratch operand']
  #allocation3 [shape = 'f32[8,128]{1,0:T(8,128)}', space=vmem, size = 0x1000, scoped, tag = 'scratch operand']
  %s0 = inlined_call_operand.vmem [shape: f32[8,8,512], index: 0, kind: input, shape index: {}]
  %s1 = inlined_call_operand.vmem [shape: f32[128,512], index: 1, kind: input, shape index: {}]
  %s2 = inlined_call_operand.vmem [shape: f32[8,8,128], index: 2, kind: output, shape index: {}]
  %s3 = sld [smem:[#allocation0]]
  $region22: #{milstm_forward.2} parent=0
    _
  %s5 = ssub.s32 1, %s3
  %s6 = scalar_select 0, %s5, %s3
  // Predicated region
  $region2: #{milstm_forward.2} parent=0 // pred_check
    _
  $region3: #{milstm_forward.2} parent=0 // pred_check_branch
    %8 = sbr.rel (0) target = $region5
  $region4: #{milstm_forward.2} parent=0 // pred_region
    _
  $region5: #{milstm_forward.2} parent=0 // pred_fallthru
    _
  // Predicated region
  $region6: #{milstm_forward.2} parent=0 // pred_check
    _
  $region7: #{milstm_forward.2} parent=0 // pred_check_branch
    %10 = sbr.rel (0) target = $region9
  $region8: #{milstm_forward.2} parent=0 // pred_region
    _
  $region9: #{milstm_forward.2} parent=0 // pred_fallthru
    _
  %p11 = scmp.eq.s32.totalorder 0, 0
  // Predicated region
  $region10: #{milstm_forward.2} parent=0 // pred_check
    %p12 = pneg %p11
  $region11: #{milstm_forward.2} parent=0 // pred_check_branch
    %14 = sbr.rel (%p12) target = $region13
  $region12: #{milstm_forward.2} parent=0 // pred_region
    %15 = vst [vmem:[#allocation2] sm:$0xff] 0.0
    %16 = vst [vmem:[#allocation3] sm:$0xff] 0.0
  $region13: #{milstm_forward.2} parent=0 // pred_fallthru
    _
  %v17 = vld [vmem:[#allocation2] sm:$0xff]
  %v18 = vld [vmem:[#allocation3] sm:$0xff]
  %v19 = vld [vmem:[%s1] sm:$0xff]
  %v20 = vld [vmem:[%s1 + $0x8] sm:$0xff]
  %v21 = vld [vmem:[%s1 + $0x10] sm:$0xff]
  %v22 = vld [vmem:[%s1 + $0x18] sm:$0xff]
  %v23 = vld [vmem:[%s1 + $0x20] sm:$0xff]
  %v24 = vld [vmem:[%s1 + $0x28] sm:$0xff]
  %v25 = vld [vmem:[%s1 + $0x30] sm:$0xff]
  %v26 = vld [vmem:[%s1 + $0x38] sm:$0xff]
  %v27 = vld [vmem:[%s1 + $0x40] sm:$0xff]
  %v28 = vld [vmem:[%s1 + $0x48] sm:$0xff]
  %v29 = vld [vmem:[%s1 + $0x50] sm:$0xff]
  %v30 = vld [vmem:[%s1 + $0x58] sm:$0xff]
  %v31 = vld [vmem:[%s1 + $0x60] sm:$0xff]
  %v32 = vld [vmem:[%s1 + $0x68] sm:$0xff]
  %v33 = vld [vmem:[%s1 + $0x70] sm:$0xff]
  %v34 = vld [vmem:[%s1 + $0x78] sm:$0xff]
  %v35 = vld [vmem:[%s1 + $0x80] sm:$0xff]
  %v36 = vld [vmem:[%s1 + $0x88] sm:$0xff]
  %v37 = vld [vmem:[%s1 + $0x90] sm:$0xff]
  %v38 = vld [vmem:[%s1 + $0x98] sm:$0xff]
  %v39 = vld [vmem:[%s1 + $0xa0] sm:$0xff]
  %v40 = vld [vmem:[%s1 + $0xa8] sm:$0xff]
  %v41 = vld [vmem:[%s1 + $0xb0] sm:$0xff]
  %v42 = vld [vmem:[%s1 + $0xb8] sm:$0xff]
  %v43 = vld [vmem:[%s1 + $0xc0] sm:$0xff]
  %v44 = vld [vmem:[%s1 + $0xc8] sm:$0xff]
  %v45 = vld [vmem:[%s1 + $0xd0] sm:$0xff]
  %v46 = vld [vmem:[%s1 + $0xd8] sm:$0xff]
  %v47 = vld [vmem:[%s1 + $0xe0] sm:$0xff]
  %v48 = vld [vmem:[%s1 + $0xe8] sm:$0xff]
  %v49 = vld [vmem:[%s1 + $0xf0] sm:$0xff]
  %v50 = vld [vmem:[%s1 + $0xf8] sm:$0xff]
  %v51 = vld [vmem:[%s1 + $0x100] sm:$0xff]
  %v52 = vld [vmem:[%s1 + $0x108] sm:$0xff]
  %v53 = vld [vmem:[%s1 + $0x110] sm:$0xff]
  %v54 = vld [vmem:[%s1 + $0x118] sm:$0xff]
  %v55 = vld [vmem:[%s1 + $0x120] sm:$0xff]
  %v56 = vld [vmem:[%s1 + $0x128] sm:$0xff]
  %v57 = vld [vmem:[%s1 + $0x130] sm:$0xff]
  %v58 = vld [vmem:[%s1 + $0x138] sm:$0xff]
  %v59 = vld [vmem:[%s1 + $0x140] sm:$0xff]
  %v60 = vld [vmem:[%s1 + $0x148] sm:$0xff]
  %v61 = vld [vmem:[%s1 + $0x150] sm:$0xff]
  %v62 = vld [vmem:[%s1 + $0x158] sm:$0xff]
  %v63 = vld [vmem:[%s1 + $0x160] sm:$0xff]
  %v64 = vld [vmem:[%s1 + $0x168] sm:$0xff]
  %v65 = vld [vmem:[%s1 + $0x170] sm:$0xff]
  %v66 = vld [vmem:[%s1 + $0x178] sm:$0xff]
  %v67 = vld [vmem:[%s1 + $0x180] sm:$0xff]
  %v68 = vld [vmem:[%s1 + $0x188] sm:$0xff]
  %v69 = vld [vmem:[%s1 + $0x190] sm:$0xff]
  %v70 = vld [vmem:[%s1 + $0x198] sm:$0xff]
  %v71 = vld [vmem:[%s1 + $0x1a0] sm:$0xff]
  %v72 = vld [vmem:[%s1 + $0x1a8] sm:$0xff]
  %v73 = vld [vmem:[%s1 + $0x1b0] sm:$0xff]
  %v74 = vld [vmem:[%s1 + $0x1b8] sm:$0xff]
  %v75 = vld [vmem:[%s1 + $0x1c0] sm:$0xff]
  %v76 = vld [vmem:[%s1 + $0x1c8] sm:$0xff]
  %v77 = vld [vmem:[%s1 + $0x1d0] sm:$0xff]
  %v78 = vld [vmem:[%s1 + $0x1d8] sm:$0xff]
  %v79 = vld [vmem:[%s1 + $0x1e0] sm:$0xff]
  %v80 = vld [vmem:[%s1 + $0x1e8] sm:$0xff]
  %v81 = vld [vmem:[%s1 + $0x1f0] sm:$0xff]
  %v82 = vld [vmem:[%s1 + $0x1f8] sm:$0xff]
  %v83 = vld [vmem:[%s0] sm:$0xff]
  %v84 = vld [vmem:[%s0 + $0x8] sm:$0xff]
  %v85 = vld [vmem:[%s0 + $0x10] sm:$0xff]
  %v86 = vld [vmem:[%s0 + $0x18] sm:$0xff]
  %87 = vmatprep.subr.mxu0 %v80
  %88 = vmatpush1.msra.mxu0 %v79
  %89 = vmatprep.subr.mxu0 %v76
  %90 = vmatpush1.msra.mxu0 %v75
  %91 = vmatprep.subr.mxu0 %v72
  %92 = vmatpush1.msra.mxu0 %v71
  %93 = vmatprep.subr.mxu0 %v68
  %94 = vmatpush1.msra.mxu0 %v67
  %95 = vmatprep.subr.mxu0 %v64
  %96 = vmatpush1.msra.mxu0 %v63
  %97 = vmatprep.subr.mxu0 %v60
  %98 = vmatpush1.msra.mxu0 %v59
  %99 = vmatprep.subr.mxu0 %v56
  %100 = vmatpush1.msra.mxu0 %v55
  %101 = vmatprep.subr.mxu0 %v52
  %102 = vmatpush1.msra.mxu0 %v51
  %103 = vmatprep.subr.mxu0 %v48
  %104 = vmatpush1.msra.mxu0 %v47
  %105 = vmatprep.subr.mxu0 %v44
  %106 = vmatpush1.msra.mxu0 %v43
  %107 = vmatprep.subr.mxu0 %v40
  %108 = vmatpush1.msra.mxu0 %v39
  %109 = vmatprep.subr.mxu0 %v36
  %110 = vmatpush1.msra.mxu0 %v35
  %111 = vmatprep.subr.mxu0 %v32
  %112 = vmatpush1.msra.mxu0 %v31
  %113 = vmatprep.subr.mxu0 %v28
  %114 = vmatpush1.msra.mxu0 %v27
  %115 = vmatprep.subr.mxu0 %v24
  %116 = vmatpush1.msra.mxu0 %v23
  %117 = vmatprep.subr.mxu0 %v20
  %118 = vmatpush1.msra.mxu0 %v19
  %119 = vmatprep.subr.mxu0 0.0
  %120 = vmatpush2.msra.mxu0 0.0
  %121 = vmatprep.subr.mxu0 0.0
  %122 = vmatpush2.msra.mxu0 0.0
  %123 = vmatprep.subr.mxu0 0.0
  %124 = vmatpush2.msra.mxu0 0.0
  %125 = vmatprep.subr.mxu0 0.0
  %126 = vmatpush2.msra.mxu0 0.0
  %127 = vmatprep.subr.mxu0 0.0
  %128 = vmatpush2.msra.mxu0 0.0
  %129 = vmatprep.subr.mxu0 0.0
  %130 = vmatpush2.msra.mxu0 0.0
  %131 = vmatprep.subr.mxu0 0.0
  %132 = vmatpush2.msra.mxu0 0.0
  %133 = vmatprep.subr.mxu0 0.0
  %134 = vmatpush2.msra.mxu0 0.0
  %135 = vmatprep.subr.mxu0 0.0
  %136 = vmatpush2.msra.mxu0 0.0
  %137 = vmatprep.subr.mxu0 0.0
  %138 = vmatpush2.msra.mxu0 0.0
  %139 = vmatprep.subr.mxu0 0.0
  %140 = vmatpush2.msra.mxu0 0.0
  %141 = vmatprep.subr.mxu0 0.0
  %142 = vmatpush2.msra.mxu0 0.0
  %143 = vmatprep.subr.mxu0 0.0
  %144 = vmatpush2.msra.mxu0 0.0
  %145 = vmatprep.subr.mxu0 0.0
  %146 = vmatpush2.msra.mxu0 0.0
  %147 = vmatprep.subr.mxu0 0.0
  %148 = vmatpush2.msra.mxu0 0.0
  %149 = vmatprep.subr.mxu0 0.0
  %150 = vmatpush2.msra.mxu0 0.0
  %151 = vmatprep.mubr.f32.mxu0 0.0
  %152 = vmatmul.mubr.f32.gmra.mxu0 %v17
  %v153 = vpop.f32.mrf.mxu0
  %v154 = vadd.f32 0.0, %v153
  %v155 = vpop.f32.mrf.mxu0
  %v156 = vadd.f32 0.0, %v155
  %157 = vdwg.mxu0
  %158 = vmatprep.subr.mxu0 %v82
  %159 = vmatpush1.msra.mxu0 %v81
  %160 = vmatprep.subr.mxu0 %v78
  %161 = vmatpush1.msra.mxu0 %v77
  %162 = vmatprep.subr.mxu0 %v74
  %163 = vmatpush1.msra.mxu0 %v73
  %164 = vmatprep.subr.mxu0 %v70
  %165 = vmatpush1.msra.mxu0 %v69
  %166 = vmatprep.subr.mxu0 %v66
  %167 = vmatpush1.msra.mxu0 %v65
  %168 = vmatprep.subr.mxu0 %v62
  %169 = vmatpush1.msra.mxu0 %v61
  %170 = vmatprep.subr.mxu0 %v58
  %171 = vmatpush1.msra.mxu0 %v57
  %172 = vmatprep.subr.mxu0 %v54
  %173 = vmatpush1.msra.mxu0 %v53
  %174 = vmatprep.subr.mxu0 %v50
  %175 = vmatpush1.msra.mxu0 %v49
  %176 = vmatprep.subr.mxu0 %v46
  %177 = vmatpush1.msra.mxu0 %v45
  %178 = vmatprep.subr.mxu0 %v42
  %179 = vmatpush1.msra.mxu0 %v41
  %180 = vmatprep.subr.mxu0 %v38
  %181 = vmatpush1.msra.mxu0 %v37
  %182 = vmatprep.subr.mxu0 %v34
  %183 = vmatpush1.msra.mxu0 %v33
  %184 = vmatprep.subr.mxu0 %v30
  %185 = vmatpush1.msra.mxu0 %v29
  %186 = vmatprep.subr.mxu0 %v26
  %187 = vmatpush1.msra.mxu0 %v25
  %188 = vmatprep.subr.mxu0 %v22
  %189 = vmatpush1.msra.mxu0 %v21
  %190 = vmatprep.subr.mxu0 0.0
  %191 = vmatpush2.msra.mxu0 0.0
  %192 = vmatprep.subr.mxu0 0.0
  %193 = vmatpush2.msra.mxu0 0.0
  %194 = vmatprep.subr.mxu0 0.0
  %195 = vmatpush2.msra.mxu0 0.0
  %196 = vmatprep.subr.mxu0 0.0
  %197 = vmatpush2.msra.mxu0 0.0
  %198 = vmatprep.subr.mxu0 0.0
  %199 = vmatpush2.msra.mxu0 0.0
  %200 = vmatprep.subr.mxu0 0.0
  %201 = vmatpush2.msra.mxu0 0.0
  %202 = vmatprep.subr.mxu0 0.0
  %203 = vmatpush2.msra.mxu0 0.0
  %204 = vmatprep.subr.mxu0 0.0
  %205 = vmatpush2.msra.mxu0 0.0
  %206 = vmatprep.subr.mxu0 0.0
  %207 = vmatpush2.msra.mxu0 0.0
  %208 = vmatprep.subr.mxu0 0.0
  %209 = vmatpush2.msra.mxu0 0.0
  %210 = vmatprep.subr.mxu0 0.0
  %211 = vmatpush2.msra.mxu0 0.0
  %212 = vmatprep.subr.mxu0 0.0
  %213 = vmatpush2.msra.mxu0 0.0
  %214 = vmatprep.subr.mxu0 0.0
  %215 = vmatpush2.msra.mxu0 0.0
  %216 = vmatprep.subr.mxu0 0.0
  %217 = vmatpush2.msra.mxu0 0.0
  %218 = vmatprep.subr.mxu0 0.0
  %219 = vmatpush2.msra.mxu0 0.0
  %220 = vmatprep.subr.mxu0 0.0
  %221 = vmatpush2.msra.mxu0 0.0
  %222 = vmatprep.mubr.f32.mxu0 0.0
  %223 = vmatmul.mubr.f32.gmra.mxu0 %v17
  %v224 = vpop.f32.mrf.mxu0
  %v225 = vadd.f32 0.0, %v224
  %v226 = vpop.f32.mrf.mxu0
  %v227 = vadd.f32 0.0, %v226
  %228 = vdwg.mxu0
  %v229 = vadd.f32 %v83, %v154
  %v230 = vadd.f32 %v84, %v156
  %v231 = vadd.f32 %v85, %v225
  %v232 = vadd.f32 %v86, %v227
  %v233 = vxor.u32 %v229, 2147483648
  %v234 = vmul.f32 %v233, 1.442695
  %v235 = vpow.pop %v234
  %v236 = vadd.f32 %v235, 1.0
  %v237 = vrcp.pop %v236
  %v238 = vmul.f32 1.0, %v237
  %v239 = vxor.u32 %v230, 2147483648
  %v240 = vmul.f32 %v239, 1.442695
  %v241 = vpow.pop %v240
  %v242 = vadd.f32 %v241, 1.0
  %v243 = vrcp.pop %v242
  %v244 = vmul.f32 1.0, %v243
  %v245 = vtanh.pop %v231
  %v246 = vxor.u32 %v232, 2147483648
  %v247 = vmul.f32 %v246, 1.442695
  %v248 = vpow.pop %v247
  %v249 = vadd.f32 %v248, 1.0
  %v250 = vrcp.pop %v249
  %v251 = vmul.f32 1.0, %v250
  %v252 = vmul.f32 %v244, %v18
  %v253 = vmul.f32 %v238, %v245
  %v254 = vadd.f32 %v252, %v253
  %v255 = vtanh.pop %v254
  %v256 = vmul.f32 %v251, %v255
  %257 = vst [vmem:[%s2] sm:$0xff] %v256
  %s258 = scalar_lea.vmem %s0, 32
  %v259 = vld [vmem:[%s258] sm:$0xff]
  %v260 = vld [vmem:[%s258 + $0x8] sm:$0xff]
  %v261 = vld [vmem:[%s258 + $0x10] sm:$0xff]
  %v262 = vld [vmem:[%s258 + $0x18] sm:$0xff]
  %263 = vmatprep.subr.mxu0 %v80
  %264 = vmatpush1.msra.mxu0 %v79
  %265 = vmatprep.subr.mxu0 %v76
  %266 = vmatpush1.msra.mxu0 %v75
  %267 = vmatprep.subr.mxu0 %v72
  %268 = vmatpush1.msra.mxu0 %v71
  %269 = vmatprep.subr.mxu0 %v68
  %270 = vmatpush1.msra.mxu0 %v67
  %271 = vmatprep.subr.mxu0 %v64
  %272 = vmatpush1.msra.mxu0 %v63
  %273 = vmatprep.subr.mxu0 %v60
  %274 = vmatpush1.msra.mxu0 %v59
  %275 = vmatprep.subr.mxu0 %v56
  %276 = vmatpush1.msra.mxu0 %v55
  %277 = vmatprep.subr.mxu0 %v52
  %278 = vmatpush1.msra.mxu0 %v51
  %279 = vmatprep.subr.mxu0 %v48
  %280 = vmatpush1.msra.mxu0 %v47
  %281 = vmatprep.subr.mxu0 %v44
  %282 = vmatpush1.msra.mxu0 %v43
  %283 = vmatprep.subr.mxu0 %v40
  %284 = vmatpush1.msra.mxu0 %v39
  %285 = vmatprep.subr.mxu0 %v36
  %286 = vmatpush1.msra.mxu0 %v35
  %287 = vmatprep.subr.mxu0 %v32
  %288 = vmatpush1.msra.mxu0 %v31
  %289 = vmatprep.subr.mxu0 %v28
  %290 = vmatpush1.msra.mxu0 %v27
  %291 = vmatprep.subr.mxu0 %v24
  %292 = vmatpush1.msra.mxu0 %v23
  %293 = vmatprep.subr.mxu0 %v20
  %294 = vmatpush1.msra.mxu0 %v19
  %295 = vmatprep.subr.mxu0 0.0
  %296 = vmatpush2.msra.mxu0 0.0
  %297 = vmatprep.subr.mxu0 0.0
  %298 = vmatpush2.msra.mxu0 0.0
  %299 = vmatprep.subr.mxu0 0.0
  %300 = vmatpush2.msra.mxu0 0.0
  %301 = vmatprep.subr.mxu0 0.0
  %302 = vmatpush2.msra.mxu0 0.0
  %303 = vmatprep.subr.mxu0 0.0
  %304 = vmatpush2.msra.mxu0 0.0
  %305 = vmatprep.subr.mxu0 0.0
  %306 = vmatpush2.msra.mxu0 0.0
  %307 = vmatprep.subr.mxu0 0.0
  %308 = vmatpush2.msra.mxu0 0.0
  %309 = vmatprep.subr.mxu0 0.0
  %310 = vmatpush2.msra.mxu0 0.0
  %311 = vmatprep.subr.mxu0 0.0
  %312 = vmatpush2.msra.mxu0 0.0
  %313 = vmatprep.subr.mxu0 0.0
  %314 = vmatpush2.msra.mxu0 0.0
  %315 = vmatprep.subr.mxu0 0.0
  %316 = vmatpush2.msra.mxu0 0.0
  %317 = vmatprep.subr.mxu0 0.0
  %318 = vmatpush2.msra.mxu0 0.0
  %319 = vmatprep.subr.mxu0 0.0
  %320 = vmatpush2.msra.mxu0 0.0
  %321 = vmatprep.subr.mxu0 0.0
  %322 = vmatpush2.msra.mxu0 0.0
  %323 = vmatprep.subr.mxu0 0.0
  %324 = vmatpush2.msra.mxu0 0.0
  %325 = vmatprep.subr.mxu0 0.0
  %326 = vmatpush2.msra.mxu0 0.0
  %327 = vmatprep.mubr.f32.mxu0 0.0
  %328 = vmatmul.mubr.f32.gmra.mxu0 %v256
  %v329 = vpop.f32.mrf.mxu0
  %v330 = vadd.f32 0.0, %v329
  %v331 = vpop.f32.mrf.mxu0
  %v332 = vadd.f32 0.0, %v331
  %333 = vdwg.mxu0
  %334 = vmatprep.subr.mxu0 %v82
  %335 = vmatpush1.msra.mxu0 %v81
  %336 = vmatprep.subr.mxu0 %v78
  %337 = vmatpush1.msra.mxu0 %v77
  %338 = vmatprep.subr.mxu0 %v74
  %339 = vmatpush1.msra.mxu0 %v73
  %340 = vmatprep.subr.mxu0 %v70
  %341 = vmatpush1.msra.mxu0 %v69
  %342 = vmatprep.subr.mxu0 %v66
  %343 = vmatpush1.msra.mxu0 %v65
  %344 = vmatprep.subr.mxu0 %v62
  %345 = vmatpush1.msra.mxu0 %v61
  %346 = vmatprep.subr.mxu0 %v58
  %347 = vmatpush1.msra.mxu0 %v57
  %348 = vmatprep.subr.mxu0 %v54
  %349 = vmatpush1.msra.mxu0 %v53
  %350 = vmatprep.subr.mxu0 %v50
  %351 = vmatpush1.msra.mxu0 %v49
  %352 = vmatprep.subr.mxu0 %v46
  %353 = vmatpush1.msra.mxu0 %v45
  %354 = vmatprep.subr.mxu0 %v42
  %355 = vmatpush1.msra.mxu0 %v41
  %356 = vmatprep.subr.mxu0 %v38
  %357 = vmatpush1.msra.mxu0 %v37
  %358 = vmatprep.subr.mxu0 %v34
  %359 = vmatpush1.msra.mxu0 %v33
  %360 = vmatprep.subr.mxu0 %v30
  %361 = vmatpush1.msra.mxu0 %v29
  %362 = vmatprep.subr.mxu0 %v26
  %363 = vmatpush1.msra.mxu0 %v25
  %364 = vmatprep.subr.mxu0 %v22
  %365 = vmatpush1.msra.mxu0 %v21
  %366 = vmatprep.subr.mxu0 0.0
  %367 = vmatpush2.msra.mxu0 0.0
  %368 = vmatprep.subr.mxu0 0.0
  %369 = vmatpush2.msra.mxu0 0.0
  %370 = vmatprep.subr.mxu0 0.0
  %371 = vmatpush2.msra.mxu0 0.0
  %372 = vmatprep.subr.mxu0 0.0
  %373 = vmatpush2.msra.mxu0 0.0
  %374 = vmatprep.subr.mxu0 0.0
  %375 = vmatpush2.msra.mxu0 0.0
  %376 = vmatprep.subr.mxu0 0.0
  %377 = vmatpush2.msra.mxu0 0.0
  %378 = vmatprep.subr.mxu0 0.0
  %379 = vmatpush2.msra.mxu0 0.0
  %380 = vmatprep.subr.mxu0 0.0
  %381 = vmatpush2.msra.mxu0 0.0
  %382 = vmatprep.subr.mxu0 0.0
  %383 = vmatpush2.msra.mxu0 0.0
  %384 = vmatprep.subr.mxu0 0.0
  %385 = vmatpush2.msra.mxu0 0.0
  %386 = vmatprep.subr.mxu0 0.0
  %387 = vmatpush2.msra.mxu0 0.0
  %388 = vmatprep.subr.mxu0 0.0
  %389 = vmatpush2.msra.mxu0 0.0
  %390 = vmatprep.subr.mxu0 0.0
  %391 = vmatpush2.msra.mxu0 0.0
  %392 = vmatprep.subr.mxu0 0.0
  %393 = vmatpush2.msra.mxu0 0.0
  %394 = vmatprep.subr.mxu0 0.0
  %395 = vmatpush2.msra.mxu0 0.0
  %396 = vmatprep.subr.mxu0 0.0
  %397 = vmatpush2.msra.mxu0 0.0
  %398 = vmatprep.mubr.f32.mxu0 0.0
  %399 = vmatmul.mubr.f32.gmra.mxu0 %v256
  %v400 = vpop.f32.mrf.mxu0
  %v401 = vadd.f32 0.0, %v400
  %v402 = vpop.f32.mrf.mxu0
  %v403 = vadd.f32 0.0, %v402
  %404 = vdwg.mxu0
  %v405 = vadd.f32 %v259, %v330
  %v406 = vadd.f32 %v260, %v332
  %v407 = vadd.f32 %v261, %v401
  %v408 = vadd.f32 %v262, %v403
  %v409 = vxor.u32 %v405, 2147483648
  %v410 = vmul.f32 %v409, 1.442695
  %v411 = vpow.pop %v410
  %v412 = vadd.f32 %v411, 1.0
  %v413 = vrcp.pop %v412
  %v414 = vmul.f32 1.0, %v413
  %v415 = vxor.u32 %v406, 2147483648
  %v416 = vmul.f32 %v415, 1.442695
  %v417 = vpow.pop %v416
  %v418 = vadd.f32 %v417, 1.0
  %v419 = vrcp.pop %v418
  %v420 = vmul.f32 1.0, %v419
  %v421 = vtanh.pop %v407
  %v422 = vxor.u32 %v408, 2147483648
  %v423 = vmul.f32 %v422, 1.442695
  %v424 = vpow.pop %v423
  %v425 = vadd.f32 %v424, 1.0
  %v426 = vrcp.pop %v425
  %v427 = vmul.f32 1.0, %v426
  %v428 = vmul.f32 %v420, %v254
  %v429 = vmul.f32 %v414, %v421
  %v430 = vadd.f32 %v428, %v429
  %v431 = vtanh.pop %v430
  %v432 = vmul.f32 %v427, %v431
  %s433 = scalar_lea.vmem %s2, 8
  %434 = vst [vmem:[%s433] sm:$0xff] %v432
  %s435 = scalar_lea.vmem %s0, 64
  %v436 = vld [vmem:[%s435] sm:$0xff]
  %v437 = vld [vmem:[%s435 + $0x8] sm:$0xff]
  %v438 = vld [vmem:[%s435 + $0x10] sm:$0xff]
  %v439 = vld [vmem:[%s435 + $0x18] sm:$0xff]
  %440 = vmatprep.subr.mxu0 %v80
  %441 = vmatpush1.msra.mxu0 %v79
  %442 = vmatprep.subr.mxu0 %v76
  %443 = vmatpush1.msra.mxu0 %v75
  %444 = vmatprep.subr.mxu0 %v72
  %445 = vmatpush1.msra.mxu0 %v71
  %446 = vmatprep.subr.mxu0 %v68
  %447 = vmatpush1.msra.mxu0 %v67
  %448 = vmatprep.subr.mxu0 %v64
  %449 = vmatpush1.msra.mxu0 %v63
  %450 = vmatprep.subr.mxu0 %v60
  %451 = vmatpush1.msra.mxu0 %v59
  %452 = vmatprep.subr.mxu0 %v56
  %453 = vmatpush1.msra.mxu0 %v55
  %454 = vmatprep.subr.mxu0 %v52
  %455 = vmatpush1.msra.mxu0 %v51
  %456 = vmatprep.subr.mxu0 %v48
  %457 = vmatpush1.msra.mxu0 %v47
  %458 = vmatprep.subr.mxu0 %v44
  %459 = vmatpush1.msra.mxu0 %v43
  %460 = vmatprep.subr.mxu0 %v40
  %461 = vmatpush1.msra.mxu0 %v39
  %462 = vmatprep.subr.mxu0 %v36
  %463 = vmatpush1.msra.mxu0 %v35
  %464 = vmatprep.subr.mxu0 %v32
  %465 = vmatpush1.msra.mxu0 %v31
  %466 = vmatprep.subr.mxu0 %v28
  %467 = vmatpush1.msra.mxu0 %v27
  %468 = vmatprep.subr.mxu0 %v24
  %469 = vmatpush1.msra.mxu0 %v23
  %470 = vmatprep.subr.mxu0 %v20
  %471 = vmatpush1.msra.mxu0 %v19
  %472 = vmatprep.subr.mxu0 0.0
  %473 = vmatpush2.msra.mxu0 0.0
  %474 = vmatprep.subr.mxu0 0.0
  %475 = vmatpush2.msra.mxu0 0.0
  %476 = vmatprep.subr.mxu0 0.0
  %477 = vmatpush2.msra.mxu0 0.0
  %478 = vmatprep.subr.mxu0 0.0
  %479 = vmatpush2.msra.mxu0 0.0
  %480 = vmatprep.subr.mxu0 0.0
  %481 = vmatpush2.msra.mxu0 0.0
  %482 = vmatprep.subr.mxu0 0.0
  %483 = vmatpush2.msra.mxu0 0.0
  %484 = vmatprep.subr.mxu0 0.0
  %485 = vmatpush2.msra.mxu0 0.0
  %486 = vmatprep.subr.mxu0 0.0
  %487 = vmatpush2.msra.mxu0 0.0
  %488 = vmatprep.subr.mxu0 0.0
  %489 = vmatpush2.msra.mxu0 0.0
  %490 = vmatprep.subr.mxu0 0.0
  %491 = vmatpush2.msra.mxu0 0.0
  %492 = vmatprep.subr.mxu0 0.0
  %493 = vmatpush2.msra.mxu0 0.0
  %494 = vmatprep.subr.mxu0 0.0
  %495 = vmatpush2.msra.mxu0 0.0
  %496 = vmatprep.subr.mxu0 0.0
  %497 = vmatpush2.msra.mxu0 0.0
  %498 = vmatprep.subr.mxu0 0.0
  %499 = vmatpush2.msra.mxu0 0.0
  %500 = vmatprep.subr.mxu0 0.0
  %501 = vmatpush2.msra.mxu0 0.0
  %502 = vmatprep.subr.mxu0 0.0
  %503 = vmatpush2.msra.mxu0 0.0
  %504 = vmatprep.mubr.f32.mxu0 0.0
  %505 = vmatmul.mubr.f32.gmra.mxu0 %v432
  %v506 = vpop.f32.mrf.mxu0
  %v507 = vadd.f32 0.0, %v506
  %v508 = vpop.f32.mrf.mxu0
  %v509 = vadd.f32 0.0, %v508
  %510 = vdwg.mxu0
  %511 = vmatprep.subr.mxu0 %v82
  %512 = vmatpush1.msra.mxu0 %v81
  %513 = vmatprep.subr.mxu0 %v78
  %514 = vmatpush1.msra.mxu0 %v77
  %515 = vmatprep.subr.mxu0 %v74
  %516 = vmatpush1.msra.mxu0 %v73
  %517 = vmatprep.subr.mxu0 %v70
  %518 = vmatpush1.msra.mxu0 %v69
  %519 = vmatprep.subr.mxu0 %v66
  %520 = vmatpush1.msra.mxu0 %v65
  %521 = vmatprep.subr.mxu0 %v62
  %522 = vmatpush1.msra.mxu0 %v61
  %523 = vmatprep.subr.mxu0 %v58
  %524 = vmatpush1.msra.mxu0 %v57
  %525 = vmatprep.subr.mxu0 %v54
  %526 = vmatpush1.msra.mxu0 %v53
  %527 = vmatprep.subr.mxu0 %v50
  %528 = vmatpush1.msra.mxu0 %v49
  %529 = vmatprep.subr.mxu0 %v46
  %530 = vmatpush1.msra.mxu0 %v45
  %531 = vmatprep.subr.mxu0 %v42
  %532 = vmatpush1.msra.mxu0 %v41
  %533 = vmatprep.subr.mxu0 %v38
  %534 = vmatpush1.msra.mxu0 %v37
  %535 = vmatprep.subr.mxu0 %v34
  %536 = vmatpush1.msra.mxu0 %v33
  %537 = vmatprep.subr.mxu0 %v30
  %538 = vmatpush1.msra.mxu0 %v29
  %539 = vmatprep.subr.mxu0 %v26
  %540 = vmatpush1.msra.mxu0 %v25
  %541 = vmatprep.subr.mxu0 %v22
  %542 = vmatpush1.msra.mxu0 %v21
  %543 = vmatprep.subr.mxu0 0.0
  %544 = vmatpush2.msra.mxu0 0.0
  %545 = vmatprep.subr.mxu0 0.0
  %546 = vmatpush2.msra.mxu0 0.0
  %547 = vmatprep.subr.mxu0 0.0
  %548 = vmatpush2.msra.mxu0 0.0
  %549 = vmatprep.subr.mxu0 0.0
  %550 = vmatpush2.msra.mxu0 0.0
  %551 = vmatprep.subr.mxu0 0.0
  %552 = vmatpush2.msra.mxu0 0.0
  %553 = vmatprep.subr.mxu0 0.0
  %554 = vmatpush2.msra.mxu0 0.0
  %555 = vmatprep.subr.mxu0 0.0
  %556 = vmatpush2.msra.mxu0 0.0
  %557 = vmatprep.subr.mxu0 0.0
  %558 = vmatpush2.msra.mxu0 0.0
  %559 = vmatprep.subr.mxu0 0.0
  %560 = vmatpush2.msra.mxu0 0.0
  %561 = vmatprep.subr.mxu0 0.0
  %562 = vmatpush2.msra.mxu0 0.0
  %563 = vmatprep.subr.mxu0 0.0
  %564 = vmatpush2.msra.mxu0 0.0
  %565 = vmatprep.subr.mxu0 0.0
  %566 = vmatpush2.msra.mxu0 0.0
  %567 = vmatprep.subr.mxu0 0.0
  %568 = vmatpush2.msra.mxu0 0.0
  %569 = vmatprep.subr.mxu0 0.0
  %570 = vmatpush2.msra.mxu0 0.0
  %571 = vmatprep.subr.mxu0 0.0
  %572 = vmatpush2.msra.mxu0 0.0
  %573 = vmatprep.subr.mxu0 0.0
  %574 = vmatpush2.msra.mxu0 0.0
  %575 = vmatprep.mubr.f32.mxu0 0.0
  %576 = vmatmul.mubr.f32.gmra.mxu0 %v432
  %v577 = vpop.f32.mrf.mxu0
  %v578 = vadd.f32 0.0, %v577
  %v579 = vpop.f32.mrf.mxu0
  %v580 = vadd.f32 0.0, %v579
  %581 = vdwg.mxu0
  %v582 = vadd.f32 %v436, %v507
  %v583 = vadd.f32 %v437, %v509
  %v584 = vadd.f32 %v438, %v578
  %v585 = vadd.f32 %v439, %v580
  %v586 = vxor.u32 %v582, 2147483648
  %v587 = vmul.f32 %v586, 1.442695
  %v588 = vpow.pop %v587
  %v589 = vadd.f32 %v588, 1.0
  %v590 = vrcp.pop %v589
  %v591 = vmul.f32 1.0, %v590
  %v592 = vxor.u32 %v583, 2147483648
  %v593 = vmul.f32 %v592, 1.442695
  %v594 = vpow.pop %v593
  %v595 = vadd.f32 %v594, 1.0
  %v596 = vrcp.pop %v595
  %v597 = vmul.f32 1.0, %v596
  %v598 = vtanh.pop %v584
  %v599 = vxor.u32 %v585, 2147483648
  %v600 = vmul.f32 %v599, 1.442695
  %v601 = vpow.pop %v600
  %v602 = vadd.f32 %v601, 1.0
  %v603 = vrcp.pop %v602
  %v604 = vmul.f32 1.0, %v603
  %v605 = vmul.f32 %v597, %v430
  %v606 = vmul.f32 %v591, %v598
  %v607 = vadd.f32 %v605, %v606
  %v608 = vtanh.pop %v607
  %v609 = vmul.f32 %v604, %v608
  %s610 = scalar_lea.vmem %s2, 16
  %611 = vst [vmem:[%s610] sm:$0xff] %v609
  %s612 = scalar_lea.vmem %s0, 96
  %v613 = vld [vmem:[%s612] sm:$0xff]
  %v614 = vld [vmem:[%s612 + $0x8] sm:$0xff]
  %v615 = vld [vmem:[%s612 + $0x10] sm:$0xff]
  %v616 = vld [vmem:[%s612 + $0x18] sm:$0xff]
  %617 = vmatprep.subr.mxu0 %v80
  %618 = vmatpush1.msra.mxu0 %v79
  %619 = vmatprep.subr.mxu0 %v76
  %620 = vmatpush1.msra.mxu0 %v75
  %621 = vmatprep.subr.mxu0 %v72
  %622 = vmatpush1.msra.mxu0 %v71
  %623 = vmatprep.subr.mxu0 %v68
  %624 = vmatpush1.msra.mxu0 %v67
  %625 = vmatprep.subr.mxu0 %v64
  %626 = vmatpush1.msra.mxu0 %v63
  %627 = vmatprep.subr.mxu0 %v60
  %628 = vmatpush1.msra.mxu0 %v59
  %629 = vmatprep.subr.mxu0 %v56
  %630 = vmatpush1.msra.mxu0 %v55
  %631 = vmatprep.subr.mxu0 %v52
  %632 = vmatpush1.msra.mxu0 %v51
  %633 = vmatprep.subr.mxu0 %v48
  %634 = vmatpush1.msra.mxu0 %v47
  %635 = vmatprep.subr.mxu0 %v44
  %636 = vmatpush1.msra.mxu0 %v43
  %637 = vmatprep.subr.mxu0 %v40
  %638 = vmatpush1.msra.mxu0 %v39
  %639 = vmatprep.subr.mxu0 %v36
  %640 = vmatpush1.msra.mxu0 %v35
  %641 = vmatprep.subr.mxu0 %v32
  %642 = vmatpush1.msra.mxu0 %v31
  %643 = vmatprep.subr.mxu0 %v28
  %644 = vmatpush1.msra.mxu0 %v27
  %645 = vmatprep.subr.mxu0 %v24
  %646 = vmatpush1.msra.mxu0 %v23
  %647 = vmatprep.subr.mxu0 %v20
  %648 = vmatpush1.msra.mxu0 %v19
  %649 = vmatprep.subr.mxu0 0.0
  %650 = vmatpush2.msra.mxu0 0.0
  %651 = vmatprep.subr.mxu0 0.0
  %652 = vmatpush2.msra.mxu0 0.0
  %653 = vmatprep.subr.mxu0 0.0
  %654 = vmatpush2.msra.mxu0 0.0
  %655 = vmatprep.subr.mxu0 0.0
  %656 = vmatpush2.msra.mxu0 0.0
  %657 = vmatprep.subr.mxu0 0.0
  %658 = vmatpush2.msra.mxu0 0.0
  %659 = vmatprep.subr.mxu0 0.0
  %660 = vmatpush2.msra.mxu0 0.0
  %661 = vmatprep.subr.mxu0 0.0
  %662 = vmatpush2.msra.mxu0 0.0
  %663 = vmatprep.subr.mxu0 0.0
  %664 = vmatpush2.msra.mxu0 0.0
  %665 = vmatprep.subr.mxu0 0.0
  %666 = vmatpush2.msra.mxu0 0.0
  %667 = vmatprep.subr.mxu0 0.0
  %668 = vmatpush2.msra.mxu0 0.0
  %669 = vmatprep.subr.mxu0 0.0
  %670 = vmatpush2.msra.mxu0 0.0
  %671 = vmatprep.subr.mxu0 0.0
  %672 = vmatpush2.msra.mxu0 0.0
  %673 = vmatprep.subr.mxu0 0.0
  %674 = vmatpush2.msra.mxu0 0.0
  %675 = vmatprep.subr.mxu0 0.0
  %676 = vmatpush2.msra.mxu0 0.0
  %677 = vmatprep.subr.mxu0 0.0
  %678 = vmatpush2.msra.mxu0 0.0
  %679 = vmatprep.subr.mxu0 0.0
  %680 = vmatpush2.msra.mxu0 0.0
  %681 = vmatprep.mubr.f32.mxu0 0.0
  %682 = vmatmul.mubr.f32.gmra.mxu0 %v609
  %v683 = vpop.f32.mrf.mxu0
  %v684 = vadd.f32 0.0, %v683
  %v685 = vpop.f32.mrf.mxu0
  %v686 = vadd.f32 0.0, %v685
  %687 = vdwg.mxu0
  %688 = vmatprep.subr.mxu0 %v82
  %689 = vmatpush1.msra.mxu0 %v81
  %690 = vmatprep.subr.mxu0 %v78
  %691 = vmatpush1.msra.mxu0 %v77
  %692 = vmatprep.subr.mxu0 %v74
  %693 = vmatpush1.msra.mxu0 %v73
  %694 = vmatprep.subr.mxu0 %v70
  %695 = vmatpush1.msra.mxu0 %v69
  %696 = vmatprep.subr.mxu0 %v66
  %697 = vmatpush1.msra.mxu0 %v65
  %698 = vmatprep.subr.mxu0 %v62
  %699 = vmatpush1.msra.mxu0 %v61
  %700 = vmatprep.subr.mxu0 %v58
  %701 = vmatpush1.msra.mxu0 %v57
  %702 = vmatprep.subr.mxu0 %v54
  %703 = vmatpush1.msra.mxu0 %v53
  %704 = vmatprep.subr.mxu0 %v50
  %705 = vmatpush1.msra.mxu0 %v49
  %706 = vmatprep.subr.mxu0 %v46
  %707 = vmatpush1.msra.mxu0 %v45
  %708 = vmatprep.subr.mxu0 %v42
  %709 = vmatpush1.msra.mxu0 %v41
  %710 = vmatprep.subr.mxu0 %v38
  %711 = vmatpush1.msra.mxu0 %v37
  %712 = vmatprep.subr.mxu0 %v34
  %713 = vmatpush1.msra.mxu0 %v33
  %714 = vmatprep.subr.mxu0 %v30
  %715 = vmatpush1.msra.mxu0 %v29
  %716 = vmatprep.subr.mxu0 %v26
  %717 = vmatpush1.msra.mxu0 %v25
  %718 = vmatprep.subr.mxu0 %v22
  %719 = vmatpush1.msra.mxu0 %v21
  %720 = vmatprep.subr.mxu0 0.0
  %721 = vmatpush2.msra.mxu0 0.0
  %722 = vmatprep.subr.mxu0 0.0
  %723 = vmatpush2.msra.mxu0 0.0
  %724 = vmatprep.subr.mxu0 0.0
  %725 = vmatpush2.msra.mxu0 0.0
  %726 = vmatprep.subr.mxu0 0.0
  %727 = vmatpush2.msra.mxu0 0.0
  %728 = vmatprep.subr.mxu0 0.0
  %729 = vmatpush2.msra.mxu0 0.0
  %730 = vmatprep.subr.mxu0 0.0
  %731 = vmatpush2.msra.mxu0 0.0
  %732 = vmatprep.subr.mxu0 0.0
  %733 = vmatpush2.msra.mxu0 0.0
  %734 = vmatprep.subr.mxu0 0.0
  %735 = vmatpush2.msra.mxu0 0.0
  %736 = vmatprep.subr.mxu0 0.0
  %737 = vmatpush2.msra.mxu0 0.0
  %738 = vmatprep.subr.mxu0 0.0
  %739 = vmatpush2.msra.mxu0 0.0
  %740 = vmatprep.subr.mxu0 0.0
  %741 = vmatpush2.msra.mxu0 0.0
  %742 = vmatprep.subr.mxu0 0.0
  %743 = vmatpush2.msra.mxu0 0.0
  %744 = vmatprep.subr.mxu0 0.0
  %745 = vmatpush2.msra.mxu0 0.0
  %746 = vmatprep.subr.mxu0 0.0
  %747 = vmatpush2.msra.mxu0 0.0
  %748 = vmatprep.subr.mxu0 0.0
  %749 = vmatpush2.msra.mxu0 0.0
  %750 = vmatprep.subr.mxu0 0.0
  %751 = vmatpush2.msra.mxu0 0.0
  %752 = vmatprep.mubr.f32.mxu0 0.0
  %753 = vmatmul.mubr.f32.gmra.mxu0 %v609
  %v754 = vpop.f32.mrf.mxu0
  %v755 = vadd.f32 0.0, %v754
  %v756 = vpop.f32.mrf.mxu0
  %v757 = vadd.f32 0.0, %v756
  %758 = vdwg.mxu0
  %v759 = vadd.f32 %v613, %v684
  %v760 = vadd.f32 %v614, %v686
  %v761 = vadd.f32 %v615, %v755
  %v762 = vadd.f32 %v616, %v757
  %v763 = vxor.u32 %v759, 2147483648
  %v764 = vmul.f32 %v763, 1.442695
  %v765 = vpow.pop %v764
  %v766 = vadd.f32 %v765, 1.0
  %v767 = vrcp.pop %v766
  %v768 = vmul.f32 1.0, %v767
  %v769 = vxor.u32 %v760, 2147483648
  %v770 = vmul.f32 %v769, 1.442695
  %v771 = vpow.pop %v770
  %v772 = vadd.f32 %v771, 1.0
  %v773 = vrcp.pop %v772
  %v774 = vmul.f32 1.0, %v773
  %v775 = vtanh.pop %v761
  %v776 = vxor.u32 %v762, 2147483648
  %v777 = vmul.f32 %v776, 1.442695
  %v778 = vpow.pop %v777
  %v779 = vadd.f32 %v778, 1.0
  %v780 = vrcp.pop %v779
  %v781 = vmul.f32 1.0, %v780
  %v782 = vmul.f32 %v774, %v607
  %v783 = vmul.f32 %v768, %v775
  %v784 = vadd.f32 %v782, %v783
  %v785 = vtanh.pop %v784
  %v786 = vmul.f32 %v781, %v785
  %s787 = scalar_lea.vmem %s2, 24
  %788 = vst [vmem:[%s787] sm:$0xff] %v786
  %s789 = scalar_lea.vmem %s0, 128
  %v790 = vld [vmem:[%s789] sm:$0xff]
  %v791 = vld [vmem:[%s789 + $0x8] sm:$0xff]
  %v792 = vld [vmem:[%s789 + $0x10] sm:$0xff]
  %v793 = vld [vmem:[%s789 + $0x18] sm:$0xff]
  %794 = vmatprep.subr.mxu0 %v80
  %795 = vmatpush1.msra.mxu0 %v79
  %796 = vmatprep.subr.mxu0 %v76
  %797 = vmatpush1.msra.mxu0 %v75
  %798 = vmatprep.subr.mxu0 %v72
  %799 = vmatpush1.msra.mxu0 %v71
  %800 = vmatprep.subr.mxu0 %v68
  %801 = vmatpush1.msra.mxu0 %v67
  %802 = vmatprep.subr.mxu0 %v64
  %803 = vmatpush1.msra.mxu0 %v63
  %804 = vmatprep.subr.mxu0 %v60
  %805 = vmatpush1.msra.mxu0 %v59
  %806 = vmatprep.subr.mxu0 %v56
  %807 = vmatpush1.msra.mxu0 %v55
  %808 = vmatprep.subr.mxu0 %v52
  %809 = vmatpush1.msra.mxu0 %v51
  %810 = vmatprep.subr.mxu0 %v48
  %811 = vmatpush1.msra.mxu0 %v47
  %812 = vmatprep.subr.mxu0 %v44
  %813 = vmatpush1.msra.mxu0 %v43
  %814 = vmatprep.subr.mxu0 %v40
  %815 = vmatpush1.msra.mxu0 %v39
  %816 = vmatprep.subr.mxu0 %v36
  %817 = vmatpush1.msra.mxu0 %v35
  %818 = vmatprep.subr.mxu0 %v32
  %819 = vmatpush1.msra.mxu0 %v31
  %820 = vmatprep.subr.mxu0 %v28
  %821 = vmatpush1.msra.mxu0 %v27
  %822 = vmatprep.subr.mxu0 %v24
  %823 = vmatpush1.msra.mxu0 %v23
  %824 = vmatprep.subr.mxu0 %v20
  %825 = vmatpush1.msra.mxu0 %v19
  %826 = vmatprep.subr.mxu0 0.0
  %827 = vmatpush2.msra.mxu0 0.0
  %828 = vmatprep.subr.mxu0 0.0
  %829 = vmatpush2.msra.mxu0 0.0
  %830 = vmatprep.subr.mxu0 0.0
  %831 = vmatpush2.msra.mxu0 0.0
  %832 = vmatprep.subr.mxu0 0.0
  %833 = vmatpush2.msra.mxu0 0.0
  %834 = vmatprep.subr.mxu0 0.0
  %835 = vmatpush2.msra.mxu0 0.0
  %836 = vmatprep.subr.mxu0 0.0
  %837 = vmatpush2.msra.mxu0 0.0
  %838 = vmatprep.subr.mxu0 0.0
  %839 = vmatpush2.msra.mxu0 0.0
  %840 = vmatprep.subr.mxu0 0.0
  %841 = vmatpush2.msra.mxu0 0.0
  %842 = vmatprep.subr.mxu0 0.0
  %843 = vmatpush2.msra.mxu0 0.0
  %844 = vmatprep.subr.mxu0 0.0
  %845 = vmatpush2.msra.mxu0 0.0
  %846 = vmatprep.subr.mxu0 0.0
  %847 = vmatpush2.msra.mxu0 0.0
  %848 = vmatprep.subr.mxu0 0.0
  %849 = vmatpush2.msra.mxu0 0.0
  %850 = vmatprep.subr.mxu0 0.0
  %851 = vmatpush2.msra.mxu0 0.0
  %852 = vmatprep.subr.mxu0 0.0
  %853 = vmatpush2.msra.mxu0 0.0
  %854 = vmatprep.subr.mxu0 0.0
  %855 = vmatpush2.msra.mxu0 0.0
  %856 = vmatprep.subr.mxu0 0.0
  %857 = vmatpush2.msra.mxu0 0.0
  %858 = vmatprep.mubr.f32.mxu0 0.0
  %859 = vmatmul.mubr.f32.gmra.mxu0 %v786
  %v860 = vpop.f32.mrf.mxu0
  %v861 = vadd.f32 0.0, %v860
  %v862 = vpop.f32.mrf.mxu0
  %v863 = vadd.f32 0.0, %v862
  %864 = vdwg.mxu0
  %865 = vmatprep.subr.mxu0 %v82
  %866 = vmatpush1.msra.mxu0 %v81
  %867 = vmatprep.subr.mxu0 %v78
  %868 = vmatpush1.msra.mxu0 %v77
  %869 = vmatprep.subr.mxu0 %v74
  %870 = vmatpush1.msra.mxu0 %v73
  %871 = vmatprep.subr.mxu0 %v70
  %872 = vmatpush1.msra.mxu0 %v69
  %873 = vmatprep.subr.mxu0 %v66
  %874 = vmatpush1.msra.mxu0 %v65
  %875 = vmatprep.subr.mxu0 %v62
  %876 = vmatpush1.msra.mxu0 %v61
  %877 = vmatprep.subr.mxu0 %v58
  %878 = vmatpush1.msra.mxu0 %v57
  %879 = vmatprep.subr.mxu0 %v54
  %880 = vmatpush1.msra.mxu0 %v53
  %881 = vmatprep.subr.mxu0 %v50
  %882 = vmatpush1.msra.mxu0 %v49
  %883 = vmatprep.subr.mxu0 %v46
  %884 = vmatpush1.msra.mxu0 %v45
  %885 = vmatprep.subr.mxu0 %v42
  %886 = vmatpush1.msra.mxu0 %v41
  %887 = vmatprep.subr.mxu0 %v38
  %888 = vmatpush1.msra.mxu0 %v37
  %889 = vmatprep.subr.mxu0 %v34
  %890 = vmatpush1.msra.mxu0 %v33
  %891 = vmatprep.subr.mxu0 %v30
  %892 = vmatpush1.msra.mxu0 %v29
  %893 = vmatprep.subr.mxu0 %v26
  %894 = vmatpush1.msra.mxu0 %v25
  %895 = vmatprep.subr.mxu0 %v22
  %896 = vmatpush1.msra.mxu0 %v21
  %897 = vmatprep.subr.mxu0 0.0
  %898 = vmatpush2.msra.mxu0 0.0
  %899 = vmatprep.subr.mxu0 0.0
  %900 = vmatpush2.msra.mxu0 0.0
  %901 = vmatprep.subr.mxu0 0.0
  %902 = vmatpush2.msra.mxu0 0.0
  %903 = vmatprep.subr.mxu0 0.0
  %904 = vmatpush2.msra.mxu0 0.0
  %905 = vmatprep.subr.mxu0 0.0
  %906 = vmatpush2.msra.mxu0 0.0
  %907 = vmatprep.subr.mxu0 0.0
  %908 = vmatpush2.msra.mxu0 0.0
  %909 = vmatprep.subr.mxu0 0.0
  %910 = vmatpush2.msra.mxu0 0.0
  %911 = vmatprep.subr.mxu0 0.0
  %912 = vmatpush2.msra.mxu0 0.0
  %913 = vmatprep.subr.mxu0 0.0
  %914 = vmatpush2.msra.mxu0 0.0
  %915 = vmatprep.subr.mxu0 0.0
  %916 = vmatpush2.msra.mxu0 0.0
  %917 = vmatprep.subr.mxu0 0.0
  %918 = vmatpush2.msra.mxu0 0.0
  %919 = vmatprep.subr.mxu0 0.0
  %920 = vmatpush2.msra.mxu0 0.0
  %921 = vmatprep.subr.mxu0 0.0
  %922 = vmatpush2.msra.mxu0 0.0
  %923 = vmatprep.subr.mxu0 0.0
  %924 = vmatpush2.msra.mxu0 0.0
  %925 = vmatprep.subr.mxu0 0.0
  %926 = vmatpush2.msra.mxu0 0.0
  %927 = vmatprep.subr.mxu0 0.0
  %928 = vmatpush2.msra.mxu0 0.0
  %929 = vmatprep.mubr.f32.mxu0 0.0
  %930 = vmatmul.mubr.f32.gmra.mxu0 %v786
  %v931 = vpop.f32.mrf.mxu0
  %v932 = vadd.f32 0.0, %v931
  %v933 = vpop.f32.mrf.mxu0
  %v934 = vadd.f32 0.0, %v933
  %935 = vdwg.mxu0
  %v936 = vadd.f32 %v790, %v861
  %v937 = vadd.f32 %v791, %v863
  %v938 = vadd.f32 %v792, %v932
  %v939 = vadd.f32 %v793, %v934
  %v940 = vxor.u32 %v936, 2147483648
  %v941 = vmul.f32 %v940, 1.442695
  %v942 = vpow.pop %v941
  %v943 = vadd.f32 %v942, 1.0
  %v944 = vrcp.pop %v943
  %v945 = vmul.f32 1.0, %v944
  %v946 = vxor.u32 %v937, 2147483648
  %v947 = vmul.f32 %v946, 1.442695
  %v948 = vpow.pop %v947
  %v949 = vadd.f32 %v948, 1.0
  %v950 = vrcp.pop %v949
  %v951 = vmul.f32 1.0, %v950
  %v952 = vtanh.pop %v938
  %v953 = vxor.u32 %v939, 2147483648
  %v954 = vmul.f32 %v953, 1.442695
  %v955 = vpow.pop %v954
  %v956 = vadd.f32 %v955, 1.0
  %v957 = vrcp.pop %v956
  %v958 = vmul.f32 1.0, %v957
  %v959 = vmul.f32 %v951, %v784
  %v960 = vmul.f32 %v945, %v952
  %v961 = vadd.f32 %v959, %v960
  %v962 = vtanh.pop %v961
  %v963 = vmul.f32 %v958, %v962
  %s964 = scalar_lea.vmem %s2, 32
  %965 = vst [vmem:[%s964] sm:$0xff] %v963
  %s966 = scalar_lea.vmem %s0, 160
  %v967 = vld [vmem:[%s966] sm:$0xff]
  %v968 = vld [vmem:[%s966 + $0x8] sm:$0xff]
  %v969 = vld [vmem:[%s966 + $0x10] sm:$0xff]
  %v970 = vld [vmem:[%s966 + $0x18] sm:$0xff]
  %971 = vmatprep.subr.mxu0 %v80
  %972 = vmatpush1.msra.mxu0 %v79
  %973 = vmatprep.subr.mxu0 %v76
  %974 = vmatpush1.msra.mxu0 %v75
  %975 = vmatprep.subr.mxu0 %v72
  %976 = vmatpush1.msra.mxu0 %v71
  %977 = vmatprep.subr.mxu0 %v68
  %978 = vmatpush1.msra.mxu0 %v67
  %979 = vmatprep.subr.mxu0 %v64
  %980 = vmatpush1.msra.mxu0 %v63
  %981 = vmatprep.subr.mxu0 %v60
  %982 = vmatpush1.msra.mxu0 %v59
  %983 = vmatprep.subr.mxu0 %v56
  %984 = vmatpush1.msra.mxu0 %v55
  %985 = vmatprep.subr.mxu0 %v52
  %986 = vmatpush1.msra.mxu0 %v51
  %987 = vmatprep.subr.mxu0 %v48
  %988 = vmatpush1.msra.mxu0 %v47
  %989 = vmatprep.subr.mxu0 %v44
  %990 = vmatpush1.msra.mxu0 %v43
  %991 = vmatprep.subr.mxu0 %v40
  %992 = vmatpush1.msra.mxu0 %v39
  %993 = vmatprep.subr.mxu0 %v36
  %994 = vmatpush1.msra.mxu0 %v35
  %995 = vmatprep.subr.mxu0 %v32
  %996 = vmatpush1.msra.mxu0 %v31
  %997 = vmatprep.subr.mxu0 %v28
  %998 = vmatpush1.msra.mxu0 %v27
  %999 = vmatprep.subr.mxu0 %v24
  %1000 = vmatpush1.msra.mxu0 %v23
  %1001 = vmatprep.subr.mxu0 %v20
  %1002 = vmatpush1.msra.mxu0 %v19
  %1003 = vmatprep.subr.mxu0 0.0
  %1004 = vmatpush2.msra.mxu0 0.0
  %1005 = vmatprep.subr.mxu0 0.0
  %1006 = vmatpush2.msra.mxu0 0.0
  %1007 = vmatprep.subr.mxu0 0.0
  %1008 = vmatpush2.msra.mxu0 0.0
  %1009 = vmatprep.subr.mxu0 0.0
  %1010 = vmatpush2.msra.mxu0 0.0
  %1011 = vmatprep.subr.mxu0 0.0
  %1012 = vmatpush2.msra.mxu0 0.0
  %1013 = vmatprep.subr.mxu0 0.0
  %1014 = vmatpush2.msra.mxu0 0.0
  %1015 = vmatprep.subr.mxu0 0.0
  %1016 = vmatpush2.msra.mxu0 0.0
  %1017 = vmatprep.subr.mxu0 0.0
  %1018 = vmatpush2.msra.mxu0 0.0
  %1019 = vmatprep.subr.mxu0 0.0
  %1020 = vmatpush2.msra.mxu0 0.0
  %1021 = vmatprep.subr.mxu0 0.0
  %1022 = vmatpush2.msra.mxu0 0.0
  %1023 = vmatprep.subr.mxu0 0.0
  %1024 = vmatpush2.msra.mxu0 0.0
  %1025 = vmatprep.subr.mxu0 0.0
  %1026 = vmatpush2.msra.mxu0 0.0
  %1027 = vmatprep.subr.mxu0 0.0
  %1028 = vmatpush2.msra.mxu0 0.0
  %1029 = vmatprep.subr.mxu0 0.0
  %1030 = vmatpush2.msra.mxu0 0.0
  %1031 = vmatprep.subr.mxu0 0.0
  %1032 = vmatpush2.msra.mxu0 0.0
  %1033 = vmatprep.subr.mxu0 0.0
  %1034 = vmatpush2.msra.mxu0 0.0
  %1035 = vmatprep.mubr.f32.mxu0 0.0
  %1036 = vmatmul.mubr.f32.gmra.mxu0 %v963
  %v1037 = vpop.f32.mrf.mxu0
  %v1038 = vadd.f32 0.0, %v1037
  %v1039 = vpop.f32.mrf.mxu0
  %v1040 = vadd.f32 0.0, %v1039
  %1041 = vdwg.mxu0
  %1042 = vmatprep.subr.mxu0 %v82
  %1043 = vmatpush1.msra.mxu0 %v81
  %1044 = vmatprep.subr.mxu0 %v78
  %1045 = vmatpush1.msra.mxu0 %v77
  %1046 = vmatprep.subr.mxu0 %v74
  %1047 = vmatpush1.msra.mxu0 %v73
  %1048 = vmatprep.subr.mxu0 %v70
  %1049 = vmatpush1.msra.mxu0 %v69
  %1050 = vmatprep.subr.mxu0 %v66
  %1051 = vmatpush1.msra.mxu0 %v65
  %1052 = vmatprep.subr.mxu0 %v62
  %1053 = vmatpush1.msra.mxu0 %v61
  %1054 = vmatprep.subr.mxu0 %v58
  %1055 = vmatpush1.msra.mxu0 %v57
  %1056 = vmatprep.subr.mxu0 %v54
  %1057 = vmatpush1.msra.mxu0 %v53
  %1058 = vmatprep.subr.mxu0 %v50
  %1059 = vmatpush1.msra.mxu0 %v49
  %1060 = vmatprep.subr.mxu0 %v46
  %1061 = vmatpush1.msra.mxu0 %v45
  %1062 = vmatprep.subr.mxu0 %v42
  %1063 = vmatpush1.msra.mxu0 %v41
  %1064 = vmatprep.subr.mxu0 %v38
  %1065 = vmatpush1.msra.mxu0 %v37
  %1066 = vmatprep.subr.mxu0 %v34
  %1067 = vmatpush1.msra.mxu0 %v33
  %1068 = vmatprep.subr.mxu0 %v30
  %1069 = vmatpush1.msra.mxu0 %v29
  %1070 = vmatprep.subr.mxu0 %v26
  %1071 = vmatpush1.msra.mxu0 %v25
  %1072 = vmatprep.subr.mxu0 %v22
  %1073 = vmatpush1.msra.mxu0 %v21
  %1074 = vmatprep.subr.mxu0 0.0
  %1075 = vmatpush2.msra.mxu0 0.0
  %1076 = vmatprep.subr.mxu0 0.0
  %1077 = vmatpush2.msra.mxu0 0.0
  %1078 = vmatprep.subr.mxu0 0.0
  %1079 = vmatpush2.msra.mxu0 0.0
  %1080 = vmatprep.subr.mxu0 0.0
  %1081 = vmatpush2.msra.mxu0 0.0
  %1082 = vmatprep.subr.mxu0 0.0
  %1083 = vmatpush2.msra.mxu0 0.0
  %1084 = vmatprep.subr.mxu0 0.0
  %1085 = vmatpush2.msra.mxu0 0.0
  %1086 = vmatprep.subr.mxu0 0.0
  %1087 = vmatpush2.msra.mxu0 0.0
  %1088 = vmatprep.subr.mxu0 0.0
  %1089 = vmatpush2.msra.mxu0 0.0
  %1090 = vmatprep.subr.mxu0 0.0
  %1091 = vmatpush2.msra.mxu0 0.0
  %1092 = vmatprep.subr.mxu0 0.0
  %1093 = vmatpush2.msra.mxu0 0.0
  %1094 = vmatprep.subr.mxu0 0.0
  %1095 = vmatpush2.msra.mxu0 0.0
  %1096 = vmatprep.subr.mxu0 0.0
  %1097 = vmatpush2.msra.mxu0 0.0
  %1098 = vmatprep.subr.mxu0 0.0
  %1099 = vmatpush2.msra.mxu0 0.0
  %1100 = vmatprep.subr.mxu0 0.0
  %1101 = vmatpush2.msra.mxu0 0.0
  %1102 = vmatprep.subr.mxu0 0.0
  %1103 = vmatpush2.msra.mxu0 0.0
  %1104 = vmatprep.subr.mxu0 0.0
  %1105 = vmatpush2.msra.mxu0 0.0
  %1106 = vmatprep.mubr.f32.mxu0 0.0
  %1107 = vmatmul.mubr.f32.gmra.mxu0 %v963
  %v1108 = vpop.f32.mrf.mxu0
  %v1109 = vadd.f32 0.0, %v1108
  %v1110 = vpop.f32.mrf.mxu0
  %v1111 = vadd.f32 0.0, %v1110
  %1112 = vdwg.mxu0
  %v1113 = vadd.f32 %v967, %v1038
  %v1114 = vadd.f32 %v968, %v1040
  %v1115 = vadd.f32 %v969, %v1109
  %v1116 = vadd.f32 %v970, %v1111
  %v1117 = vxor.u32 %v1113, 2147483648
  %v1118 = vmul.f32 %v1117, 1.442695
  %v1119 = vpow.pop %v1118
  %v1120 = vadd.f32 %v1119, 1.0
  %v1121 = vrcp.pop %v1120
  %v1122 = vmul.f32 1.0, %v1121
  %v1123 = vxor.u32 %v1114, 2147483648
  %v1124 = vmul.f32 %v1123, 1.442695
  %v1125 = vpow.pop %v1124
  %v1126 = vadd.f32 %v1125, 1.0
  %v1127 = vrcp.pop %v1126
  %v1128 = vmul.f32 1.0, %v1127
  %v1129 = vtanh.pop %v1115
  %v1130 = vxor.u32 %v1116, 2147483648
  %v1131 = vmul.f32 %v1130, 1.442695
  %v1132 = vpow.pop %v1131
  %v1133 = vadd.f32 %v1132, 1.0
  %v1134 = vrcp.pop %v1133
  %v1135 = vmul.f32 1.0, %v1134
  %v1136 = vmul.f32 %v1128, %v961
  %v1137 = vmul.f32 %v1122, %v1129
  %v1138 = vadd.f32 %v1136, %v1137
  %v1139 = vtanh.pop %v1138
  %v1140 = vmul.f32 %v1135, %v1139
  %s1141 = scalar_lea.vmem %s2, 40
  %1142 = vst [vmem:[%s1141] sm:$0xff] %v1140
  %s1143 = scalar_lea.vmem %s0, 192
  %v1144 = vld [vmem:[%s1143] sm:$0xff]
  %v1145 = vld [vmem:[%s1143 + $0x8] sm:$0xff]
  %v1146 = vld [vmem:[%s1143 + $0x10] sm:$0xff]
  %v1147 = vld [vmem:[%s1143 + $0x18] sm:$0xff]
  %1148 = vmatprep.subr.mxu0 %v80
  %1149 = vmatpush1.msra.mxu0 %v79
  %1150 = vmatprep.subr.mxu0 %v76
  %1151 = vmatpush1.msra.mxu0 %v75
  %1152 = vmatprep.subr.mxu0 %v72
  %1153 = vmatpush1.msra.mxu0 %v71
  %1154 = vmatprep.subr.mxu0 %v68
  %1155 = vmatpush1.msra.mxu0 %v67
  %1156 = vmatprep.subr.mxu0 %v64
  %1157 = vmatpush1.msra.mxu0 %v63
  %1158 = vmatprep.subr.mxu0 %v60
  %1159 = vmatpush1.msra.mxu0 %v59
  %1160 = vmatprep.subr.mxu0 %v56
  %1161 = vmatpush1.msra.mxu0 %v55
  %1162 = vmatprep.subr.mxu0 %v52
  %1163 = vmatpush1.msra.mxu0 %v51
  %1164 = vmatprep.subr.mxu0 %v48
  %1165 = vmatpush1.msra.mxu0 %v47
  %1166 = vmatprep.subr.mxu0 %v44
  %1167 = vmatpush1.msra.mxu0 %v43
  %1168 = vmatprep.subr.mxu0 %v40
  %1169 = vmatpush1.msra.mxu0 %v39
  %1170 = vmatprep.subr.mxu0 %v36
  %1171 = vmatpush1.msra.mxu0 %v35
  %1172 = vmatprep.subr.mxu0 %v32
  %1173 = vmatpush1.msra.mxu0 %v31
  %1174 = vmatprep.subr.mxu0 %v28
  %1175 = vmatpush1.msra.mxu0 %v27
  %1176 = vmatprep.subr.mxu0 %v24
  %1177 = vmatpush1.msra.mxu0 %v23
  %1178 = vmatprep.subr.mxu0 %v20
  %1179 = vmatpush1.msra.mxu0 %v19
  %1180 = vmatprep.subr.mxu0 0.0
  %1181 = vmatpush2.msra.mxu0 0.0
  %1182 = vmatprep.subr.mxu0 0.0
  %1183 = vmatpush2.msra.mxu0 0.0
  %1184 = vmatprep.subr.mxu0 0.0
  %1185 = vmatpush2.msra.mxu0 0.0
  %1186 = vmatprep.subr.mxu0 0.0
  %1187 = vmatpush2.msra.mxu0 0.0
  %1188 = vmatprep.subr.mxu0 0.0
  %1189 = vmatpush2.msra.mxu0 0.0
  %1190 = vmatprep.subr.mxu0 0.0
  %1191 = vmatpush2.msra.mxu0 0.0
  %1192 = vmatprep.subr.mxu0 0.0
  %1193 = vmatpush2.msra.mxu0 0.0
  %1194 = vmatprep.subr.mxu0 0.0
  %1195 = vmatpush2.msra.mxu0 0.0
  %1196 = vmatprep.subr.mxu0 0.0
  %1197 = vmatpush2.msra.mxu0 0.0
  %1198 = vmatprep.subr.mxu0 0.0
  %1199 = vmatpush2.msra.mxu0 0.0
  %1200 = vmatprep.subr.mxu0 0.0
  %1201 = vmatpush2.msra.mxu0 0.0
  %1202 = vmatprep.subr.mxu0 0.0
  %1203 = vmatpush2.msra.mxu0 0.0
  %1204 = vmatprep.subr.mxu0 0.0
  %1205 = vmatpush2.msra.mxu0 0.0
  %1206 = vmatprep.subr.mxu0 0.0
  %1207 = vmatpush2.msra.mxu0 0.0
  %1208 = vmatprep.subr.mxu0 0.0
  %1209 = vmatpush2.msra.mxu0 0.0
  %1210 = vmatprep.subr.mxu0 0.0
  %1211 = vmatpush2.msra.mxu0 0.0
  %1212 = vmatprep.mubr.f32.mxu0 0.0
  %1213 = vmatmul.mubr.f32.gmra.mxu0 %v1140
  %v1214 = vpop.f32.mrf.mxu0
  %v1215 = vadd.f32 0.0, %v1214
  %v1216 = vpop.f32.mrf.mxu0
  %v1217 = vadd.f32 0.0, %v1216
  %1218 = vdwg.mxu0
  %1219 = vmatprep.subr.mxu0 %v82
  %1220 = vmatpush1.msra.mxu0 %v81
  %1221 = vmatprep.subr.mxu0 %v78
  %1222 = vmatpush1.msra.mxu0 %v77
  %1223 = vmatprep.subr.mxu0 %v74
  %1224 = vmatpush1.msra.mxu0 %v73
  %1225 = vmatprep.subr.mxu0 %v70
  %1226 = vmatpush1.msra.mxu0 %v69
  %1227 = vmatprep.subr.mxu0 %v66
  %1228 = vmatpush1.msra.mxu0 %v65
  %1229 = vmatprep.subr.mxu0 %v62
  %1230 = vmatpush1.msra.mxu0 %v61
  %1231 = vmatprep.subr.mxu0 %v58
  %1232 = vmatpush1.msra.mxu0 %v57
  %1233 = vmatprep.subr.mxu0 %v54
  %1234 = vmatpush1.msra.mxu0 %v53
  %1235 = vmatprep.subr.mxu0 %v50
  %1236 = vmatpush1.msra.mxu0 %v49
  %1237 = vmatprep.subr.mxu0 %v46
  %1238 = vmatpush1.msra.mxu0 %v45
  %1239 = vmatprep.subr.mxu0 %v42
  %1240 = vmatpush1.msra.mxu0 %v41
  %1241 = vmatprep.subr.mxu0 %v38
  %1242 = vmatpush1.msra.mxu0 %v37
  %1243 = vmatprep.subr.mxu0 %v34
  %1244 = vmatpush1.msra.mxu0 %v33
  %1245 = vmatprep.subr.mxu0 %v30
  %1246 = vmatpush1.msra.mxu0 %v29
  %1247 = vmatprep.subr.mxu0 %v26
  %1248 = vmatpush1.msra.mxu0 %v25
  %1249 = vmatprep.subr.mxu0 %v22
  %1250 = vmatpush1.msra.mxu0 %v21
  %1251 = vmatprep.subr.mxu0 0.0
  %1252 = vmatpush2.msra.mxu0 0.0
  %1253 = vmatprep.subr.mxu0 0.0
  %1254 = vmatpush2.msra.mxu0 0.0
  %1255 = vmatprep.subr.mxu0 0.0
  %1256 = vmatpush2.msra.mxu0 0.0
  %1257 = vmatprep.subr.mxu0 0.0
  %1258 = vmatpush2.msra.mxu0 0.0
  %1259 = vmatprep.subr.mxu0 0.0
  %1260 = vmatpush2.msra.mxu0 0.0
  %1261 = vmatprep.subr.mxu0 0.0
  %1262 = vmatpush2.msra.mxu0 0.0
  %1263 = vmatprep.subr.mxu0 0.0
  %1264 = vmatpush2.msra.mxu0 0.0
  %1265 = vmatprep.subr.mxu0 0.0
  %1266 = vmatpush2.msra.mxu0 0.0
  %1267 = vmatprep.subr.mxu0 0.0
  %1268 = vmatpush2.msra.mxu0 0.0
  %1269 = vmatprep.subr.mxu0 0.0
  %1270 = vmatpush2.msra.mxu0 0.0
  %1271 = vmatprep.subr.mxu0 0.0
  %1272 = vmatpush2.msra.mxu0 0.0
  %1273 = vmatprep.subr.mxu0 0.0
  %1274 = vmatpush2.msra.mxu0 0.0
  %1275 = vmatprep.subr.mxu0 0.0
  %1276 = vmatpush2.msra.mxu0 0.0
  %1277 = vmatprep.subr.mxu0 0.0
  %1278 = vmatpush2.msra.mxu0 0.0
  %1279 = vmatprep.subr.mxu0 0.0
  %1280 = vmatpush2.msra.mxu0 0.0
  %1281 = vmatprep.subr.mxu0 0.0
  %1282 = vmatpush2.msra.mxu0 0.0
  %1283 = vmatprep.mubr.f32.mxu0 0.0
  %1284 = vmatmul.mubr.f32.gmra.mxu0 %v1140
  %v1285 = vpop.f32.mrf.mxu0
  %v1286 = vadd.f32 0.0, %v1285
  %v1287 = vpop.f32.mrf.mxu0
  %v1288 = vadd.f32 0.0, %v1287
  %1289 = vdwg.mxu0
  %v1290 = vadd.f32 %v1144, %v1215
  %v1291 = vadd.f32 %v1145, %v1217
  %v1292 = vadd.f32 %v1146, %v1286
  %v1293 = vadd.f32 %v1147, %v1288
  %v1294 = vxor.u32 %v1290, 2147483648
  %v1295 = vmul.f32 %v1294, 1.442695
  %v1296 = vpow.pop %v1295
  %v1297 = vadd.f32 %v1296, 1.0
  %v1298 = vrcp.pop %v1297
  %v1299 = vmul.f32 1.0, %v1298
  %v1300 = vxor.u32 %v1291, 2147483648
  %v1301 = vmul.f32 %v1300, 1.442695
  %v1302 = vpow.pop %v1301
  %v1303 = vadd.f32 %v1302, 1.0
  %v1304 = vrcp.pop %v1303
  %v1305 = vmul.f32 1.0, %v1304
  %v1306 = vtanh.pop %v1292
  %v1307 = vxor.u32 %v1293, 2147483648
  %v1308 = vmul.f32 %v1307, 1.442695
  %v1309 = vpow.pop %v1308
  %v1310 = vadd.f32 %v1309, 1.0
  %v1311 = vrcp.pop %v1310
  %v1312 = vmul.f32 1.0, %v1311
  %v1313 = vmul.f32 %v1305, %v1138
  %v1314 = vmul.f32 %v1299, %v1306
  %v1315 = vadd.f32 %v1313, %v1314
  %v1316 = vtanh.pop %v1315
  %v1317 = vmul.f32 %v1312, %v1316
  %s1318 = scalar_lea.vmem %s2, 48
  %1319 = vst [vmem:[%s1318] sm:$0xff] %v1317
  %s1320 = scalar_lea.vmem %s0, 224
  %v1321 = vld [vmem:[%s1320] sm:$0xff]
  %v1322 = vld [vmem:[%s1320 + $0x8] sm:$0xff]
  %v1323 = vld [vmem:[%s1320 + $0x10] sm:$0xff]
  %v1324 = vld [vmem:[%s1320 + $0x18] sm:$0xff]
  %1325 = vmatprep.subr.mxu0 %v80
  %1326 = vmatpush1.msra.mxu0 %v79
  %1327 = vmatprep.subr.mxu0 %v76
  %1328 = vmatpush1.msra.mxu0 %v75
  %1329 = vmatprep.subr.mxu0 %v72
  %1330 = vmatpush1.msra.mxu0 %v71
  %1331 = vmatprep.subr.mxu0 %v68
  %1332 = vmatpush1.msra.mxu0 %v67
  %1333 = vmatprep.subr.mxu0 %v64
  %1334 = vmatpush1.msra.mxu0 %v63
  %1335 = vmatprep.subr.mxu0 %v60
  %1336 = vmatpush1.msra.mxu0 %v59
  %1337 = vmatprep.subr.mxu0 %v56
  %1338 = vmatpush1.msra.mxu0 %v55
  %1339 = vmatprep.subr.mxu0 %v52
  %1340 = vmatpush1.msra.mxu0 %v51
  %1341 = vmatprep.subr.mxu0 %v48
  %1342 = vmatpush1.msra.mxu0 %v47
  %1343 = vmatprep.subr.mxu0 %v44
  %1344 = vmatpush1.msra.mxu0 %v43
  %1345 = vmatprep.subr.mxu0 %v40
  %1346 = vmatpush1.msra.mxu0 %v39
  %1347 = vmatprep.subr.mxu0 %v36
  %1348 = vmatpush1.msra.mxu0 %v35
  %1349 = vmatprep.subr.mxu0 %v32
  %1350 = vmatpush1.msra.mxu0 %v31
  %1351 = vmatprep.subr.mxu0 %v28
  %1352 = vmatpush1.msra.mxu0 %v27
  %1353 = vmatprep.subr.mxu0 %v24
  %1354 = vmatpush1.msra.mxu0 %v23
  %1355 = vmatprep.subr.mxu0 %v20
  %1356 = vmatpush1.msra.mxu0 %v19
  %1357 = vmatprep.subr.mxu0 0.0
  %1358 = vmatpush2.msra.mxu0 0.0
  %1359 = vmatprep.subr.mxu0 0.0
  %1360 = vmatpush2.msra.mxu0 0.0
  %1361 = vmatprep.subr.mxu0 0.0
  %1362 = vmatpush2.msra.mxu0 0.0
  %1363 = vmatprep.subr.mxu0 0.0
  %1364 = vmatpush2.msra.mxu0 0.0
  %1365 = vmatprep.subr.mxu0 0.0
  %1366 = vmatpush2.msra.mxu0 0.0
  %1367 = vmatprep.subr.mxu0 0.0
  %1368 = vmatpush2.msra.mxu0 0.0
  %1369 = vmatprep.subr.mxu0 0.0
  %1370 = vmatpush2.msra.mxu0 0.0
  %1371 = vmatprep.subr.mxu0 0.0
  %1372 = vmatpush2.msra.mxu0 0.0
  %1373 = vmatprep.subr.mxu0 0.0
  %1374 = vmatpush2.msra.mxu0 0.0
  %1375 = vmatprep.subr.mxu0 0.0
  %1376 = vmatpush2.msra.mxu0 0.0
  %1377 = vmatprep.subr.mxu0 0.0
  %1378 = vmatpush2.msra.mxu0 0.0
  %1379 = vmatprep.subr.mxu0 0.0
  %1380 = vmatpush2.msra.mxu0 0.0
  %1381 = vmatprep.subr.mxu0 0.0
  %1382 = vmatpush2.msra.mxu0 0.0
  %1383 = vmatprep.subr.mxu0 0.0
  %1384 = vmatpush2.msra.mxu0 0.0
  %1385 = vmatprep.subr.mxu0 0.0
  %1386 = vmatpush2.msra.mxu0 0.0
  %1387 = vmatprep.subr.mxu0 0.0
  %1388 = vmatpush2.msra.mxu0 0.0
  %1389 = vmatprep.mubr.f32.mxu0 0.0
  %1390 = vmatmul.mubr.f32.gmra.mxu0 %v1317
  %v1391 = vpop.f32.mrf.mxu0
  %v1392 = vadd.f32 0.0, %v1391
  %v1393 = vpop.f32.mrf.mxu0
  %v1394 = vadd.f32 0.0, %v1393
  %1395 = vdwg.mxu0
  %1396 = vmatprep.subr.mxu0 %v82
  %1397 = vmatpush1.msra.mxu0 %v81
  %1398 = vmatprep.subr.mxu0 %v78
  %1399 = vmatpush1.msra.mxu0 %v77
  %1400 = vmatprep.subr.mxu0 %v74
  %1401 = vmatpush1.msra.mxu0 %v73
  %1402 = vmatprep.subr.mxu0 %v70
  %1403 = vmatpush1.msra.mxu0 %v69
  %1404 = vmatprep.subr.mxu0 %v66
  %1405 = vmatpush1.msra.mxu0 %v65
  %1406 = vmatprep.subr.mxu0 %v62
  %1407 = vmatpush1.msra.mxu0 %v61
  %1408 = vmatprep.subr.mxu0 %v58
  %1409 = vmatpush1.msra.mxu0 %v57
  %1410 = vmatprep.subr.mxu0 %v54
  %1411 = vmatpush1.msra.mxu0 %v53
  %1412 = vmatprep.subr.mxu0 %v50
  %1413 = vmatpush1.msra.mxu0 %v49
  %1414 = vmatprep.subr.mxu0 %v46
  %1415 = vmatpush1.msra.mxu0 %v45
  %1416 = vmatprep.subr.mxu0 %v42
  %1417 = vmatpush1.msra.mxu0 %v41
  %1418 = vmatprep.subr.mxu0 %v38
  %1419 = vmatpush1.msra.mxu0 %v37
  %1420 = vmatprep.subr.mxu0 %v34
  %1421 = vmatpush1.msra.mxu0 %v33
  %1422 = vmatprep.subr.mxu0 %v30
  %1423 = vmatpush1.msra.mxu0 %v29
  %1424 = vmatprep.subr.mxu0 %v26
  %1425 = vmatpush1.msra.mxu0 %v25
  %1426 = vmatprep.subr.mxu0 %v22
  %1427 = vmatpush1.msra.mxu0 %v21
  %1428 = vmatprep.subr.mxu0 0.0
  %1429 = vmatpush2.msra.mxu0 0.0
  %1430 = vmatprep.subr.mxu0 0.0
  %1431 = vmatpush2.msra.mxu0 0.0
  %1432 = vmatprep.subr.mxu0 0.0
  %1433 = vmatpush2.msra.mxu0 0.0
  %1434 = vmatprep.subr.mxu0 0.0
  %1435 = vmatpush2.msra.mxu0 0.0
  %1436 = vmatprep.subr.mxu0 0.0
  %1437 = vmatpush2.msra.mxu0 0.0
  %1438 = vmatprep.subr.mxu0 0.0
  %1439 = vmatpush2.msra.mxu0 0.0
  %1440 = vmatprep.subr.mxu0 0.0
  %1441 = vmatpush2.msra.mxu0 0.0
  %1442 = vmatprep.subr.mxu0 0.0
  %1443 = vmatpush2.msra.mxu0 0.0
  %1444 = vmatprep.subr.mxu0 0.0
  %1445 = vmatpush2.msra.mxu0 0.0
  %1446 = vmatprep.subr.mxu0 0.0
  %1447 = vmatpush2.msra.mxu0 0.0
  %1448 = vmatprep.subr.mxu0 0.0
  %1449 = vmatpush2.msra.mxu0 0.0
  %1450 = vmatprep.subr.mxu0 0.0
  %1451 = vmatpush2.msra.mxu0 0.0
  %1452 = vmatprep.subr.mxu0 0.0
  %1453 = vmatpush2.msra.mxu0 0.0
  %1454 = vmatprep.subr.mxu0 0.0
  %1455 = vmatpush2.msra.mxu0 0.0
  %1456 = vmatprep.subr.mxu0 0.0
  %1457 = vmatpush2.msra.mxu0 0.0
  %1458 = vmatprep.subr.mxu0 0.0
  %1459 = vmatpush2.msra.mxu0 0.0
  %1460 = vmatprep.mubr.f32.mxu0 0.0
  %1461 = vmatmul.mubr.f32.gmra.mxu0 %v1317
  %v1462 = vpop.f32.mrf.mxu0
  %v1463 = vadd.f32 0.0, %v1462
  %v1464 = vpop.f32.mrf.mxu0
  %v1465 = vadd.f32 0.0, %v1464
  %1466 = vdwg.mxu0
  %v1467 = vadd.f32 %v1321, %v1392
  %v1468 = vadd.f32 %v1322, %v1394
  %v1469 = vadd.f32 %v1323, %v1463
  %v1470 = vadd.f32 %v1324, %v1465
  %v1471 = vxor.u32 %v1467, 2147483648
  %v1472 = vmul.f32 %v1471, 1.442695
  %v1473 = vpow.pop %v1472
  %v1474 = vadd.f32 %v1473, 1.0
  %v1475 = vrcp.pop %v1474
  %v1476 = vmul.f32 1.0, %v1475
  %v1477 = vxor.u32 %v1468, 2147483648
  %v1478 = vmul.f32 %v1477, 1.442695
  %v1479 = vpow.pop %v1478
  %v1480 = vadd.f32 %v1479, 1.0
  %v1481 = vrcp.pop %v1480
  %v1482 = vmul.f32 1.0, %v1481
  %v1483 = vtanh.pop %v1469
  %v1484 = vxor.u32 %v1470, 2147483648
  %v1485 = vmul.f32 %v1484, 1.442695
  %v1486 = vpow.pop %v1485
  %v1487 = vadd.f32 %v1486, 1.0
  %v1488 = vrcp.pop %v1487
  %v1489 = vmul.f32 1.0, %v1488
  %v1490 = vmul.f32 %v1482, %v1315
  %v1491 = vmul.f32 %v1476, %v1483
  %v1492 = vadd.f32 %v1490, %v1491
  %v1493 = vtanh.pop %v1492
  %v1494 = vmul.f32 %v1489, %v1493
  %s1495 = scalar_lea.vmem %s2, 56
  %1496 = vst [vmem:[%s1495] sm:$0xff] %v1494
  %1497 = vst [vmem:[#allocation2] sm:$0xff] %v1494
  %1498 = vst [vmem:[#allocation3] sm:$0xff] %v1492
  // Predicated region
  $region14: #{milstm_forward.2} parent=0 // pred_check
    _
  $region15: #{milstm_forward.2} parent=0 // pred_check_branch
    %1500 = sbr.rel (0) target = $region17
  $region16: #{milstm_forward.2} parent=0 // pred_region
    _
  $region17: #{milstm_forward.2} parent=0 // pred_fallthru
    _
  // Predicated region
  $region18: #{milstm_forward.2} parent=0 // pred_check
    _
  $region19: #{milstm_forward.2} parent=0 // pred_check_branch
    %1502 = sbr.rel (0) target = $region21
  $region20: #{milstm_forward.2} parent=0 // pred_region
    _
  $region21: #{milstm_forward.2} parent=0 // pred_fallthru
    _

// kernel: milstm_forward.3
$region0: #{milstm_forward.3}
  #allocation0 [shape = 'u32[]', space=smem, size = 0x4, offset = 0x4, fixed_abs, tag = 'smem constant byte address 0x4 - core index']
  #allocation1 [shape = 'u32[144,128]{1,0:T(1,128)}', space=vmem, size = 0x12000, scoped, tag = 'internal scratch']
  #allocation2 [shape = 'f32[8,128]{1,0:T(8,128)}', space=vmem, size = 0x1000, scoped, tag = 'scratch operand']
  #allocation3 [shape = 'f32[8,128]{1,0:T(8,128)}', space=vmem, size = 0x1000, scoped, tag = 'scratch operand']
  #allocation4 [shape = 'f32[8,128]{1,0:T(8,128)}', space=vmem, size = 0x1000, scoped, tag = 'scratch operand']
  #allocation5 [shape = 'f32[1,1]{1,0:T(1,128)S(6)}', space=smem, size = 0x200, scoped, tag = 'scoped memory for milstm_forward.3']
  %s0 = inlined_call_operand.vmem [shape: f32[8,8,768], index: 0, kind: input, shape index: {}]
  %s1 = inlined_call_operand.vmem [shape: f32[128,768], index: 1, kind: input, shape index: {}]
  %s2 = inlined_call_operand.vmem [shape: f32[1,128], index: 2, kind: input, shape index: {}]
  %s3 = inlined_call_operand.<no memory space> [shape: f32[1,1], index: 3, kind: input, shape index: {}]
  %s4 = inlined_call_operand.vmem [shape: f32[128,128], index: 4, kind: input, shape index: {}]
  %s5 = inlined_call_operand.vmem [shape: f32[1,128], index: 5, kind: input, shape index: {}]
  %s6 = inlined_call_operand.vmem [shape: f32[8,128], index: 6, kind: output, shape index: {}]
  %s7 = sld [smem:[#allocation0]]
  $region50: #{milstm_forward.3} parent=0
    _
  %s9 = ssub.s32 1, %s7
  %s10 = scalar_select 0, %s9, %s7
  %11 = sst [smem:[#allocation5]] %s3
  // Predicated region
  $region2: #{milstm_forward.3} parent=0 // pred_check
    _
  $region3: #{milstm_forward.3} parent=0 // pred_check_branch
    %13 = sbr.rel (0) target = $region5
  $region4: #{milstm_forward.3} parent=0 // pred_region
    _
  $region5: #{milstm_forward.3} parent=0 // pred_fallthru
    _
  // Predicated region
  $region6: #{milstm_forward.3} parent=0 // pred_check
    _
  $region7: #{milstm_forward.3} parent=0 // pred_check_branch
    %15 = sbr.rel (0) target = $region9
  $region8: #{milstm_forward.3} parent=0 // pred_region
    _
  $region9: #{milstm_forward.3} parent=0 // pred_fallthru
    _
  // Predicated region
  $region10: #{milstm_forward.3} parent=0 // pred_check
    _
  $region11: #{milstm_forward.3} parent=0 // pred_check_branch
    %17 = sbr.rel (0) target = $region13
  $region12: #{milstm_forward.3} parent=0 // pred_region
    _
  $region13: #{milstm_forward.3} parent=0 // pred_fallthru
    _
  // Predicated region
  $region14: #{milstm_forward.3} parent=0 // pred_check
    _
  $region15: #{milstm_forward.3} parent=0 // pred_check_branch
    %19 = sbr.rel (0) target = $region17
  $region16: #{milstm_forward.3} parent=0 // pred_region
    _
  $region17: #{milstm_forward.3} parent=0 // pred_fallthru
    _
  // Predicated region
  $region18: #{milstm_forward.3} parent=0 // pred_check
    _
  $region19: #{milstm_forward.3} parent=0 // pred_check_branch
    %21 = sbr.rel (0) target = $region21
  $region20: #{milstm_forward.3} parent=0 // pred_region
    _
  $region21: #{milstm_forward.3} parent=0 // pred_fallthru
    _
  // Predicated region
  $region22: #{milstm_forward.3} parent=0 // pred_check
    _
  $region23: #{milstm_forward.3} parent=0 // pred_check_branch
    %23 = sbr.rel (0) target = $region25
  $region24: #{milstm_forward.3} parent=0 // pred_region
    _
  $region25: #{milstm_forward.3} parent=0 // pred_fallthru
    _
  %p24 = scmp.eq.s32.totalorder 0, 0
  // Predicated region
  $region26: #{milstm_forward.3} parent=0 // pred_check
    %p25 = pneg %p24
  $region27: #{milstm_forward.3} parent=0 // pred_check_branch
    %27 = sbr.rel (%p25) target = $region29
  $region28: #{milstm_forward.3} parent=0 // pred_region
    %28 = vst [vmem:[#allocation2] sm:$0xff] 0.0
    %29 = vst [vmem:[#allocation3] sm:$0xff] 0.0
    %30 = vst [vmem:[#allocation4] sm:$0xff] 0.0
  $region29: #{milstm_forward.3} parent=0 // pred_fallthru
    _
  %v31 = vld [vmem:[#allocation2] sm:$0xff]
  %v32 = vld [vmem:[#allocation3] sm:$0xff]
  %v33 = vld [vmem:[%s1] sm:$0xff]
  %v34 = vld [vmem:[%s1 + $0x8] sm:$0xff]
  %v35 = vld [vmem:[%s1 + $0x10] sm:$0xff]
  %v36 = vld [vmem:[%s1 + $0x18] sm:$0xff]
  %v37 = vld [vmem:[%s1 + $0x20] sm:$0xff]
  %v38 = vld [vmem:[%s1 + $0x28] sm:$0xff]
  %v39 = vld [vmem:[%s1 + $0x30] sm:$0xff]
  %v40 = vld [vmem:[%s1 + $0x38] sm:$0xff]
  %v41 = vld [vmem:[%s1 + $0x40] sm:$0xff]
  %v42 = vld [vmem:[%s1 + $0x48] sm:$0xff]
  %v43 = vld [vmem:[%s1 + $0x50] sm:$0xff]
  %v44 = vld [vmem:[%s1 + $0x58] sm:$0xff]
  %v45 = vld [vmem:[%s1 + $0x60] sm:$0xff]
  %v46 = vld [vmem:[%s1 + $0x68] sm:$0xff]
  %v47 = vld [vmem:[%s1 + $0x70] sm:$0xff]
  %v48 = vld [vmem:[%s1 + $0x78] sm:$0xff]
  %v49 = vld [vmem:[%s1 + $0x80] sm:$0xff]
  %v50 = vld [vmem:[%s1 + $0x88] sm:$0xff]
  %v51 = vld [vmem:[%s1 + $0x90] sm:$0xff]
  %v52 = vld [vmem:[%s1 + $0x98] sm:$0xff]
  %v53 = vld [vmem:[%s1 + $0xa0] sm:$0xff]
  %v54 = vld [vmem:[%s1 + $0xa8] sm:$0xff]
  %v55 = vld [vmem:[%s1 + $0xb0] sm:$0xff]
  %v56 = vld [vmem:[%s1 + $0xb8] sm:$0xff]
  %v57 = vld [vmem:[%s1 + $0xc0] sm:$0xff]
  %v58 = vld [vmem:[%s1 + $0xc8] sm:$0xff]
  %v59 = vld [vmem:[%s1 + $0xd0] sm:$0xff]
  %v60 = vld [vmem:[%s1 + $0xd8] sm:$0xff]
  %v61 = vld [vmem:[%s1 + $0xe0] sm:$0xff]
  %v62 = vld [vmem:[%s1 + $0xe8] sm:$0xff]
  %v63 = vld [vmem:[%s1 + $0xf0] sm:$0xff]
  %v64 = vld [vmem:[%s1 + $0xf8] sm:$0xff]
  %v65 = vld [vmem:[%s1 + $0x100] sm:$0xff]
  %v66 = vld [vmem:[%s1 + $0x108] sm:$0xff]
  %v67 = vld [vmem:[%s1 + $0x110] sm:$0xff]
  %v68 = vld [vmem:[%s1 + $0x118] sm:$0xff]
  %v69 = vld [vmem:[%s1 + $0x120] sm:$0xff]
  %v70 = vld [vmem:[%s1 + $0x128] sm:$0xff]
  %v71 = vld [vmem:[%s1 + $0x130] sm:$0xff]
  %v72 = vld [vmem:[%s1 + $0x138] sm:$0xff]
  %v73 = vld [vmem:[%s1 + $0x140] sm:$0xff]
  %v74 = vld [vmem:[%s1 + $0x148] sm:$0xff]
  %v75 = vld [vmem:[%s1 + $0x150] sm:$0xff]
  %v76 = vld [vmem:[%s1 + $0x158] sm:$0xff]
  %v77 = vld [vmem:[%s1 + $0x160] sm:$0xff]
  %v78 = vld [vmem:[%s1 + $0x168] sm:$0xff]
  %v79 = vld [vmem:[%s1 + $0x170] sm:$0xff]
  %v80 = vld [vmem:[%s1 + $0x178] sm:$0xff]
  %v81 = vld [vmem:[%s1 + $0x180] sm:$0xff]
  %v82 = vld [vmem:[%s1 + $0x188] sm:$0xff]
  %v83 = vld [vmem:[%s1 + $0x190] sm:$0xff]
  %v84 = vld [vmem:[%s1 + $0x198] sm:$0xff]
  %v85 = vld [vmem:[%s1 + $0x1a0] sm:$0xff]
  %v86 = vld [vmem:[%s1 + $0x1a8] sm:$0xff]
  %v87 = vld [vmem:[%s1 + $0x1b0] sm:$0xff]
  %v88 = vld [vmem:[%s1 + $0x1b8] sm:$0xff]
  %v89 = vld [vmem:[%s1 + $0x1c0] sm:$0xff]
  %v90 = vld [vmem:[%s1 + $0x1c8] sm:$0xff]
  %v91 = vld [vmem:[%s1 + $0x1d0] sm:$0xff]
  %v92 = vld [vmem:[%s1 + $0x1d8] sm:$0xff]
  %v93 = vld [vmem:[%s1 + $0x1e0] sm:$0xff]
  %v94 = vld [vmem:[%s1 + $0x1e8] sm:$0xff]
  %v95 = vld [vmem:[%s1 + $0x1f0] sm:$0xff]
  %v96 = vld [vmem:[%s1 + $0x1f8] sm:$0xff]
  %v97 = vld [vmem:[%s1 + $0x200] sm:$0xff]
  %v98 = vld [vmem:[%s1 + $0x208] sm:$0xff]
  %v99 = vld [vmem:[%s1 + $0x210] sm:$0xff]
  %v100 = vld [vmem:[%s1 + $0x218] sm:$0xff]
  %v101 = vld [vmem:[%s1 + $0x220] sm:$0xff]
  %v102 = vld [vmem:[%s1 + $0x228] sm:$0xff]
  %v103 = vld [vmem:[%s1 + $0x230] sm:$0xff]
  %v104 = vld [vmem:[%s1 + $0x238] sm:$0xff]
  %v105 = vld [vmem:[%s1 + $0x240] sm:$0xff]
  %v106 = vld [vmem:[%s1 + $0x248] sm:$0xff]
  %v107 = vld [vmem:[%s1 + $0x250] sm:$0xff]
  %v108 = vld [vmem:[%s1 + $0x258] sm:$0xff]
  %v109 = vld [vmem:[%s1 + $0x260] sm:$0xff]
  %v110 = vld [vmem:[%s1 + $0x268] sm:$0xff]
  %v111 = vld [vmem:[%s1 + $0x270] sm:$0xff]
  %v112 = vld [vmem:[%s1 + $0x278] sm:$0xff]
  %v113 = vld [vmem:[%s1 + $0x280] sm:$0xff]
  %v114 = vld [vmem:[%s1 + $0x288] sm:$0xff]
  %v115 = vld [vmem:[%s1 + $0x290] sm:$0xff]
  %v116 = vld [vmem:[%s1 + $0x298] sm:$0xff]
  %v117 = vld [vmem:[%s1 + $0x2a0] sm:$0xff]
  %v118 = vld [vmem:[%s1 + $0x2a8] sm:$0xff]
  %v119 = vld [vmem:[%s1 + $0x2b0] sm:$0xff]
  %v120 = vld [vmem:[%s1 + $0x2b8] sm:$0xff]
  %v121 = vld [vmem:[%s1 + $0x2c0] sm:$0xff]
  %v122 = vld [vmem:[%s1 + $0x2c8] sm:$0xff]
  %v123 = vld [vmem:[%s1 + $0x2d0] sm:$0xff]
  %v124 = vld [vmem:[%s1 + $0x2d8] sm:$0xff]
  %v125 = vld [vmem:[%s1 + $0x2e0] sm:$0xff]
  %v126 = vld [vmem:[%s1 + $0x2e8] sm:$0xff]
  %v127 = vld [vmem:[%s1 + $0x2f0] sm:$0xff]
  %v128 = vld [vmem:[%s1 + $0x2f8] sm:$0xff]
  %v129 = vld [vmem:[%s2] sm:$0x1]
  %s130 = sld [smem:[#allocation5]]
  %v131 = vld [vmem:[%s0] sm:$0xff]
  %v132 = vld [vmem:[%s0 + $0x8] sm:$0xff]
  %v133 = vld [vmem:[%s0 + $0x10] sm:$0xff]
  %v134 = vld [vmem:[%s0 + $0x18] sm:$0xff]
  %v135 = vld [vmem:[%s0 + $0x20] sm:$0xff]
  %v136 = vld [vmem:[%s0 + $0x28] sm:$0xff]
  %137 = vmatprep.subr.mxu0 %v124
  %138 = vmatpush1.msra.mxu0 %v123
  %139 = vmatprep.subr.mxu0 %v118
  %140 = vmatpush1.msra.mxu0 %v117
  %141 = vmatprep.subr.mxu0 %v112
  %142 = vmatpush1.msra.mxu0 %v111
  %143 = vmatprep.subr.mxu0 %v106
  %144 = vmatpush1.msra.mxu0 %v105
  %145 = vmatprep.subr.mxu0 %v100
  %146 = vmatpush1.msra.mxu0 %v99
  %147 = vmatprep.subr.mxu0 %v94
  %148 = vmatpush1.msra.mxu0 %v93
  %149 = vmatprep.subr.mxu0 %v88
  %150 = vmatpush1.msra.mxu0 %v87
  %151 = vmatprep.subr.mxu0 %v82
  %152 = vmatpush1.msra.mxu0 %v81
  %153 = vmatprep.subr.mxu0 %v76
  %154 = vmatpush1.msra.mxu0 %v75
  %155 = vmatprep.subr.mxu0 %v70
  %156 = vmatpush1.msra.mxu0 %v69
  %157 = vmatprep.subr.mxu0 %v64
  %158 = vmatpush1.msra.mxu0 %v63
  %159 = vmatprep.subr.mxu0 %v58
  %160 = vmatpush1.msra.mxu0 %v57
  %161 = vmatprep.subr.mxu0 %v52
  %162 = vmatpush1.msra.mxu0 %v51
  %163 = vmatprep.subr.mxu0 %v46
  %164 = vmatpush1.msra.mxu0 %v45
  %165 = vmatprep.subr.mxu0 %v40
  %166 = vmatpush1.msra.mxu0 %v39
  %167 = vmatprep.subr.mxu0 %v34
  %168 = vmatpush1.msra.mxu0 %v33
  %169 = vmatprep.subr.mxu0 0.0
  %170 = vmatpush2.msra.mxu0 0.0
  %171 = vmatprep.subr.mxu0 0.0
  %172 = vmatpush2.msra.mxu0 0.0
  %173 = vmatprep.subr.mxu0 0.0
  %174 = vmatpush2.msra.mxu0 0.0
  %175 = vmatprep.subr.mxu0 0.0
  %176 = vmatpush2.msra.mxu0 0.0
  %177 = vmatprep.subr.mxu0 0.0
  %178 = vmatpush2.msra.mxu0 0.0
  %179 = vmatprep.subr.mxu0 0.0
  %180 = vmatpush2.msra.mxu0 0.0
  %181 = vmatprep.subr.mxu0 0.0
  %182 = vmatpush2.msra.mxu0 0.0
  %183 = vmatprep.subr.mxu0 0.0
  %184 = vmatpush2.msra.mxu0 0.0
  %185 = vmatprep.subr.mxu0 0.0
  %186 = vmatpush2.msra.mxu0 0.0
  %187 = vmatprep.subr.mxu0 0.0
  %188 = vmatpush2.msra.mxu0 0.0
  %189 = vmatprep.subr.mxu0 0.0
  %190 = vmatpush2.msra.mxu0 0.0
  %191 = vmatprep.subr.mxu0 0.0
  %192 = vmatpush2.msra.mxu0 0.0
  %193 = vmatprep.subr.mxu0 0.0
  %194 = vmatpush2.msra.mxu0 0.0
  %195 = vmatprep.subr.mxu0 0.0
  %196 = vmatpush2.msra.mxu0 0.0
  %197 = vmatprep.subr.mxu0 0.0
  %198 = vmatpush2.msra.mxu0 0.0
  %199 = vmatprep.subr.mxu0 0.0
  %200 = vmatpush2.msra.mxu0 0.0
  %201 = vmatprep.mubr.f32.mxu0 0.0
  %202 = vmatmul.mubr.f32.gmra.mxu0 %v31
  %v203 = vpop.f32.mrf.mxu0
  %v204 = vadd.f32 0.0, %v203
  %v205 = vpop.f32.mrf.mxu0
  %v206 = vadd.f32 0.0, %v205
  %207 = vdwg.mxu0
  %208 = vmatprep.subr.mxu0 %v126
  %209 = vmatpush1.msra.mxu0 %v125
  %210 = vmatprep.subr.mxu0 %v120
  %211 = vmatpush1.msra.mxu0 %v119
  %212 = vmatprep.subr.mxu0 %v114
  %213 = vmatpush1.msra.mxu0 %v113
  %214 = vmatprep.subr.mxu0 %v108
  %215 = vmatpush1.msra.mxu0 %v107
  %216 = vmatprep.subr.mxu0 %v102
  %217 = vmatpush1.msra.mxu0 %v101
  %218 = vmatprep.subr.mxu0 %v96
  %219 = vmatpush1.msra.mxu0 %v95
  %220 = vmatprep.subr.mxu0 %v90
  %221 = vmatpush1.msra.mxu0 %v89
  %222 = vmatprep.subr.mxu0 %v84
  %223 = vmatpush1.msra.mxu0 %v83
  %224 = vmatprep.subr.mxu0 %v78
  %225 = vmatpush1.msra.mxu0 %v77
  %226 = vmatprep.subr.mxu0 %v72
  %227 = vmatpush1.msra.mxu0 %v71
  %228 = vmatprep.subr.mxu0 %v66
  %229 = vmatpush1.msra.mxu0 %v65
  %230 = vmatprep.subr.mxu0 %v60
  %231 = vmatpush1.msra.mxu0 %v59
  %232 = vmatprep.subr.mxu0 %v54
  %233 = vmatpush1.msra.mxu0 %v53
  %234 = vmatprep.subr.mxu0 %v48
  %235 = vmatpush1.msra.mxu0 %v47
  %236 = vmatprep.subr.mxu0 %v42
  %237 = vmatpush1.msra.mxu0 %v41
  %238 = vmatprep.subr.mxu0 %v36
  %239 = vmatpush1.msra.mxu0 %v35
  %240 = vmatprep.subr.mxu0 0.0
  %241 = vmatpush2.msra.mxu0 0.0
  %242 = vmatprep.subr.mxu0 0.0
  %243 = vmatpush2.msra.mxu0 0.0
  %244 = vmatprep.subr.mxu0 0.0
  %245 = vmatpush2.msra.mxu0 0.0
  %246 = vmatprep.subr.mxu0 0.0
  %247 = vmatpush2.msra.mxu0 0.0
  %248 = vmatprep.subr.mxu0 0.0
  %249 = vmatpush2.msra.mxu0 0.0
  %250 = vmatprep.subr.mxu0 0.0
  %251 = vmatpush2.msra.mxu0 0.0
  %252 = vmatprep.subr.mxu0 0.0
  %253 = vmatpush2.msra.mxu0 0.0
  %254 = vmatprep.subr.mxu0 0.0
  %255 = vmatpush2.msra.mxu0 0.0
  %256 = vmatprep.subr.mxu0 0.0
  %257 = vmatpush2.msra.mxu0 0.0
  %258 = vmatprep.subr.mxu0 0.0
  %259 = vmatpush2.msra.mxu0 0.0
  %260 = vmatprep.subr.mxu0 0.0
  %261 = vmatpush2.msra.mxu0 0.0
  %262 = vmatprep.subr.mxu0 0.0
  %263 = vmatpush2.msra.mxu0 0.0
  %264 = vmatprep.subr.mxu0 0.0
  %265 = vmatpush2.msra.mxu0 0.0
  %266 = vmatprep.subr.mxu0 0.0
  %267 = vmatpush2.msra.mxu0 0.0
  %268 = vmatprep.subr.mxu0 0.0
  %269 = vmatpush2.msra.mxu0 0.0
  %270 = vmatprep.subr.mxu0 0.0
  %271 = vmatpush2.msra.mxu0 0.0
  %272 = vmatprep.mubr.f32.mxu0 0.0
  %273 = vmatmul.mubr.f32.gmra.mxu0 %v31
  %v274 = vpop.f32.mrf.mxu0
  %v275 = vadd.f32 0.0, %v274
  %v276 = vpop.f32.mrf.mxu0
  %v277 = vadd.f32 0.0, %v276
  %278 = vdwg.mxu0
  %279 = vmatprep.subr.mxu0 %v128
  %280 = vmatpush1.msra.mxu0 %v127
  %281 = vmatprep.subr.mxu0 %v122
  %282 = vmatpush1.msra.mxu0 %v121
  %283 = vmatprep.subr.mxu0 %v116
  %284 = vmatpush1.msra.mxu0 %v115
  %285 = vmatprep.subr.mxu0 %v110
  %286 = vmatpush1.msra.mxu0 %v109
  %287 = vmatprep.subr.mxu0 %v104
  %288 = vmatpush1.msra.mxu0 %v103
  %289 = vmatprep.subr.mxu0 %v98
  %290 = vmatpush1.msra.mxu0 %v97
  %291 = vmatprep.subr.mxu0 %v92
  %292 = vmatpush1.msra.mxu0 %v91
  %293 = vmatprep.subr.mxu0 %v86
  %294 = vmatpush1.msra.mxu0 %v85
  %295 = vmatprep.subr.mxu0 %v80
  %296 = vmatpush1.msra.mxu0 %v79
  %297 = vmatprep.subr.mxu0 %v74
  %298 = vmatpush1.msra.mxu0 %v73
  %299 = vmatprep.subr.mxu0 %v68
  %300 = vmatpush1.msra.mxu0 %v67
  %301 = vmatprep.subr.mxu0 %v62
  %302 = vmatpush1.msra.mxu0 %v61
  %303 = vmatprep.subr.mxu0 %v56
  %304 = vmatpush1.msra.mxu0 %v55
  %305 = vmatprep.subr.mxu0 %v50
  %306 = vmatpush1.msra.mxu0 %v49
  %307 = vmatprep.subr.mxu0 %v44
  %308 = vmatpush1.msra.mxu0 %v43
  %309 = vmatprep.subr.mxu0 %v38
  %310 = vmatpush1.msra.mxu0 %v37
  %311 = vmatprep.subr.mxu0 0.0
  %312 = vmatpush2.msra.mxu0 0.0
  %313 = vmatprep.subr.mxu0 0.0
  %314 = vmatpush2.msra.mxu0 0.0
  %315 = vmatprep.subr.mxu0 0.0
  %316 = vmatpush2.msra.mxu0 0.0
  %317 = vmatprep.subr.mxu0 0.0
  %318 = vmatpush2.msra.mxu0 0.0
  %319 = vmatprep.subr.mxu0 0.0
  %320 = vmatpush2.msra.mxu0 0.0
  %321 = vmatprep.subr.mxu0 0.0
  %322 = vmatpush2.msra.mxu0 0.0
  %323 = vmatprep.subr.mxu0 0.0
  %324 = vmatpush2.msra.mxu0 0.0
  %325 = vmatprep.subr.mxu0 0.0
  %326 = vmatpush2.msra.mxu0 0.0
  %327 = vmatprep.subr.mxu0 0.0
  %328 = vmatpush2.msra.mxu0 0.0
  %329 = vmatprep.subr.mxu0 0.0
  %330 = vmatpush2.msra.mxu0 0.0
  %331 = vmatprep.subr.mxu0 0.0
  %332 = vmatpush2.msra.mxu0 0.0
  %333 = vmatprep.subr.mxu0 0.0
  %334 = vmatpush2.msra.mxu0 0.0
  %335 = vmatprep.subr.mxu0 0.0
  %336 = vmatpush2.msra.mxu0 0.0
  %337 = vmatprep.subr.mxu0 0.0
  %338 = vmatpush2.msra.mxu0 0.0
  %339 = vmatprep.subr.mxu0 0.0
  %340 = vmatpush2.msra.mxu0 0.0
  %341 = vmatprep.subr.mxu0 0.0
  %342 = vmatpush2.msra.mxu0 0.0
  %343 = vmatprep.mubr.f32.mxu0 0.0
  %344 = vmatmul.mubr.f32.gmra.mxu0 %v31
  %v345 = vpop.f32.mrf.mxu0
  %v346 = vadd.f32 0.0, %v345
  %v347 = vpop.f32.mrf.mxu0
  %v348 = vadd.f32 0.0, %v347
  %349 = vdwg.mxu0
  %v350 = vadd.f32 %v131, %v204
  %v351 = vadd.f32 %v132, %v206
  %v352 = vadd.f32 %v133, %v275
  %v353 = vadd.f32 %v134, %v277
  %v354 = vadd.f32 %v135, %v346
  %v355 = vadd.f32 %v136, %v348
  %v356 = vxor.u32 %v350, 2147483648
  %v357 = vmul.f32 %v356, 1.442695
  %v358 = vpow.pop %v357
  %v359 = vadd.f32 %v358, 1.0
  %v360 = vrcp.pop %v359
  %v361 = vmul.f32 1.0, %v360
  %v362 = vxor.u32 %v351, 2147483648
  %v363 = vmul.f32 %v362, 1.442695
  %v364 = vpow.pop %v363
  %v365 = vadd.f32 %v364, 1.0
  %v366 = vrcp.pop %v365
  %v367 = vmul.f32 1.0, %v366
  %v368 = vtanh.pop %v352
  %v369 = vxor.u32 %v353, 2147483648
  %v370 = vmul.f32 %v369, 1.442695
  %v371 = vpow.pop %v370
  %v372 = vadd.f32 %v371, 1.0
  %v373 = vrcp.pop %v372
  %v374 = vmul.f32 1.0, %v373
  %v375 = vxor.u32 %v354, 2147483648
  %v376 = vmul.f32 %v375, 1.442695
  %v377 = vpow.pop %v376
  %v378 = vadd.f32 %v377, 1.0
  %v379 = vrcp.pop %v378
  %v380 = vmul.f32 1.0, %v379
  %v381 = vtanh.pop %v355
  %v382 = vmul.f32 %v361, %v368
  %v383 = vmul.f32 %v380, %v381
  %v385 = vlaneseq
  %v386 = vshrl.u32 %v385, 7
  %v387 = vsub.s32 0, %v386
  %v388 = vrot.slane %v129, %v387
  %v390 = vmul.f32 %v382, %v388
  %391 = vadd.xlane.f32.xlu0 %v390
  %v392 = vpop.xlane.xlu0 %391
  %v393 = vstv %s130
  %v394 = vadd.f32 %v392, %v393
  %v395 = vtanh.pop %v394
  %v396 = vmul.f32 %v383, %v388
  %397 = vadd.xlane.f32.xlu0 %v396
  %v398 = vpop.xlane.xlu0 %397
  %v399 = vadd.f32 %v398, %v393
  %v400 = vtanh.pop %v399
  %v401 = vsub.f32 %v395, %v400
  %v402 = vxor.u32 %v401, 2147483648
  %v403 = vmul.f32 %v402, 1.442695
  %v404 = vpow.pop %v403
  %v405 = vadd.f32 %v404, 1.0
  %v406 = vrcp.pop %v405
  %v407 = vmul.f32 1.0, %v406
  %v408 = vsub.f32 %v382, %v383
  %v409 = vmul.f32 %v407, %v408
  %v410 = vadd.f32 %v383, %v409
  %v411 = vmul.f32 %v367, %v32
  %v412 = vadd.f32 %v411, %v410
  %v413 = vtanh.pop %v412
  %v414 = vmul.f32 %v374, %v413
  %s415 = scalar_lea.vmem %s0, 48
  %v416 = vld [vmem:[%s415] sm:$0xff]
  %v417 = vld [vmem:[%s415 + $0x8] sm:$0xff]
  %v418 = vld [vmem:[%s415 + $0x10] sm:$0xff]
  %v419 = vld [vmem:[%s415 + $0x18] sm:$0xff]
  %v420 = vld [vmem:[%s415 + $0x20] sm:$0xff]
  %v421 = vld [vmem:[%s415 + $0x28] sm:$0xff]
  %422 = vmatprep.subr.mxu0 %v124
  %423 = vmatpush1.msra.mxu0 %v123
  %424 = vmatprep.subr.mxu0 %v118
  %425 = vmatpush1.msra.mxu0 %v117
  %426 = vmatprep.subr.mxu0 %v112
  %427 = vmatpush1.msra.mxu0 %v111
  %428 = vmatprep.subr.mxu0 %v106
  %429 = vmatpush1.msra.mxu0 %v105
  %430 = vmatprep.subr.mxu0 %v100
  %431 = vmatpush1.msra.mxu0 %v99
  %432 = vmatprep.subr.mxu0 %v94
  %433 = vmatpush1.msra.mxu0 %v93
  %434 = vmatprep.subr.mxu0 %v88
  %435 = vmatpush1.msra.mxu0 %v87
  %436 = vmatprep.subr.mxu0 %v82
  %437 = vmatpush1.msra.mxu0 %v81
  %438 = vmatprep.subr.mxu0 %v76
  %439 = vmatpush1.msra.mxu0 %v75
  %440 = vmatprep.subr.mxu0 %v70
  %441 = vmatpush1.msra.mxu0 %v69
  %442 = vmatprep.subr.mxu0 %v64
  %443 = vmatpush1.msra.mxu0 %v63
  %444 = vmatprep.subr.mxu0 %v58
  %445 = vmatpush1.msra.mxu0 %v57
  %446 = vmatprep.subr.mxu0 %v52
  %447 = vmatpush1.msra.mxu0 %v51
  %448 = vmatprep.subr.mxu0 %v46
  %449 = vmatpush1.msra.mxu0 %v45
  %450 = vmatprep.subr.mxu0 %v40
  %451 = vmatpush1.msra.mxu0 %v39
  %452 = vmatprep.subr.mxu0 %v34
  %453 = vmatpush1.msra.mxu0 %v33
  %454 = vmatprep.subr.mxu0 0.0
  %455 = vmatpush2.msra.mxu0 0.0
  %456 = vmatprep.subr.mxu0 0.0
  %457 = vmatpush2.msra.mxu0 0.0
  %458 = vmatprep.subr.mxu0 0.0
  %459 = vmatpush2.msra.mxu0 0.0
  %460 = vmatprep.subr.mxu0 0.0
  %461 = vmatpush2.msra.mxu0 0.0
  %462 = vmatprep.subr.mxu0 0.0
  %463 = vmatpush2.msra.mxu0 0.0
  %464 = vmatprep.subr.mxu0 0.0
  %465 = vmatpush2.msra.mxu0 0.0
  %466 = vmatprep.subr.mxu0 0.0
  %467 = vmatpush2.msra.mxu0 0.0
  %468 = vmatprep.subr.mxu0 0.0
  %469 = vmatpush2.msra.mxu0 0.0
  %470 = vmatprep.subr.mxu0 0.0
  %471 = vmatpush2.msra.mxu0 0.0
  %472 = vmatprep.subr.mxu0 0.0
  %473 = vmatpush2.msra.mxu0 0.0
  %474 = vmatprep.subr.mxu0 0.0
  %475 = vmatpush2.msra.mxu0 0.0
  %476 = vmatprep.subr.mxu0 0.0
  %477 = vmatpush2.msra.mxu0 0.0
  %478 = vmatprep.subr.mxu0 0.0
  %479 = vmatpush2.msra.mxu0 0.0
  %480 = vmatprep.subr.mxu0 0.0
  %481 = vmatpush2.msra.mxu0 0.0
  %482 = vmatprep.subr.mxu0 0.0
  %483 = vmatpush2.msra.mxu0 0.0
  %484 = vmatprep.subr.mxu0 0.0
  %485 = vmatpush2.msra.mxu0 0.0
  %486 = vmatprep.mubr.f32.mxu0 0.0
  %487 = vmatmul.mubr.f32.gmra.mxu0 %v414
  %v488 = vpop.f32.mrf.mxu0
  %v489 = vadd.f32 0.0, %v488
  %v490 = vpop.f32.mrf.mxu0
  %v491 = vadd.f32 0.0, %v490
  %492 = vdwg.mxu0
  %493 = vmatprep.subr.mxu0 %v126
  %494 = vmatpush1.msra.mxu0 %v125
  %495 = vmatprep.subr.mxu0 %v120
  %496 = vmatpush1.msra.mxu0 %v119
  %497 = vmatprep.subr.mxu0 %v114
  %498 = vmatpush1.msra.mxu0 %v113
  %499 = vmatprep.subr.mxu0 %v108
  %500 = vmatpush1.msra.mxu0 %v107
  %501 = vmatprep.subr.mxu0 %v102
  %502 = vmatpush1.msra.mxu0 %v101
  %503 = vmatprep.subr.mxu0 %v96
  %504 = vmatpush1.msra.mxu0 %v95
  %505 = vmatprep.subr.mxu0 %v90
  %506 = vmatpush1.msra.mxu0 %v89
  %507 = vmatprep.subr.mxu0 %v84
  %508 = vmatpush1.msra.mxu0 %v83
  %509 = vmatprep.subr.mxu0 %v78
  %510 = vmatpush1.msra.mxu0 %v77
  %511 = vmatprep.subr.mxu0 %v72
  %512 = vmatpush1.msra.mxu0 %v71
  %513 = vmatprep.subr.mxu0 %v66
  %514 = vmatpush1.msra.mxu0 %v65
  %515 = vmatprep.subr.mxu0 %v60
  %516 = vmatpush1.msra.mxu0 %v59
  %517 = vmatprep.subr.mxu0 %v54
  %518 = vmatpush1.msra.mxu0 %v53
  %519 = vmatprep.subr.mxu0 %v48
  %520 = vmatpush1.msra.mxu0 %v47
  %521 = vmatprep.subr.mxu0 %v42
  %522 = vmatpush1.msra.mxu0 %v41
  %523 = vmatprep.subr.mxu0 %v36
  %524 = vmatpush1.msra.mxu0 %v35
  %525 = vmatprep.subr.mxu0 0.0
  %526 = vmatpush2.msra.mxu0 0.0
  %527 = vmatprep.subr.mxu0 0.0
  %528 = vmatpush2.msra.mxu0 0.0
  %529 = vmatprep.subr.mxu0 0.0
  %530 = vmatpush2.msra.mxu0 0.0
  %531 = vmatprep.subr.mxu0 0.0
  %532 = vmatpush2.msra.mxu0 0.0
  %533 = vmatprep.subr.mxu0 0.0
  %534 = vmatpush2.msra.mxu0 0.0
  %535 = vmatprep.subr.mxu0 0.0
  %536 = vmatpush2.msra.mxu0 0.0
  %537 = vmatprep.subr.mxu0 0.0
  %538 = vmatpush2.msra.mxu0 0.0
  %539 = vmatprep.subr.mxu0 0.0
  %540 = vmatpush2.msra.mxu0 0.0
  %541 = vmatprep.subr.mxu0 0.0
  %542 = vmatpush2.msra.mxu0 0.0
  %543 = vmatprep.subr.mxu0 0.0
  %544 = vmatpush2.msra.mxu0 0.0
  %545 = vmatprep.subr.mxu0 0.0
  %546 = vmatpush2.msra.mxu0 0.0
  %547 = vmatprep.subr.mxu0 0.0
  %548 = vmatpush2.msra.mxu0 0.0
  %549 = vmatprep.subr.mxu0 0.0
  %550 = vmatpush2.msra.mxu0 0.0
  %551 = vmatprep.subr.mxu0 0.0
  %552 = vmatpush2.msra.mxu0 0.0
  %553 = vmatprep.subr.mxu0 0.0
  %554 = vmatpush2.msra.mxu0 0.0
  %555 = vmatprep.subr.mxu0 0.0
  %556 = vmatpush2.msra.mxu0 0.0
  %557 = vmatprep.mubr.f32.mxu0 0.0
  %558 = vmatmul.mubr.f32.gmra.mxu0 %v414
  %v559 = vpop.f32.mrf.mxu0
  %v560 = vadd.f32 0.0, %v559
  %v561 = vpop.f32.mrf.mxu0
  %v562 = vadd.f32 0.0, %v561
  %563 = vdwg.mxu0
  %564 = vmatprep.subr.mxu0 %v128
  %565 = vmatpush1.msra.mxu0 %v127
  %566 = vmatprep.subr.mxu0 %v122
  %567 = vmatpush1.msra.mxu0 %v121
  %568 = vmatprep.subr.mxu0 %v116
  %569 = vmatpush1.msra.mxu0 %v115
  %570 = vmatprep.subr.mxu0 %v110
  %571 = vmatpush1.msra.mxu0 %v109
  %572 = vmatprep.subr.mxu0 %v104
  %573 = vmatpush1.msra.mxu0 %v103
  %574 = vmatprep.subr.mxu0 %v98
  %575 = vmatpush1.msra.mxu0 %v97
  %576 = vmatprep.subr.mxu0 %v92
  %577 = vmatpush1.msra.mxu0 %v91
  %578 = vmatprep.subr.mxu0 %v86
  %579 = vmatpush1.msra.mxu0 %v85
  %580 = vmatprep.subr.mxu0 %v80
  %581 = vmatpush1.msra.mxu0 %v79
  %582 = vmatprep.subr.mxu0 %v74
  %583 = vmatpush1.msra.mxu0 %v73
  %584 = vmatprep.subr.mxu0 %v68
  %585 = vmatpush1.msra.mxu0 %v67
  %586 = vmatprep.subr.mxu0 %v62
  %587 = vmatpush1.msra.mxu0 %v61
  %588 = vmatprep.subr.mxu0 %v56
  %589 = vmatpush1.msra.mxu0 %v55
  %590 = vmatprep.subr.mxu0 %v50
  %591 = vmatpush1.msra.mxu0 %v49
  %592 = vmatprep.subr.mxu0 %v44
  %593 = vmatpush1.msra.mxu0 %v43
  %594 = vmatprep.subr.mxu0 %v38
  %595 = vmatpush1.msra.mxu0 %v37
  %596 = vmatprep.subr.mxu0 0.0
  %597 = vmatpush2.msra.mxu0 0.0
  %598 = vmatprep.subr.mxu0 0.0
  %599 = vmatpush2.msra.mxu0 0.0
  %600 = vmatprep.subr.mxu0 0.0
  %601 = vmatpush2.msra.mxu0 0.0
  %602 = vmatprep.subr.mxu0 0.0
  %603 = vmatpush2.msra.mxu0 0.0
  %604 = vmatprep.subr.mxu0 0.0
  %605 = vmatpush2.msra.mxu0 0.0
  %606 = vmatprep.subr.mxu0 0.0
  %607 = vmatpush2.msra.mxu0 0.0
  %608 = vmatprep.subr.mxu0 0.0
  %609 = vmatpush2.msra.mxu0 0.0
  %610 = vmatprep.subr.mxu0 0.0
  %611 = vmatpush2.msra.mxu0 0.0
  %612 = vmatprep.subr.mxu0 0.0
  %613 = vmatpush2.msra.mxu0 0.0
  %614 = vmatprep.subr.mxu0 0.0
  %615 = vmatpush2.msra.mxu0 0.0
  %616 = vmatprep.subr.mxu0 0.0
  %617 = vmatpush2.msra.mxu0 0.0
  %618 = vmatprep.subr.mxu0 0.0
  %619 = vmatpush2.msra.mxu0 0.0
  %620 = vmatprep.subr.mxu0 0.0
  %621 = vmatpush2.msra.mxu0 0.0
  %622 = vmatprep.subr.mxu0 0.0
  %623 = vmatpush2.msra.mxu0 0.0
  %624 = vmatprep.subr.mxu0 0.0
  %625 = vmatpush2.msra.mxu0 0.0
  %626 = vmatprep.subr.mxu0 0.0
  %627 = vmatpush2.msra.mxu0 0.0
  %628 = vmatprep.mubr.f32.mxu0 0.0
  %629 = vmatmul.mubr.f32.gmra.mxu0 %v414
  %v630 = vpop.f32.mrf.mxu0
  %v631 = vadd.f32 0.0, %v630
  %v632 = vpop.f32.mrf.mxu0
  %v633 = vadd.f32 0.0, %v632
  %634 = vdwg.mxu0
  %v635 = vadd.f32 %v416, %v489
  %v636 = vadd.f32 %v417, %v491
  %v637 = vadd.f32 %v418, %v560
  %v638 = vadd.f32 %v419, %v562
  %v639 = vadd.f32 %v420, %v631
  %v640 = vadd.f32 %v421, %v633
  %v641 = vxor.u32 %v635, 2147483648
  %v642 = vmul.f32 %v641, 1.442695
  %v643 = vpow.pop %v642
  %v644 = vadd.f32 %v643, 1.0
  %v645 = vrcp.pop %v644
  %v646 = vmul.f32 1.0, %v645
  %v647 = vxor.u32 %v636, 2147483648
  %v648 = vmul.f32 %v647, 1.442695
  %v649 = vpow.pop %v648
  %v650 = vadd.f32 %v649, 1.0
  %v651 = vrcp.pop %v650
  %v652 = vmul.f32 1.0, %v651
  %v653 = vtanh.pop %v637
  %v654 = vxor.u32 %v638, 2147483648
  %v655 = vmul.f32 %v654, 1.442695
  %v656 = vpow.pop %v655
  %v657 = vadd.f32 %v656, 1.0
  %v658 = vrcp.pop %v657
  %v659 = vmul.f32 1.0, %v658
  %v660 = vxor.u32 %v639, 2147483648
  %v661 = vmul.f32 %v660, 1.442695
  %v662 = vpow.pop %v661
  %v663 = vadd.f32 %v662, 1.0
  %v664 = vrcp.pop %v663
  %v665 = vmul.f32 1.0, %v664
  %v666 = vtanh.pop %v640
  %v667 = vmul.f32 %v646, %v653
  %v668 = vmul.f32 %v665, %v666
  %v669 = vmul.f32 %v667, %v388
  %670 = vadd.xlane.f32.xlu0 %v669
  %v671 = vpop.xlane.xlu0 %670
  %v672 = vadd.f32 %v671, %v393
  %v673 = vtanh.pop %v672
  %v674 = vmul.f32 %v668, %v388
  %675 = vadd.xlane.f32.xlu0 %v674
  %v676 = vpop.xlane.xlu0 %675
  %v677 = vadd.f32 %v676, %v393
  %v678 = vtanh.pop %v677
  %v679 = vsub.f32 %v673, %v678
  %v680 = vxor.u32 %v679, 2147483648
  %v681 = vmul.f32 %v680, 1.442695
  %v682 = vpow.pop %v681
  %v683 = vadd.f32 %v682, 1.0
  %v684 = vrcp.pop %v683
  %v685 = vmul.f32 1.0, %v684
  %v686 = vsub.f32 %v667, %v668
  %v687 = vmul.f32 %v685, %v686
  %v688 = vadd.f32 %v668, %v687
  %v689 = vmul.f32 %v652, %v412
  %v690 = vadd.f32 %v689, %v688
  %v691 = vtanh.pop %v690
  %v692 = vmul.f32 %v659, %v691
  %s693 = scalar_lea.vmem %s0, 96
  %v694 = vld [vmem:[%s693] sm:$0xff]
  %v695 = vld [vmem:[%s693 + $0x8] sm:$0xff]
  %v696 = vld [vmem:[%s693 + $0x10] sm:$0xff]
  %v697 = vld [vmem:[%s693 + $0x18] sm:$0xff]
  %v698 = vld [vmem:[%s693 + $0x20] sm:$0xff]
  %v699 = vld [vmem:[%s693 + $0x28] sm:$0xff]
  %700 = vmatprep.subr.mxu0 %v124
  %701 = vmatpush1.msra.mxu0 %v123
  %702 = vmatprep.subr.mxu0 %v118
  %703 = vmatpush1.msra.mxu0 %v117
  %704 = vmatprep.subr.mxu0 %v112
  %705 = vmatpush1.msra.mxu0 %v111
  %706 = vmatprep.subr.mxu0 %v106
  %707 = vmatpush1.msra.mxu0 %v105
  %708 = vmatprep.subr.mxu0 %v100
  %709 = vmatpush1.msra.mxu0 %v99
  %710 = vmatprep.subr.mxu0 %v94
  %711 = vmatpush1.msra.mxu0 %v93
  %712 = vmatprep.subr.mxu0 %v88
  %713 = vmatpush1.msra.mxu0 %v87
  %714 = vmatprep.subr.mxu0 %v82
  %715 = vmatpush1.msra.mxu0 %v81
  %716 = vmatprep.subr.mxu0 %v76
  %717 = vmatpush1.msra.mxu0 %v75
  %718 = vmatprep.subr.mxu0 %v70
  %719 = vmatpush1.msra.mxu0 %v69
  %720 = vmatprep.subr.mxu0 %v64
  %721 = vmatpush1.msra.mxu0 %v63
  %722 = vmatprep.subr.mxu0 %v58
  %723 = vmatpush1.msra.mxu0 %v57
  %724 = vmatprep.subr.mxu0 %v52
  %725 = vmatpush1.msra.mxu0 %v51
  %726 = vmatprep.subr.mxu0 %v46
  %727 = vmatpush1.msra.mxu0 %v45
  %728 = vmatprep.subr.mxu0 %v40
  %729 = vmatpush1.msra.mxu0 %v39
  %730 = vmatprep.subr.mxu0 %v34
  %731 = vmatpush1.msra.mxu0 %v33
  %732 = vmatprep.subr.mxu0 0.0
  %733 = vmatpush2.msra.mxu0 0.0
  %734 = vmatprep.subr.mxu0 0.0
  %735 = vmatpush2.msra.mxu0 0.0
  %736 = vmatprep.subr.mxu0 0.0
  %737 = vmatpush2.msra.mxu0 0.0
  %738 = vmatprep.subr.mxu0 0.0
  %739 = vmatpush2.msra.mxu0 0.0
  %740 = vmatprep.subr.mxu0 0.0
  %741 = vmatpush2.msra.mxu0 0.0
  %742 = vmatprep.subr.mxu0 0.0
  %743 = vmatpush2.msra.mxu0 0.0
  %744 = vmatprep.subr.mxu0 0.0
  %745 = vmatpush2.msra.mxu0 0.0
  %746 = vmatprep.subr.mxu0 0.0
  %747 = vmatpush2.msra.mxu0 0.0
  %748 = vmatprep.subr.mxu0 0.0
  %749 = vmatpush2.msra.mxu0 0.0
  %750 = vmatprep.subr.mxu0 0.0
  %751 = vmatpush2.msra.mxu0 0.0
  %752 = vmatprep.subr.mxu0 0.0
  %753 = vmatpush2.msra.mxu0 0.0
  %754 = vmatprep.subr.mxu0 0.0
  %755 = vmatpush2.msra.mxu0 0.0
  %756 = vmatprep.subr.mxu0 0.0
  %757 = vmatpush2.msra.mxu0 0.0
  %758 = vmatprep.subr.mxu0 0.0
  %759 = vmatpush2.msra.mxu0 0.0
  %760 = vmatprep.subr.mxu0 0.0
  %761 = vmatpush2.msra.mxu0 0.0
  %762 = vmatprep.subr.mxu0 0.0
  %763 = vmatpush2.msra.mxu0 0.0
  %764 = vmatprep.mubr.f32.mxu0 0.0
  %765 = vmatmul.mubr.f32.gmra.mxu0 %v692
  %v766 = vpop.f32.mrf.mxu0
  %v767 = vadd.f32 0.0, %v766
  %v768 = vpop.f32.mrf.mxu0
  %v769 = vadd.f32 0.0, %v768
  %770 = vdwg.mxu0
  %771 = vmatprep.subr.mxu0 %v126
  %772 = vmatpush1.msra.mxu0 %v125
  %773 = vmatprep.subr.mxu0 %v120
  %774 = vmatpush1.msra.mxu0 %v119
  %775 = vmatprep.subr.mxu0 %v114
  %776 = vmatpush1.msra.mxu0 %v113
  %777 = vmatprep.subr.mxu0 %v108
  %778 = vmatpush1.msra.mxu0 %v107
  %779 = vmatprep.subr.mxu0 %v102
  %780 = vmatpush1.msra.mxu0 %v101
  %781 = vmatprep.subr.mxu0 %v96
  %782 = vmatpush1.msra.mxu0 %v95
  %783 = vmatprep.subr.mxu0 %v90
  %784 = vmatpush1.msra.mxu0 %v89
  %785 = vmatprep.subr.mxu0 %v84
  %786 = vmatpush1.msra.mxu0 %v83
  %787 = vmatprep.subr.mxu0 %v78
  %788 = vmatpush1.msra.mxu0 %v77
  %789 = vmatprep.subr.mxu0 %v72
  %790 = vmatpush1.msra.mxu0 %v71
  %791 = vmatprep.subr.mxu0 %v66
  %792 = vmatpush1.msra.mxu0 %v65
  %793 = vmatprep.subr.mxu0 %v60
  %794 = vmatpush1.msra.mxu0 %v59
  %795 = vmatprep.subr.mxu0 %v54
  %796 = vmatpush1.msra.mxu0 %v53
  %797 = vmatprep.subr.mxu0 %v48
  %798 = vmatpush1.msra.mxu0 %v47
  %799 = vmatprep.subr.mxu0 %v42
  %800 = vmatpush1.msra.mxu0 %v41
  %801 = vmatprep.subr.mxu0 %v36
  %802 = vmatpush1.msra.mxu0 %v35
  %803 = vmatprep.subr.mxu0 0.0
  %804 = vmatpush2.msra.mxu0 0.0
  %805 = vmatprep.subr.mxu0 0.0
  %806 = vmatpush2.msra.mxu0 0.0
  %807 = vmatprep.subr.mxu0 0.0
  %808 = vmatpush2.msra.mxu0 0.0
  %809 = vmatprep.subr.mxu0 0.0
  %810 = vmatpush2.msra.mxu0 0.0
  %811 = vmatprep.subr.mxu0 0.0
  %812 = vmatpush2.msra.mxu0 0.0
  %813 = vmatprep.subr.mxu0 0.0
  %814 = vmatpush2.msra.mxu0 0.0
  %815 = vmatprep.subr.mxu0 0.0
  %816 = vmatpush2.msra.mxu0 0.0
  %817 = vmatprep.subr.mxu0 0.0
  %818 = vmatpush2.msra.mxu0 0.0
  %819 = vmatprep.subr.mxu0 0.0
  %820 = vmatpush2.msra.mxu0 0.0
  %821 = vmatprep.subr.mxu0 0.0
  %822 = vmatpush2.msra.mxu0 0.0
  %823 = vmatprep.subr.mxu0 0.0
  %824 = vmatpush2.msra.mxu0 0.0
  %825 = vmatprep.subr.mxu0 0.0
  %826 = vmatpush2.msra.mxu0 0.0
  %827 = vmatprep.subr.mxu0 0.0
  %828 = vmatpush2.msra.mxu0 0.0
  %829 = vmatprep.subr.mxu0 0.0
  %830 = vmatpush2.msra.mxu0 0.0
  %831 = vmatprep.subr.mxu0 0.0
  %832 = vmatpush2.msra.mxu0 0.0
  %833 = vmatprep.subr.mxu0 0.0
  %834 = vmatpush2.msra.mxu0 0.0
  %835 = vmatprep.mubr.f32.mxu0 0.0
  %836 = vmatmul.mubr.f32.gmra.mxu0 %v692
  %v837 = vpop.f32.mrf.mxu0
  %v838 = vadd.f32 0.0, %v837
  %v839 = vpop.f32.mrf.mxu0
  %v840 = vadd.f32 0.0, %v839
  %841 = vdwg.mxu0
  %842 = vmatprep.subr.mxu0 %v128
  %843 = vmatpush1.msra.mxu0 %v127
  %844 = vmatprep.subr.mxu0 %v122
  %845 = vmatpush1.msra.mxu0 %v121
  %846 = vmatprep.subr.mxu0 %v116
  %847 = vmatpush1.msra.mxu0 %v115
  %848 = vmatprep.subr.mxu0 %v110
  %849 = vmatpush1.msra.mxu0 %v109
  %850 = vmatprep.subr.mxu0 %v104
  %851 = vmatpush1.msra.mxu0 %v103
  %852 = vmatprep.subr.mxu0 %v98
  %853 = vmatpush1.msra.mxu0 %v97
  %854 = vmatprep.subr.mxu0 %v92
  %855 = vmatpush1.msra.mxu0 %v91
  %856 = vmatprep.subr.mxu0 %v86
  %857 = vmatpush1.msra.mxu0 %v85
  %858 = vmatprep.subr.mxu0 %v80
  %859 = vmatpush1.msra.mxu0 %v79
  %860 = vmatprep.subr.mxu0 %v74
  %861 = vmatpush1.msra.mxu0 %v73
  %862 = vmatprep.subr.mxu0 %v68
  %863 = vmatpush1.msra.mxu0 %v67
  %864 = vmatprep.subr.mxu0 %v62
  %865 = vmatpush1.msra.mxu0 %v61
  %866 = vmatprep.subr.mxu0 %v56
  %867 = vmatpush1.msra.mxu0 %v55
  %868 = vmatprep.subr.mxu0 %v50
  %869 = vmatpush1.msra.mxu0 %v49
  %870 = vmatprep.subr.mxu0 %v44
  %871 = vmatpush1.msra.mxu0 %v43
  %872 = vmatprep.subr.mxu0 %v38
  %873 = vmatpush1.msra.mxu0 %v37
  %874 = vmatprep.subr.mxu0 0.0
  %875 = vmatpush2.msra.mxu0 0.0
  %876 = vmatprep.subr.mxu0 0.0
  %877 = vmatpush2.msra.mxu0 0.0
  %878 = vmatprep.subr.mxu0 0.0
  %879 = vmatpush2.msra.mxu0 0.0
  %880 = vmatprep.subr.mxu0 0.0
  %881 = vmatpush2.msra.mxu0 0.0
  %882 = vmatprep.subr.mxu0 0.0
  %883 = vmatpush2.msra.mxu0 0.0
  %884 = vmatprep.subr.mxu0 0.0
  %885 = vmatpush2.msra.mxu0 0.0
  %886 = vmatprep.subr.mxu0 0.0
  %887 = vmatpush2.msra.mxu0 0.0
  %888 = vmatprep.subr.mxu0 0.0
  %889 = vmatpush2.msra.mxu0 0.0
  %890 = vmatprep.subr.mxu0 0.0
  %891 = vmatpush2.msra.mxu0 0.0
  %892 = vmatprep.subr.mxu0 0.0
  %893 = vmatpush2.msra.mxu0 0.0
  %894 = vmatprep.subr.mxu0 0.0
  %895 = vmatpush2.msra.mxu0 0.0
  %896 = vmatprep.subr.mxu0 0.0
  %897 = vmatpush2.msra.mxu0 0.0
  %898 = vmatprep.subr.mxu0 0.0
  %899 = vmatpush2.msra.mxu0 0.0
  %900 = vmatprep.subr.mxu0 0.0
  %901 = vmatpush2.msra.mxu0 0.0
  %902 = vmatprep.subr.mxu0 0.0
  %903 = vmatpush2.msra.mxu0 0.0
  %904 = vmatprep.subr.mxu0 0.0
  %905 = vmatpush2.msra.mxu0 0.0
  %906 = vmatprep.mubr.f32.mxu0 0.0
  %907 = vmatmul.mubr.f32.gmra.mxu0 %v692
  %v908 = vpop.f32.mrf.mxu0
  %v909 = vadd.f32 0.0, %v908
  %v910 = vpop.f32.mrf.mxu0
  %v911 = vadd.f32 0.0, %v910
  %912 = vdwg.mxu0
  %v913 = vadd.f32 %v694, %v767
  %v914 = vadd.f32 %v695, %v769
  %v915 = vadd.f32 %v696, %v838
  %v916 = vadd.f32 %v697, %v840
  %v917 = vadd.f32 %v698, %v909
  %v918 = vadd.f32 %v699, %v911
  %v919 = vxor.u32 %v913, 2147483648
  %v920 = vmul.f32 %v919, 1.442695
  %v921 = vpow.pop %v920
  %v922 = vadd.f32 %v921, 1.0
  %v923 = vrcp.pop %v922
  %v924 = vmul.f32 1.0, %v923
  %v925 = vxor.u32 %v914, 2147483648
  %v926 = vmul.f32 %v925, 1.442695
  %v927 = vpow.pop %v926
  %v928 = vadd.f32 %v927, 1.0
  %v929 = vrcp.pop %v928
  %v930 = vmul.f32 1.0, %v929
  %v931 = vtanh.pop %v915
  %v932 = vxor.u32 %v916, 2147483648
  %v933 = vmul.f32 %v932, 1.442695
  %v934 = vpow.pop %v933
  %v935 = vadd.f32 %v934, 1.0
  %v936 = vrcp.pop %v935
  %v937 = vmul.f32 1.0, %v936
  %v938 = vxor.u32 %v917, 2147483648
  %v939 = vmul.f32 %v938, 1.442695
  %v940 = vpow.pop %v939
  %v941 = vadd.f32 %v940, 1.0
  %v942 = vrcp.pop %v941
  %v943 = vmul.f32 1.0, %v942
  %v944 = vtanh.pop %v918
  %v945 = vmul.f32 %v924, %v931
  %v946 = vmul.f32 %v943, %v944
  %v947 = vmul.f32 %v945, %v388
  %948 = vadd.xlane.f32.xlu0 %v947
  %v949 = vpop.xlane.xlu0 %948
  %v950 = vadd.f32 %v949, %v393
  %v951 = vtanh.pop %v950
  %v952 = vmul.f32 %v946, %v388
  %953 = vadd.xlane.f32.xlu0 %v952
  %v954 = vpop.xlane.xlu0 %953
  %v955 = vadd.f32 %v954, %v393
  %v956 = vtanh.pop %v955
  %v957 = vsub.f32 %v951, %v956
  %v958 = vxor.u32 %v957, 2147483648
  %v959 = vmul.f32 %v958, 1.442695
  %v960 = vpow.pop %v959
  %v961 = vadd.f32 %v960, 1.0
  %v962 = vrcp.pop %v961
  %v963 = vmul.f32 1.0, %v962
  %v964 = vsub.f32 %v945, %v946
  %v965 = vmul.f32 %v963, %v964
  %v966 = vadd.f32 %v946, %v965
  %v967 = vmul.f32 %v930, %v690
  %v968 = vadd.f32 %v967, %v966
  %v969 = vtanh.pop %v968
  %v970 = vmul.f32 %v937, %v969
  %s971 = scalar_lea.vmem %s0, 144
  %v972 = vld [vmem:[%s971] sm:$0xff]
  %v973 = vld [vmem:[%s971 + $0x8] sm:$0xff]
  %v974 = vld [vmem:[%s971 + $0x10] sm:$0xff]
  %v975 = vld [vmem:[%s971 + $0x18] sm:$0xff]
  %v976 = vld [vmem:[%s971 + $0x20] sm:$0xff]
  %v977 = vld [vmem:[%s971 + $0x28] sm:$0xff]
  %978 = vmatprep.subr.mxu0 %v124
  %979 = vmatpush1.msra.mxu0 %v123
  %980 = vmatprep.subr.mxu0 %v118
  %981 = vmatpush1.msra.mxu0 %v117
  %982 = vmatprep.subr.mxu0 %v112
  %983 = vmatpush1.msra.mxu0 %v111
  %984 = vmatprep.subr.mxu0 %v106
  %985 = vmatpush1.msra.mxu0 %v105
  %986 = vmatprep.subr.mxu0 %v100
  %987 = vmatpush1.msra.mxu0 %v99
  %988 = vmatprep.subr.mxu0 %v94
  %989 = vmatpush1.msra.mxu0 %v93
  %990 = vmatprep.subr.mxu0 %v88
  %991 = vmatpush1.msra.mxu0 %v87
  %992 = vmatprep.subr.mxu0 %v82
  %993 = vmatpush1.msra.mxu0 %v81
  %994 = vmatprep.subr.mxu0 %v76
  %995 = vmatpush1.msra.mxu0 %v75
  %996 = vmatprep.subr.mxu0 %v70
  %997 = vmatpush1.msra.mxu0 %v69
  %998 = vmatprep.subr.mxu0 %v64
  %999 = vmatpush1.msra.mxu0 %v63
  %1000 = vmatprep.subr.mxu0 %v58
  %1001 = vmatpush1.msra.mxu0 %v57
  %1002 = vmatprep.subr.mxu0 %v52
  %1003 = vmatpush1.msra.mxu0 %v51
  %1004 = vmatprep.subr.mxu0 %v46
  %1005 = vmatpush1.msra.mxu0 %v45
  %1006 = vmatprep.subr.mxu0 %v40
  %1007 = vmatpush1.msra.mxu0 %v39
  %1008 = vmatprep.subr.mxu0 %v34
  %1009 = vmatpush1.msra.mxu0 %v33
  %1010 = vmatprep.subr.mxu0 0.0
  %1011 = vmatpush2.msra.mxu0 0.0
  %1012 = vmatprep.subr.mxu0 0.0
  %1013 = vmatpush2.msra.mxu0 0.0
  %1014 = vmatprep.subr.mxu0 0.0
  %1015 = vmatpush2.msra.mxu0 0.0
  %1016 = vmatprep.subr.mxu0 0.0
  %1017 = vmatpush2.msra.mxu0 0.0
  %1018 = vmatprep.subr.mxu0 0.0
  %1019 = vmatpush2.msra.mxu0 0.0
  %1020 = vmatprep.subr.mxu0 0.0
  %1021 = vmatpush2.msra.mxu0 0.0
  %1022 = vmatprep.subr.mxu0 0.0
  %1023 = vmatpush2.msra.mxu0 0.0
  %1024 = vmatprep.subr.mxu0 0.0
  %1025 = vmatpush2.msra.mxu0 0.0
  %1026 = vmatprep.subr.mxu0 0.0
  %1027 = vmatpush2.msra.mxu0 0.0
  %1028 = vmatprep.subr.mxu0 0.0
  %1029 = vmatpush2.msra.mxu0 0.0
  %1030 = vmatprep.subr.mxu0 0.0
  %1031 = vmatpush2.msra.mxu0 0.0
  %1032 = vmatprep.subr.mxu0 0.0
  %1033 = vmatpush2.msra.mxu0 0.0
  %1034 = vmatprep.subr.mxu0 0.0
  %1035 = vmatpush2.msra.mxu0 0.0
  %1036 = vmatprep.subr.mxu0 0.0
  %1037 = vmatpush2.msra.mxu0 0.0
  %1038 = vmatprep.subr.mxu0 0.0
  %1039 = vmatpush2.msra.mxu0 0.0
  %1040 = vmatprep.subr.mxu0 0.0
  %1041 = vmatpush2.msra.mxu0 0.0
  %1042 = vmatprep.mubr.f32.mxu0 0.0
  %1043 = vmatmul.mubr.f32.gmra.mxu0 %v970
  %v1044 = vpop.f32.mrf.mxu0
  %v1045 = vadd.f32 0.0, %v1044
  %v1046 = vpop.f32.mrf.mxu0
  %v1047 = vadd.f32 0.0, %v1046
  %1048 = vdwg.mxu0
  %1049 = vmatprep.subr.mxu0 %v126
  %1050 = vmatpush1.msra.mxu0 %v125
  %1051 = vmatprep.subr.mxu0 %v120
  %1052 = vmatpush1.msra.mxu0 %v119
  %1053 = vmatprep.subr.mxu0 %v114
  %1054 = vmatpush1.msra.mxu0 %v113
  %1055 = vmatprep.subr.mxu0 %v108
  %1056 = vmatpush1.msra.mxu0 %v107
  %1057 = vmatprep.subr.mxu0 %v102
  %1058 = vmatpush1.msra.mxu0 %v101
  %1059 = vmatprep.subr.mxu0 %v96
  %1060 = vmatpush1.msra.mxu0 %v95
  %1061 = vmatprep.subr.mxu0 %v90
  %1062 = vmatpush1.msra.mxu0 %v89
  %1063 = vmatprep.subr.mxu0 %v84
  %1064 = vmatpush1.msra.mxu0 %v83
  %1065 = vmatprep.subr.mxu0 %v78
  %1066 = vmatpush1.msra.mxu0 %v77
  %1067 = vmatprep.subr.mxu0 %v72
  %1068 = vmatpush1.msra.mxu0 %v71
  %1069 = vmatprep.subr.mxu0 %v66
  %1070 = vmatpush1.msra.mxu0 %v65
  %1071 = vmatprep.subr.mxu0 %v60
  %1072 = vmatpush1.msra.mxu0 %v59
  %1073 = vmatprep.subr.mxu0 %v54
  %1074 = vmatpush1.msra.mxu0 %v53
  %1075 = vmatprep.subr.mxu0 %v48
  %1076 = vmatpush1.msra.mxu0 %v47
  %1077 = vmatprep.subr.mxu0 %v42
  %1078 = vmatpush1.msra.mxu0 %v41
  %1079 = vmatprep.subr.mxu0 %v36
  %1080 = vmatpush1.msra.mxu0 %v35
  %1081 = vmatprep.subr.mxu0 0.0
  %1082 = vmatpush2.msra.mxu0 0.0
  %1083 = vmatprep.subr.mxu0 0.0
  %1084 = vmatpush2.msra.mxu0 0.0
  %1085 = vmatprep.subr.mxu0 0.0
  %1086 = vmatpush2.msra.mxu0 0.0
  %1087 = vmatprep.subr.mxu0 0.0
  %1088 = vmatpush2.msra.mxu0 0.0
  %1089 = vmatprep.subr.mxu0 0.0
  %1090 = vmatpush2.msra.mxu0 0.0
  %1091 = vmatprep.subr.mxu0 0.0
  %1092 = vmatpush2.msra.mxu0 0.0
  %1093 = vmatprep.subr.mxu0 0.0
  %1094 = vmatpush2.msra.mxu0 0.0
  %1095 = vmatprep.subr.mxu0 0.0
  %1096 = vmatpush2.msra.mxu0 0.0
  %1097 = vmatprep.subr.mxu0 0.0
  %1098 = vmatpush2.msra.mxu0 0.0
  %1099 = vmatprep.subr.mxu0 0.0
  %1100 = vmatpush2.msra.mxu0 0.0
  %1101 = vmatprep.subr.mxu0 0.0
  %1102 = vmatpush2.msra.mxu0 0.0
  %1103 = vmatprep.subr.mxu0 0.0
  %1104 = vmatpush2.msra.mxu0 0.0
  %1105 = vmatprep.subr.mxu0 0.0
  %1106 = vmatpush2.msra.mxu0 0.0
  %1107 = vmatprep.subr.mxu0 0.0
  %1108 = vmatpush2.msra.mxu0 0.0
  %1109 = vmatprep.subr.mxu0 0.0
  %1110 = vmatpush2.msra.mxu0 0.0
  %1111 = vmatprep.subr.mxu0 0.0
  %1112 = vmatpush2.msra.mxu0 0.0
  %1113 = vmatprep.mubr.f32.mxu0 0.0
  %1114 = vmatmul.mubr.f32.gmra.mxu0 %v970
  %v1115 = vpop.f32.mrf.mxu0
  %v1116 = vadd.f32 0.0, %v1115
  %v1117 = vpop.f32.mrf.mxu0
  %v1118 = vadd.f32 0.0, %v1117
  %1119 = vdwg.mxu0
  %1120 = vmatprep.subr.mxu0 %v128
  %1121 = vmatpush1.msra.mxu0 %v127
  %1122 = vmatprep.subr.mxu0 %v122
  %1123 = vmatpush1.msra.mxu0 %v121
  %1124 = vmatprep.subr.mxu0 %v116
  %1125 = vmatpush1.msra.mxu0 %v115
  %1126 = vmatprep.subr.mxu0 %v110
  %1127 = vmatpush1.msra.mxu0 %v109
  %1128 = vmatprep.subr.mxu0 %v104
  %1129 = vmatpush1.msra.mxu0 %v103
  %1130 = vmatprep.subr.mxu0 %v98
  %1131 = vmatpush1.msra.mxu0 %v97
  %1132 = vmatprep.subr.mxu0 %v92
  %1133 = vmatpush1.msra.mxu0 %v91
  %1134 = vmatprep.subr.mxu0 %v86
  %1135 = vmatpush1.msra.mxu0 %v85
  %1136 = vmatprep.subr.mxu0 %v80
  %1137 = vmatpush1.msra.mxu0 %v79
  %1138 = vmatprep.subr.mxu0 %v74
  %1139 = vmatpush1.msra.mxu0 %v73
  %1140 = vmatprep.subr.mxu0 %v68
  %1141 = vmatpush1.msra.mxu0 %v67
  %1142 = vmatprep.subr.mxu0 %v62
  %1143 = vmatpush1.msra.mxu0 %v61
  %1144 = vmatprep.subr.mxu0 %v56
  %1145 = vmatpush1.msra.mxu0 %v55
  %1146 = vmatprep.subr.mxu0 %v50
  %1147 = vmatpush1.msra.mxu0 %v49
  %1148 = vmatprep.subr.mxu0 %v44
  %1149 = vmatpush1.msra.mxu0 %v43
  %1150 = vmatprep.subr.mxu0 %v38
  %1151 = vmatpush1.msra.mxu0 %v37
  %1152 = vmatprep.subr.mxu0 0.0
  %1153 = vmatpush2.msra.mxu0 0.0
  %1154 = vmatprep.subr.mxu0 0.0
  %1155 = vmatpush2.msra.mxu0 0.0
  %1156 = vmatprep.subr.mxu0 0.0
  %1157 = vmatpush2.msra.mxu0 0.0
  %1158 = vmatprep.subr.mxu0 0.0
  %1159 = vmatpush2.msra.mxu0 0.0
  %1160 = vmatprep.subr.mxu0 0.0
  %1161 = vmatpush2.msra.mxu0 0.0
  %1162 = vmatprep.subr.mxu0 0.0
  %1163 = vmatpush2.msra.mxu0 0.0
  %1164 = vmatprep.subr.mxu0 0.0
  %1165 = vmatpush2.msra.mxu0 0.0
  %1166 = vmatprep.subr.mxu0 0.0
  %1167 = vmatpush2.msra.mxu0 0.0
  %1168 = vmatprep.subr.mxu0 0.0
  %1169 = vmatpush2.msra.mxu0 0.0
  %1170 = vmatprep.subr.mxu0 0.0
  %1171 = vmatpush2.msra.mxu0 0.0
  %1172 = vmatprep.subr.mxu0 0.0
  %1173 = vmatpush2.msra.mxu0 0.0
  %1174 = vmatprep.subr.mxu0 0.0
  %1175 = vmatpush2.msra.mxu0 0.0
  %1176 = vmatprep.subr.mxu0 0.0
  %1177 = vmatpush2.msra.mxu0 0.0
  %1178 = vmatprep.subr.mxu0 0.0
  %1179 = vmatpush2.msra.mxu0 0.0
  %1180 = vmatprep.subr.mxu0 0.0
  %1181 = vmatpush2.msra.mxu0 0.0
  %1182 = vmatprep.subr.mxu0 0.0
  %1183 = vmatpush2.msra.mxu0 0.0
  %1184 = vmatprep.mubr.f32.mxu0 0.0
  %1185 = vmatmul.mubr.f32.gmra.mxu0 %v970
  %v1186 = vpop.f32.mrf.mxu0
  %v1187 = vadd.f32 0.0, %v1186
  %v1188 = vpop.f32.mrf.mxu0
  %v1189 = vadd.f32 0.0, %v1188
  %1190 = vdwg.mxu0
  %v1191 = vadd.f32 %v972, %v1045
  %v1192 = vadd.f32 %v973, %v1047
  %v1193 = vadd.f32 %v974, %v1116
  %v1194 = vadd.f32 %v975, %v1118
  %v1195 = vadd.f32 %v976, %v1187
  %v1196 = vadd.f32 %v977, %v1189
  %v1197 = vxor.u32 %v1191, 2147483648
  %v1198 = vmul.f32 %v1197, 1.442695
  %v1199 = vpow.pop %v1198
  %v1200 = vadd.f32 %v1199, 1.0
  %v1201 = vrcp.pop %v1200
  %v1202 = vmul.f32 1.0, %v1201
  %v1203 = vxor.u32 %v1192, 2147483648
  %v1204 = vmul.f32 %v1203, 1.442695
  %v1205 = vpow.pop %v1204
  %v1206 = vadd.f32 %v1205, 1.0
  %v1207 = vrcp.pop %v1206
  %v1208 = vmul.f32 1.0, %v1207
  %v1209 = vtanh.pop %v1193
  %v1210 = vxor.u32 %v1194, 2147483648
  %v1211 = vmul.f32 %v1210, 1.442695
  %v1212 = vpow.pop %v1211
  %v1213 = vadd.f32 %v1212, 1.0
  %v1214 = vrcp.pop %v1213
  %v1215 = vmul.f32 1.0, %v1214
  %v1216 = vxor.u32 %v1195, 2147483648
  %v1217 = vmul.f32 %v1216, 1.442695
  %v1218 = vpow.pop %v1217
  %v1219 = vadd.f32 %v1218, 1.0
  %v1220 = vrcp.pop %v1219
  %v1221 = vmul.f32 1.0, %v1220
  %v1222 = vtanh.pop %v1196
  %v1223 = vmul.f32 %v1202, %v1209
  %v1224 = vmul.f32 %v1221, %v1222
  %v1225 = vmul.f32 %v1223, %v388
  %1226 = vadd.xlane.f32.xlu0 %v1225
  %v1227 = vpop.xlane.xlu0 %1226
  %v1228 = vadd.f32 %v1227, %v393
  %v1229 = vtanh.pop %v1228
  %v1230 = vmul.f32 %v1224, %v388
  %1231 = vadd.xlane.f32.xlu0 %v1230
  %v1232 = vpop.xlane.xlu0 %1231
  %v1233 = vadd.f32 %v1232, %v393
  %v1234 = vtanh.pop %v1233
  %v1235 = vsub.f32 %v1229, %v1234
  %v1236 = vxor.u32 %v1235, 2147483648
  %v1237 = vmul.f32 %v1236, 1.442695
  %v1238 = vpow.pop %v1237
  %v1239 = vadd.f32 %v1238, 1.0
  %v1240 = vrcp.pop %v1239
  %v1241 = vmul.f32 1.0, %v1240
  %v1242 = vsub.f32 %v1223, %v1224
  %v1243 = vmul.f32 %v1241, %v1242
  %v1244 = vadd.f32 %v1224, %v1243
  %v1245 = vmul.f32 %v1208, %v968
  %v1246 = vadd.f32 %v1245, %v1244
  %v1247 = vtanh.pop %v1246
  %v1248 = vmul.f32 %v1215, %v1247
  // Predicated region
  $region30: #{milstm_forward.3} parent=0 // pred_check
    %p1249 = pneg %p24
  $region31: #{milstm_forward.3} parent=0 // pred_check_branch
    %1251 = sbr.rel (%p1249) target = $region33
  $region32: #{milstm_forward.3} parent=0 // pred_region
    %1252 = vst [vmem:[#allocation4 - $0x1] sm:$0x2] %v1248
  $region33: #{milstm_forward.3} parent=0 // pred_fallthru
    _
  %s1253 = scalar_lea.vmem %s0, 192
  %v1254 = vld [vmem:[%s1253] sm:$0xff]
  %v1255 = vld [vmem:[%s1253 + $0x8] sm:$0xff]
  %v1256 = vld [vmem:[%s1253 + $0x10] sm:$0xff]
  %v1257 = vld [vmem:[%s1253 + $0x18] sm:$0xff]
  %v1258 = vld [vmem:[%s1253 + $0x20] sm:$0xff]
  %v1259 = vld [vmem:[%s1253 + $0x28] sm:$0xff]
  %1260 = vmatprep.subr.mxu0 %v124
  %1261 = vmatpush1.msra.mxu0 %v123
  %1262 = vmatprep.subr.mxu0 %v118
  %1263 = vmatpush1.msra.mxu0 %v117
  %1264 = vmatprep.subr.mxu0 %v112
  %1265 = vmatpush1.msra.mxu0 %v111
  %1266 = vmatprep.subr.mxu0 %v106
  %1267 = vmatpush1.msra.mxu0 %v105
  %1268 = vmatprep.subr.mxu0 %v100
  %1269 = vmatpush1.msra.mxu0 %v99
  %1270 = vmatprep.subr.mxu0 %v94
  %1271 = vmatpush1.msra.mxu0 %v93
  %1272 = vmatprep.subr.mxu0 %v88
  %1273 = vmatpush1.msra.mxu0 %v87
  %1274 = vmatprep.subr.mxu0 %v82
  %1275 = vmatpush1.msra.mxu0 %v81
  %1276 = vmatprep.subr.mxu0 %v76
  %1277 = vmatpush1.msra.mxu0 %v75
  %1278 = vmatprep.subr.mxu0 %v70
  %1279 = vmatpush1.msra.mxu0 %v69
  %1280 = vmatprep.subr.mxu0 %v64
  %1281 = vmatpush1.msra.mxu0 %v63
  %1282 = vmatprep.subr.mxu0 %v58
  %1283 = vmatpush1.msra.mxu0 %v57
  %1284 = vmatprep.subr.mxu0 %v52
  %1285 = vmatpush1.msra.mxu0 %v51
  %1286 = vmatprep.subr.mxu0 %v46
  %1287 = vmatpush1.msra.mxu0 %v45
  %1288 = vmatprep.subr.mxu0 %v40
  %1289 = vmatpush1.msra.mxu0 %v39
  %1290 = vmatprep.subr.mxu0 %v34
  %1291 = vmatpush1.msra.mxu0 %v33
  %1292 = vmatprep.subr.mxu0 0.0
  %1293 = vmatpush2.msra.mxu0 0.0
  %1294 = vmatprep.subr.mxu0 0.0
  %1295 = vmatpush2.msra.mxu0 0.0
  %1296 = vmatprep.subr.mxu0 0.0
  %1297 = vmatpush2.msra.mxu0 0.0
  %1298 = vmatprep.subr.mxu0 0.0
  %1299 = vmatpush2.msra.mxu0 0.0
  %1300 = vmatprep.subr.mxu0 0.0
  %1301 = vmatpush2.msra.mxu0 0.0
  %1302 = vmatprep.subr.mxu0 0.0
  %1303 = vmatpush2.msra.mxu0 0.0
  %1304 = vmatprep.subr.mxu0 0.0
  %1305 = vmatpush2.msra.mxu0 0.0
  %1306 = vmatprep.subr.mxu0 0.0
  %1307 = vmatpush2.msra.mxu0 0.0
  %1308 = vmatprep.subr.mxu0 0.0
  %1309 = vmatpush2.msra.mxu0 0.0
  %1310 = vmatprep.subr.mxu0 0.0
  %1311 = vmatpush2.msra.mxu0 0.0
  %1312 = vmatprep.subr.mxu0 0.0
  %1313 = vmatpush2.msra.mxu0 0.0
  %1314 = vmatprep.subr.mxu0 0.0
  %1315 = vmatpush2.msra.mxu0 0.0
  %1316 = vmatprep.subr.mxu0 0.0
  %1317 = vmatpush2.msra.mxu0 0.0
  %1318 = vmatprep.subr.mxu0 0.0
  %1319 = vmatpush2.msra.mxu0 0.0
  %1320 = vmatprep.subr.mxu0 0.0
  %1321 = vmatpush2.msra.mxu0 0.0
  %1322 = vmatprep.subr.mxu0 0.0
  %1323 = vmatpush2.msra.mxu0 0.0
  %1324 = vmatprep.mubr.f32.mxu0 0.0
  %1325 = vmatmul.mubr.f32.gmra.mxu0 %v1248
  %v1326 = vpop.f32.mrf.mxu0
  %v1327 = vadd.f32 0.0, %v1326
  %v1328 = vpop.f32.mrf.mxu0
  %v1329 = vadd.f32 0.0, %v1328
  %1330 = vdwg.mxu0
  %1331 = vmatprep.subr.mxu0 %v126
  %1332 = vmatpush1.msra.mxu0 %v125
  %1333 = vmatprep.subr.mxu0 %v120
  %1334 = vmatpush1.msra.mxu0 %v119
  %1335 = vmatprep.subr.mxu0 %v114
  %1336 = vmatpush1.msra.mxu0 %v113
  %1337 = vmatprep.subr.mxu0 %v108
  %1338 = vmatpush1.msra.mxu0 %v107
  %1339 = vmatprep.subr.mxu0 %v102
  %1340 = vmatpush1.msra.mxu0 %v101
  %1341 = vmatprep.subr.mxu0 %v96
  %1342 = vmatpush1.msra.mxu0 %v95
  %1343 = vmatprep.subr.mxu0 %v90
  %1344 = vmatpush1.msra.mxu0 %v89
  %1345 = vmatprep.subr.mxu0 %v84
  %1346 = vmatpush1.msra.mxu0 %v83
  %1347 = vmatprep.subr.mxu0 %v78
  %1348 = vmatpush1.msra.mxu0 %v77
  %1349 = vmatprep.subr.mxu0 %v72
  %1350 = vmatpush1.msra.mxu0 %v71
  %1351 = vmatprep.subr.mxu0 %v66
  %1352 = vmatpush1.msra.mxu0 %v65
  %1353 = vmatprep.subr.mxu0 %v60
  %1354 = vmatpush1.msra.mxu0 %v59
  %1355 = vmatprep.subr.mxu0 %v54
  %1356 = vmatpush1.msra.mxu0 %v53
  %1357 = vmatprep.subr.mxu0 %v48
  %1358 = vmatpush1.msra.mxu0 %v47
  %1359 = vmatprep.subr.mxu0 %v42
  %1360 = vmatpush1.msra.mxu0 %v41
  %1361 = vmatprep.subr.mxu0 %v36
  %1362 = vmatpush1.msra.mxu0 %v35
  %1363 = vmatprep.subr.mxu0 0.0
  %1364 = vmatpush2.msra.mxu0 0.0
  %1365 = vmatprep.subr.mxu0 0.0
  %1366 = vmatpush2.msra.mxu0 0.0
  %1367 = vmatprep.subr.mxu0 0.0
  %1368 = vmatpush2.msra.mxu0 0.0
  %1369 = vmatprep.subr.mxu0 0.0
  %1370 = vmatpush2.msra.mxu0 0.0
  %1371 = vmatprep.subr.mxu0 0.0
  %1372 = vmatpush2.msra.mxu0 0.0
  %1373 = vmatprep.subr.mxu0 0.0
  %1374 = vmatpush2.msra.mxu0 0.0
  %1375 = vmatprep.subr.mxu0 0.0
  %1376 = vmatpush2.msra.mxu0 0.0
  %1377 = vmatprep.subr.mxu0 0.0
  %1378 = vmatpush2.msra.mxu0 0.0
  %1379 = vmatprep.subr.mxu0 0.0
  %1380 = vmatpush2.msra.mxu0 0.0
  %1381 = vmatprep.subr.mxu0 0.0
  %1382 = vmatpush2.msra.mxu0 0.0
  %1383 = vmatprep.subr.mxu0 0.0
  %1384 = vmatpush2.msra.mxu0 0.0
  %1385 = vmatprep.subr.mxu0 0.0
  %1386 = vmatpush2.msra.mxu0 0.0
  %1387 = vmatprep.subr.mxu0 0.0
  %1388 = vmatpush2.msra.mxu0 0.0
  %1389 = vmatprep.subr.mxu0 0.0
  %1390 = vmatpush2.msra.mxu0 0.0
  %1391 = vmatprep.subr.mxu0 0.0
  %1392 = vmatpush2.msra.mxu0 0.0
  %1393 = vmatprep.subr.mxu0 0.0
  %1394 = vmatpush2.msra.mxu0 0.0
  %1395 = vmatprep.mubr.f32.mxu0 0.0
  %1396 = vmatmul.mubr.f32.gmra.mxu0 %v1248
  %v1397 = vpop.f32.mrf.mxu0
  %v1398 = vadd.f32 0.0, %v1397
  %v1399 = vpop.f32.mrf.mxu0
  %v1400 = vadd.f32 0.0, %v1399
  %1401 = vdwg.mxu0
  %1402 = vmatprep.subr.mxu0 %v128
  %1403 = vmatpush1.msra.mxu0 %v127
  %1404 = vmatprep.subr.mxu0 %v122
  %1405 = vmatpush1.msra.mxu0 %v121
  %1406 = vmatprep.subr.mxu0 %v116
  %1407 = vmatpush1.msra.mxu0 %v115
  %1408 = vmatprep.subr.mxu0 %v110
  %1409 = vmatpush1.msra.mxu0 %v109
  %1410 = vmatprep.subr.mxu0 %v104
  %1411 = vmatpush1.msra.mxu0 %v103
  %1412 = vmatprep.subr.mxu0 %v98
  %1413 = vmatpush1.msra.mxu0 %v97
  %1414 = vmatprep.subr.mxu0 %v92
  %1415 = vmatpush1.msra.mxu0 %v91
  %1416 = vmatprep.subr.mxu0 %v86
  %1417 = vmatpush1.msra.mxu0 %v85
  %1418 = vmatprep.subr.mxu0 %v80
  %1419 = vmatpush1.msra.mxu0 %v79
  %1420 = vmatprep.subr.mxu0 %v74
  %1421 = vmatpush1.msra.mxu0 %v73
  %1422 = vmatprep.subr.mxu0 %v68
  %1423 = vmatpush1.msra.mxu0 %v67
  %1424 = vmatprep.subr.mxu0 %v62
  %1425 = vmatpush1.msra.mxu0 %v61
  %1426 = vmatprep.subr.mxu0 %v56
  %1427 = vmatpush1.msra.mxu0 %v55
  %1428 = vmatprep.subr.mxu0 %v50
  %1429 = vmatpush1.msra.mxu0 %v49
  %1430 = vmatprep.subr.mxu0 %v44
  %1431 = vmatpush1.msra.mxu0 %v43
  %1432 = vmatprep.subr.mxu0 %v38
  %1433 = vmatpush1.msra.mxu0 %v37
  %1434 = vmatprep.subr.mxu0 0.0
  %1435 = vmatpush2.msra.mxu0 0.0
  %1436 = vmatprep.subr.mxu0 0.0
  %1437 = vmatpush2.msra.mxu0 0.0
  %1438 = vmatprep.subr.mxu0 0.0
  %1439 = vmatpush2.msra.mxu0 0.0
  %1440 = vmatprep.subr.mxu0 0.0
  %1441 = vmatpush2.msra.mxu0 0.0
  %1442 = vmatprep.subr.mxu0 0.0
  %1443 = vmatpush2.msra.mxu0 0.0
  %1444 = vmatprep.subr.mxu0 0.0
  %1445 = vmatpush2.msra.mxu0 0.0
  %1446 = vmatprep.subr.mxu0 0.0
  %1447 = vmatpush2.msra.mxu0 0.0
  %1448 = vmatprep.subr.mxu0 0.0
  %1449 = vmatpush2.msra.mxu0 0.0
  %1450 = vmatprep.subr.mxu0 0.0
  %1451 = vmatpush2.msra.mxu0 0.0
  %1452 = vmatprep.subr.mxu0 0.0
  %1453 = vmatpush2.msra.mxu0 0.0
  %1454 = vmatprep.subr.mxu0 0.0
  %1455 = vmatpush2.msra.mxu0 0.0
  %1456 = vmatprep.subr.mxu0 0.0
  %1457 = vmatpush2.msra.mxu0 0.0
  %1458 = vmatprep.subr.mxu0 0.0
  %1459 = vmatpush2.msra.mxu0 0.0
  %1460 = vmatprep.subr.mxu0 0.0
  %1461 = vmatpush2.msra.mxu0 0.0
  %1462 = vmatprep.subr.mxu0 0.0
  %1463 = vmatpush2.msra.mxu0 0.0
  %1464 = vmatprep.subr.mxu0 0.0
  %1465 = vmatpush2.msra.mxu0 0.0
  %1466 = vmatprep.mubr.f32.mxu0 0.0
  %1467 = vmatmul.mubr.f32.gmra.mxu0 %v1248
  %v1468 = vpop.f32.mrf.mxu0
  %v1469 = vadd.f32 0.0, %v1468
  %v1470 = vpop.f32.mrf.mxu0
  %v1471 = vadd.f32 0.0, %v1470
  %1472 = vdwg.mxu0
  %v1473 = vadd.f32 %v1254, %v1327
  %v1474 = vadd.f32 %v1255, %v1329
  %v1475 = vadd.f32 %v1256, %v1398
  %v1476 = vadd.f32 %v1257, %v1400
  %v1477 = vadd.f32 %v1258, %v1469
  %v1478 = vadd.f32 %v1259, %v1471
  %v1479 = vxor.u32 %v1473, 2147483648
  %v1480 = vmul.f32 %v1479, 1.442695
  %v1481 = vpow.pop %v1480
  %v1482 = vadd.f32 %v1481, 1.0
  %v1483 = vrcp.pop %v1482
  %v1484 = vmul.f32 1.0, %v1483
  %v1485 = vxor.u32 %v1474, 2147483648
  %v1486 = vmul.f32 %v1485, 1.442695
  %v1487 = vpow.pop %v1486
  %v1488 = vadd.f32 %v1487, 1.0
  %v1489 = vrcp.pop %v1488
  %v1490 = vmul.f32 1.0, %v1489
  %v1491 = vtanh.pop %v1475
  %v1492 = vxor.u32 %v1476, 2147483648
  %v1493 = vmul.f32 %v1492, 1.442695
  %v1494 = vpow.pop %v1493
  %v1495 = vadd.f32 %v1494, 1.0
  %v1496 = vrcp.pop %v1495
  %v1497 = vmul.f32 1.0, %v1496
  %v1498 = vxor.u32 %v1477, 2147483648
  %v1499 = vmul.f32 %v1498, 1.442695
  %v1500 = vpow.pop %v1499
  %v1501 = vadd.f32 %v1500, 1.0
  %v1502 = vrcp.pop %v1501
  %v1503 = vmul.f32 1.0, %v1502
  %v1504 = vtanh.pop %v1478
  %v1505 = vmul.f32 %v1484, %v1491
  %v1506 = vmul.f32 %v1503, %v1504
  %v1507 = vmul.f32 %v1505, %v388
  %1508 = vadd.xlane.f32.xlu0 %v1507
  %v1509 = vpop.xlane.xlu0 %1508
  %v1510 = vadd.f32 %v1509, %v393
  %v1511 = vtanh.pop %v1510
  %v1512 = vmul.f32 %v1506, %v388
  %1513 = vadd.xlane.f32.xlu0 %v1512
  %v1514 = vpop.xlane.xlu0 %1513
  %v1515 = vadd.f32 %v1514, %v393
  %v1516 = vtanh.pop %v1515
  %v1517 = vsub.f32 %v1511, %v1516
  %v1518 = vxor.u32 %v1517, 2147483648
  %v1519 = vmul.f32 %v1518, 1.442695
  %v1520 = vpow.pop %v1519
  %v1521 = vadd.f32 %v1520, 1.0
  %v1522 = vrcp.pop %v1521
  %v1523 = vmul.f32 1.0, %v1522
  %v1524 = vsub.f32 %v1505, %v1506
  %v1525 = vmul.f32 %v1523, %v1524
  %v1526 = vadd.f32 %v1506, %v1525
  %v1527 = vmul.f32 %v1490, %v1246
  %v1528 = vadd.f32 %v1527, %v1526
  %v1529 = vtanh.pop %v1528
  %v1530 = vmul.f32 %v1497, %v1529
  %s1531 = scalar_lea.vmem %s0, 240
  %v1532 = vld [vmem:[%s1531] sm:$0xff]
  %v1533 = vld [vmem:[%s1531 + $0x8] sm:$0xff]
  %v1534 = vld [vmem:[%s1531 + $0x10] sm:$0xff]
  %v1535 = vld [vmem:[%s1531 + $0x18] sm:$0xff]
  %v1536 = vld [vmem:[%s1531 + $0x20] sm:$0xff]
  %v1537 = vld [vmem:[%s1531 + $0x28] sm:$0xff]
  %1538 = vmatprep.subr.mxu0 %v124
  %1539 = vmatpush1.msra.mxu0 %v123
  %1540 = vmatprep.subr.mxu0 %v118
  %1541 = vmatpush1.msra.mxu0 %v117
  %1542 = vmatprep.subr.mxu0 %v112
  %1543 = vmatpush1.msra.mxu0 %v111
  %1544 = vmatprep.subr.mxu0 %v106
  %1545 = vmatpush1.msra.mxu0 %v105
  %1546 = vmatprep.subr.mxu0 %v100
  %1547 = vmatpush1.msra.mxu0 %v99
  %1548 = vmatprep.subr.mxu0 %v94
  %1549 = vmatpush1.msra.mxu0 %v93
  %1550 = vmatprep.subr.mxu0 %v88
  %1551 = vmatpush1.msra.mxu0 %v87
  %1552 = vmatprep.subr.mxu0 %v82
  %1553 = vmatpush1.msra.mxu0 %v81
  %1554 = vmatprep.subr.mxu0 %v76
  %1555 = vmatpush1.msra.mxu0 %v75
  %1556 = vmatprep.subr.mxu0 %v70
  %1557 = vmatpush1.msra.mxu0 %v69
  %1558 = vmatprep.subr.mxu0 %v64
  %1559 = vmatpush1.msra.mxu0 %v63
  %1560 = vmatprep.subr.mxu0 %v58
  %1561 = vmatpush1.msra.mxu0 %v57
  %1562 = vmatprep.subr.mxu0 %v52
  %1563 = vmatpush1.msra.mxu0 %v51
  %1564 = vmatprep.subr.mxu0 %v46
  %1565 = vmatpush1.msra.mxu0 %v45
  %1566 = vmatprep.subr.mxu0 %v40
  %1567 = vmatpush1.msra.mxu0 %v39
  %1568 = vmatprep.subr.mxu0 %v34
  %1569 = vmatpush1.msra.mxu0 %v33
  %1570 = vmatprep.subr.mxu0 0.0
  %1571 = vmatpush2.msra.mxu0 0.0
  %1572 = vmatprep.subr.mxu0 0.0
  %1573 = vmatpush2.msra.mxu0 0.0
  %1574 = vmatprep.subr.mxu0 0.0
  %1575 = vmatpush2.msra.mxu0 0.0
  %1576 = vmatprep.subr.mxu0 0.0
  %1577 = vmatpush2.msra.mxu0 0.0
  %1578 = vmatprep.subr.mxu0 0.0
  %1579 = vmatpush2.msra.mxu0 0.0
  %1580 = vmatprep.subr.mxu0 0.0
  %1581 = vmatpush2.msra.mxu0 0.0
  %1582 = vmatprep.subr.mxu0 0.0
  %1583 = vmatpush2.msra.mxu0 0.0
  %1584 = vmatprep.subr.mxu0 0.0
  %1585 = vmatpush2.msra.mxu0 0.0
  %1586 = vmatprep.subr.mxu0 0.0
  %1587 = vmatpush2.msra.mxu0 0.0
  %1588 = vmatprep.subr.mxu0 0.0
  %1589 = vmatpush2.msra.mxu0 0.0
  %1590 = vmatprep.subr.mxu0 0.0
  %1591 = vmatpush2.msra.mxu0 0.0
  %1592 = vmatprep.subr.mxu0 0.0
  %1593 = vmatpush2.msra.mxu0 0.0
  %1594 = vmatprep.subr.mxu0 0.0
  %1595 = vmatpush2.msra.mxu0 0.0
  %1596 = vmatprep.subr.mxu0 0.0
  %1597 = vmatpush2.msra.mxu0 0.0
  %1598 = vmatprep.subr.mxu0 0.0
  %1599 = vmatpush2.msra.mxu0 0.0
  %1600 = vmatprep.subr.mxu0 0.0
  %1601 = vmatpush2.msra.mxu0 0.0
  %1602 = vmatprep.mubr.f32.mxu0 0.0
  %1603 = vmatmul.mubr.f32.gmra.mxu0 %v1530
  %v1604 = vpop.f32.mrf.mxu0
  %v1605 = vadd.f32 0.0, %v1604
  %v1606 = vpop.f32.mrf.mxu0
  %v1607 = vadd.f32 0.0, %v1606
  %1608 = vdwg.mxu0
  %1609 = vmatprep.subr.mxu0 %v126
  %1610 = vmatpush1.msra.mxu0 %v125
  %1611 = vmatprep.subr.mxu0 %v120
  %1612 = vmatpush1.msra.mxu0 %v119
  %1613 = vmatprep.subr.mxu0 %v114
  %1614 = vmatpush1.msra.mxu0 %v113
  %1615 = vmatprep.subr.mxu0 %v108
  %1616 = vmatpush1.msra.mxu0 %v107
  %1617 = vmatprep.subr.mxu0 %v102
  %1618 = vmatpush1.msra.mxu0 %v101
  %1619 = vmatprep.subr.mxu0 %v96
  %1620 = vmatpush1.msra.mxu0 %v95
  %1621 = vmatprep.subr.mxu0 %v90
  %1622 = vmatpush1.msra.mxu0 %v89
  %1623 = vmatprep.subr.mxu0 %v84
  %1624 = vmatpush1.msra.mxu0 %v83
  %1625 = vmatprep.subr.mxu0 %v78
  %1626 = vmatpush1.msra.mxu0 %v77
  %1627 = vmatprep.subr.mxu0 %v72
  %1628 = vmatpush1.msra.mxu0 %v71
  %1629 = vmatprep.subr.mxu0 %v66
  %1630 = vmatpush1.msra.mxu0 %v65
  %1631 = vmatprep.subr.mxu0 %v60
  %1632 = vmatpush1.msra.mxu0 %v59
  %1633 = vmatprep.subr.mxu0 %v54
  %1634 = vmatpush1.msra.mxu0 %v53
  %1635 = vmatprep.subr.mxu0 %v48
  %1636 = vmatpush1.msra.mxu0 %v47
  %1637 = vmatprep.subr.mxu0 %v42
  %1638 = vmatpush1.msra.mxu0 %v41
  %1639 = vmatprep.subr.mxu0 %v36
  %1640 = vmatpush1.msra.mxu0 %v35
  %1641 = vmatprep.subr.mxu0 0.0
  %1642 = vmatpush2.msra.mxu0 0.0
  %1643 = vmatprep.subr.mxu0 0.0
  %1644 = vmatpush2.msra.mxu0 0.0
  %1645 = vmatprep.subr.mxu0 0.0
  %1646 = vmatpush2.msra.mxu0 0.0
  %1647 = vmatprep.subr.mxu0 0.0
  %1648 = vmatpush2.msra.mxu0 0.0
  %1649 = vmatprep.subr.mxu0 0.0
  %1650 = vmatpush2.msra.mxu0 0.0
  %1651 = vmatprep.subr.mxu0 0.0
  %1652 = vmatpush2.msra.mxu0 0.0
  %1653 = vmatprep.subr.mxu0 0.0
  %1654 = vmatpush2.msra.mxu0 0.0
  %1655 = vmatprep.subr.mxu0 0.0
  %1656 = vmatpush2.msra.mxu0 0.0
  %1657 = vmatprep.subr.mxu0 0.0
  %1658 = vmatpush2.msra.mxu0 0.0
  %1659 = vmatprep.subr.mxu0 0.0
  %1660 = vmatpush2.msra.mxu0 0.0
  %1661 = vmatprep.subr.mxu0 0.0
  %1662 = vmatpush2.msra.mxu0 0.0
  %1663 = vmatprep.subr.mxu0 0.0
  %1664 = vmatpush2.msra.mxu0 0.0
  %1665 = vmatprep.subr.mxu0 0.0
  %1666 = vmatpush2.msra.mxu0 0.0
  %1667 = vmatprep.subr.mxu0 0.0
  %1668 = vmatpush2.msra.mxu0 0.0
  %1669 = vmatprep.subr.mxu0 0.0
  %1670 = vmatpush2.msra.mxu0 0.0
  %1671 = vmatprep.subr.mxu0 0.0
  %1672 = vmatpush2.msra.mxu0 0.0
  %1673 = vmatprep.mubr.f32.mxu0 0.0
  %1674 = vmatmul.mubr.f32.gmra.mxu0 %v1530
  %v1675 = vpop.f32.mrf.mxu0
  %v1676 = vadd.f32 0.0, %v1675
  %v1677 = vpop.f32.mrf.mxu0
  %v1678 = vadd.f32 0.0, %v1677
  %1679 = vdwg.mxu0
  %1680 = vmatprep.subr.mxu0 %v128
  %1681 = vmatpush1.msra.mxu0 %v127
  %1682 = vmatprep.subr.mxu0 %v122
  %1683 = vmatpush1.msra.mxu0 %v121
  %1684 = vmatprep.subr.mxu0 %v116
  %1685 = vmatpush1.msra.mxu0 %v115
  %1686 = vmatprep.subr.mxu0 %v110
  %1687 = vmatpush1.msra.mxu0 %v109
  %1688 = vmatprep.subr.mxu0 %v104
  %1689 = vmatpush1.msra.mxu0 %v103
  %1690 = vmatprep.subr.mxu0 %v98
  %1691 = vmatpush1.msra.mxu0 %v97
  %1692 = vmatprep.subr.mxu0 %v92
  %1693 = vmatpush1.msra.mxu0 %v91
  %1694 = vmatprep.subr.mxu0 %v86
  %1695 = vmatpush1.msra.mxu0 %v85
  %1696 = vmatprep.subr.mxu0 %v80
  %1697 = vmatpush1.msra.mxu0 %v79
  %1698 = vmatprep.subr.mxu0 %v74
  %1699 = vmatpush1.msra.mxu0 %v73
  %1700 = vmatprep.subr.mxu0 %v68
  %1701 = vmatpush1.msra.mxu0 %v67
  %1702 = vmatprep.subr.mxu0 %v62
  %1703 = vmatpush1.msra.mxu0 %v61
  %1704 = vmatprep.subr.mxu0 %v56
  %1705 = vmatpush1.msra.mxu0 %v55
  %1706 = vmatprep.subr.mxu0 %v50
  %1707 = vmatpush1.msra.mxu0 %v49
  %1708 = vmatprep.subr.mxu0 %v44
  %1709 = vmatpush1.msra.mxu0 %v43
  %1710 = vmatprep.subr.mxu0 %v38
  %1711 = vmatpush1.msra.mxu0 %v37
  %1712 = vmatprep.subr.mxu0 0.0
  %1713 = vmatpush2.msra.mxu0 0.0
  %1714 = vmatprep.subr.mxu0 0.0
  %1715 = vmatpush2.msra.mxu0 0.0
  %1716 = vmatprep.subr.mxu0 0.0
  %1717 = vmatpush2.msra.mxu0 0.0
  %1718 = vmatprep.subr.mxu0 0.0
  %1719 = vmatpush2.msra.mxu0 0.0
  %1720 = vmatprep.subr.mxu0 0.0
  %1721 = vmatpush2.msra.mxu0 0.0
  %1722 = vmatprep.subr.mxu0 0.0
  %1723 = vmatpush2.msra.mxu0 0.0
  %1724 = vmatprep.subr.mxu0 0.0
  %1725 = vmatpush2.msra.mxu0 0.0
  %1726 = vmatprep.subr.mxu0 0.0
  %1727 = vmatpush2.msra.mxu0 0.0
  %1728 = vmatprep.subr.mxu0 0.0
  %1729 = vmatpush2.msra.mxu0 0.0
  %1730 = vmatprep.subr.mxu0 0.0
  %1731 = vmatpush2.msra.mxu0 0.0
  %1732 = vmatprep.subr.mxu0 0.0
  %1733 = vmatpush2.msra.mxu0 0.0
  %1734 = vmatprep.subr.mxu0 0.0
  %1735 = vmatpush2.msra.mxu0 0.0
  %1736 = vmatprep.subr.mxu0 0.0
  %1737 = vmatpush2.msra.mxu0 0.0
  %1738 = vmatprep.subr.mxu0 0.0
  %1739 = vmatpush2.msra.mxu0 0.0
  %1740 = vmatprep.subr.mxu0 0.0
  %1741 = vmatpush2.msra.mxu0 0.0
  %1742 = vmatprep.subr.mxu0 0.0
  %1743 = vmatpush2.msra.mxu0 0.0
  %1744 = vmatprep.mubr.f32.mxu0 0.0
  %1745 = vmatmul.mubr.f32.gmra.mxu0 %v1530
  %v1746 = vpop.f32.mrf.mxu0
  %v1747 = vadd.f32 0.0, %v1746
  %v1748 = vpop.f32.mrf.mxu0
  %v1749 = vadd.f32 0.0, %v1748
  %1750 = vdwg.mxu0
  %v1751 = vadd.f32 %v1532, %v1605
  %v1752 = vadd.f32 %v1533, %v1607
  %v1753 = vadd.f32 %v1534, %v1676
  %v1754 = vadd.f32 %v1535, %v1678
  %v1755 = vadd.f32 %v1536, %v1747
  %v1756 = vadd.f32 %v1537, %v1749
  %v1757 = vxor.u32 %v1751, 2147483648
  %v1758 = vmul.f32 %v1757, 1.442695
  %v1759 = vpow.pop %v1758
  %v1760 = vadd.f32 %v1759, 1.0
  %v1761 = vrcp.pop %v1760
  %v1762 = vmul.f32 1.0, %v1761
  %v1763 = vxor.u32 %v1752, 2147483648
  %v1764 = vmul.f32 %v1763, 1.442695
  %v1765 = vpow.pop %v1764
  %v1766 = vadd.f32 %v1765, 1.0
  %v1767 = vrcp.pop %v1766
  %v1768 = vmul.f32 1.0, %v1767
  %v1769 = vtanh.pop %v1753
  %v1770 = vxor.u32 %v1754, 2147483648
  %v1771 = vmul.f32 %v1770, 1.442695
  %v1772 = vpow.pop %v1771
  %v1773 = vadd.f32 %v1772, 1.0
  %v1774 = vrcp.pop %v1773
  %v1775 = vmul.f32 1.0, %v1774
  %v1776 = vxor.u32 %v1755, 2147483648
  %v1777 = vmul.f32 %v1776, 1.442695
  %v1778 = vpow.pop %v1777
  %v1779 = vadd.f32 %v1778, 1.0
  %v1780 = vrcp.pop %v1779
  %v1781 = vmul.f32 1.0, %v1780
  %v1782 = vtanh.pop %v1756
  %v1783 = vmul.f32 %v1762, %v1769
  %v1784 = vmul.f32 %v1781, %v1782
  %v1785 = vmul.f32 %v1783, %v388
  %1786 = vadd.xlane.f32.xlu0 %v1785
  %v1787 = vpop.xlane.xlu0 %1786
  %v1788 = vadd.f32 %v1787, %v393
  %v1789 = vtanh.pop %v1788
  %v1790 = vmul.f32 %v1784, %v388
  %1791 = vadd.xlane.f32.xlu0 %v1790
  %v1792 = vpop.xlane.xlu0 %1791
  %v1793 = vadd.f32 %v1792, %v393
  %v1794 = vtanh.pop %v1793
  %v1795 = vsub.f32 %v1789, %v1794
  %v1796 = vxor.u32 %v1795, 2147483648
  %v1797 = vmul.f32 %v1796, 1.442695
  %v1798 = vpow.pop %v1797
  %v1799 = vadd.f32 %v1798, 1.0
  %v1800 = vrcp.pop %v1799
  %v1801 = vmul.f32 1.0, %v1800
  %v1802 = vsub.f32 %v1783, %v1784
  %v1803 = vmul.f32 %v1801, %v1802
  %v1804 = vadd.f32 %v1784, %v1803
  %v1805 = vmul.f32 %v1768, %v1528
  %v1806 = vadd.f32 %v1805, %v1804
  %v1807 = vtanh.pop %v1806
  %v1808 = vmul.f32 %v1775, %v1807
  %s1809 = scalar_lea.vmem %s0, 288
  %v1810 = vld [vmem:[%s1809] sm:$0xff]
  %v1811 = vld [vmem:[%s1809 + $0x8] sm:$0xff]
  %v1812 = vld [vmem:[%s1809 + $0x10] sm:$0xff]
  %v1813 = vld [vmem:[%s1809 + $0x18] sm:$0xff]
  %v1814 = vld [vmem:[%s1809 + $0x20] sm:$0xff]
  %v1815 = vld [vmem:[%s1809 + $0x28] sm:$0xff]
  %1816 = vmatprep.subr.mxu0 %v124
  %1817 = vmatpush1.msra.mxu0 %v123
  %1818 = vmatprep.subr.mxu0 %v118
  %1819 = vmatpush1.msra.mxu0 %v117
  %1820 = vmatprep.subr.mxu0 %v112
  %1821 = vmatpush1.msra.mxu0 %v111
  %1822 = vmatprep.subr.mxu0 %v106
  %1823 = vmatpush1.msra.mxu0 %v105
  %1824 = vmatprep.subr.mxu0 %v100
  %1825 = vmatpush1.msra.mxu0 %v99
  %1826 = vmatprep.subr.mxu0 %v94
  %1827 = vmatpush1.msra.mxu0 %v93
  %1828 = vmatprep.subr.mxu0 %v88
  %1829 = vmatpush1.msra.mxu0 %v87
  %1830 = vmatprep.subr.mxu0 %v82
  %1831 = vmatpush1.msra.mxu0 %v81
  %1832 = vmatprep.subr.mxu0 %v76
  %1833 = vmatpush1.msra.mxu0 %v75
  %1834 = vmatprep.subr.mxu0 %v70
  %1835 = vmatpush1.msra.mxu0 %v69
  %1836 = vmatprep.subr.mxu0 %v64
  %1837 = vmatpush1.msra.mxu0 %v63
  %1838 = vmatprep.subr.mxu0 %v58
  %1839 = vmatpush1.msra.mxu0 %v57
  %1840 = vmatprep.subr.mxu0 %v52
  %1841 = vmatpush1.msra.mxu0 %v51
  %1842 = vmatprep.subr.mxu0 %v46
  %1843 = vmatpush1.msra.mxu0 %v45
  %1844 = vmatprep.subr.mxu0 %v40
  %1845 = vmatpush1.msra.mxu0 %v39
  %1846 = vmatprep.subr.mxu0 %v34
  %1847 = vmatpush1.msra.mxu0 %v33
  %1848 = vmatprep.subr.mxu0 0.0
  %1849 = vmatpush2.msra.mxu0 0.0
  %1850 = vmatprep.subr.mxu0 0.0
  %1851 = vmatpush2.msra.mxu0 0.0
  %1852 = vmatprep.subr.mxu0 0.0
  %1853 = vmatpush2.msra.mxu0 0.0
  %1854 = vmatprep.subr.mxu0 0.0
  %1855 = vmatpush2.msra.mxu0 0.0
  %1856 = vmatprep.subr.mxu0 0.0
  %1857 = vmatpush2.msra.mxu0 0.0
  %1858 = vmatprep.subr.mxu0 0.0
  %1859 = vmatpush2.msra.mxu0 0.0
  %1860 = vmatprep.subr.mxu0 0.0
  %1861 = vmatpush2.msra.mxu0 0.0
  %1862 = vmatprep.subr.mxu0 0.0
  %1863 = vmatpush2.msra.mxu0 0.0
  %1864 = vmatprep.subr.mxu0 0.0
  %1865 = vmatpush2.msra.mxu0 0.0
  %1866 = vmatprep.subr.mxu0 0.0
  %1867 = vmatpush2.msra.mxu0 0.0
  %1868 = vmatprep.subr.mxu0 0.0
  %1869 = vmatpush2.msra.mxu0 0.0
  %1870 = vmatprep.subr.mxu0 0.0
  %1871 = vmatpush2.msra.mxu0 0.0
  %1872 = vmatprep.subr.mxu0 0.0
  %1873 = vmatpush2.msra.mxu0 0.0
  %1874 = vmatprep.subr.mxu0 0.0
  %1875 = vmatpush2.msra.mxu0 0.0
  %1876 = vmatprep.subr.mxu0 0.0
  %1877 = vmatpush2.msra.mxu0 0.0
  %1878 = vmatprep.subr.mxu0 0.0
  %1879 = vmatpush2.msra.mxu0 0.0
  %1880 = vmatprep.mubr.f32.mxu0 0.0
  %1881 = vmatmul.mubr.f32.gmra.mxu0 %v1808
  %v1882 = vpop.f32.mrf.mxu0
  %v1883 = vadd.f32 0.0, %v1882
  %v1884 = vpop.f32.mrf.mxu0
  %v1885 = vadd.f32 0.0, %v1884
  %1886 = vdwg.mxu0
  %1887 = vmatprep.subr.mxu0 %v126
  %1888 = vmatpush1.msra.mxu0 %v125
  %1889 = vmatprep.subr.mxu0 %v120
  %1890 = vmatpush1.msra.mxu0 %v119
  %1891 = vmatprep.subr.mxu0 %v114
  %1892 = vmatpush1.msra.mxu0 %v113
  %1893 = vmatprep.subr.mxu0 %v108
  %1894 = vmatpush1.msra.mxu0 %v107
  %1895 = vmatprep.subr.mxu0 %v102
  %1896 = vmatpush1.msra.mxu0 %v101
  %1897 = vmatprep.subr.mxu0 %v96
  %1898 = vmatpush1.msra.mxu0 %v95
  %1899 = vmatprep.subr.mxu0 %v90
  %1900 = vmatpush1.msra.mxu0 %v89
  %1901 = vmatprep.subr.mxu0 %v84
  %1902 = vmatpush1.msra.mxu0 %v83
  %1903 = vmatprep.subr.mxu0 %v78
  %1904 = vmatpush1.msra.mxu0 %v77
  %1905 = vmatprep.subr.mxu0 %v72
  %1906 = vmatpush1.msra.mxu0 %v71
  %1907 = vmatprep.subr.mxu0 %v66
  %1908 = vmatpush1.msra.mxu0 %v65
  %1909 = vmatprep.subr.mxu0 %v60
  %1910 = vmatpush1.msra.mxu0 %v59
  %1911 = vmatprep.subr.mxu0 %v54
  %1912 = vmatpush1.msra.mxu0 %v53
  %1913 = vmatprep.subr.mxu0 %v48
  %1914 = vmatpush1.msra.mxu0 %v47
  %1915 = vmatprep.subr.mxu0 %v42
  %1916 = vmatpush1.msra.mxu0 %v41
  %1917 = vmatprep.subr.mxu0 %v36
  %1918 = vmatpush1.msra.mxu0 %v35
  %1919 = vmatprep.subr.mxu0 0.0
  %1920 = vmatpush2.msra.mxu0 0.0
  %1921 = vmatprep.subr.mxu0 0.0
  %1922 = vmatpush2.msra.mxu0 0.0
  %1923 = vmatprep.subr.mxu0 0.0
  %1924 = vmatpush2.msra.mxu0 0.0
  %1925 = vmatprep.subr.mxu0 0.0
  %1926 = vmatpush2.msra.mxu0 0.0
  %1927 = vmatprep.subr.mxu0 0.0
  %1928 = vmatpush2.msra.mxu0 0.0
  %1929 = vmatprep.subr.mxu0 0.0
  %1930 = vmatpush2.msra.mxu0 0.0
  %1931 = vmatprep.subr.mxu0 0.0
  %1932 = vmatpush2.msra.mxu0 0.0
  %1933 = vmatprep.subr.mxu0 0.0
  %1934 = vmatpush2.msra.mxu0 0.0
  %1935 = vmatprep.subr.mxu0 0.0
  %1936 = vmatpush2.msra.mxu0 0.0
  %1937 = vmatprep.subr.mxu0 0.0
  %1938 = vmatpush2.msra.mxu0 0.0
  %1939 = vmatprep.subr.mxu0 0.0
  %1940 = vmatpush2.msra.mxu0 0.0
  %1941 = vmatprep.subr.mxu0 0.0
  %1942 = vmatpush2.msra.mxu0 0.0
  %1943 = vmatprep.subr.mxu0 0.0
  %1944 = vmatpush2.msra.mxu0 0.0
  %1945 = vmatprep.subr.mxu0 0.0
  %1946 = vmatpush2.msra.mxu0 0.0
  %1947 = vmatprep.subr.mxu0 0.0
  %1948 = vmatpush2.msra.mxu0 0.0
  %1949 = vmatprep.subr.mxu0 0.0
  %1950 = vmatpush2.msra.mxu0 0.0
  %1951 = vmatprep.mubr.f32.mxu0 0.0
  %1952 = vmatmul.mubr.f32.gmra.mxu0 %v1808
  %v1953 = vpop.f32.mrf.mxu0
  %v1954 = vadd.f32 0.0, %v1953
  %v1955 = vpop.f32.mrf.mxu0
  %v1956 = vadd.f32 0.0, %v1955
  %1957 = vdwg.mxu0
  %1958 = vmatprep.subr.mxu0 %v128
  %1959 = vmatpush1.msra.mxu0 %v127
  %1960 = vmatprep.subr.mxu0 %v122
  %1961 = vmatpush1.msra.mxu0 %v121
  %1962 = vmatprep.subr.mxu0 %v116
  %1963 = vmatpush1.msra.mxu0 %v115
  %1964 = vmatprep.subr.mxu0 %v110
  %1965 = vmatpush1.msra.mxu0 %v109
  %1966 = vmatprep.subr.mxu0 %v104
  %1967 = vmatpush1.msra.mxu0 %v103
  %1968 = vmatprep.subr.mxu0 %v98
  %1969 = vmatpush1.msra.mxu0 %v97
  %1970 = vmatprep.subr.mxu0 %v92
  %1971 = vmatpush1.msra.mxu0 %v91
  %1972 = vmatprep.subr.mxu0 %v86
  %1973 = vmatpush1.msra.mxu0 %v85
  %1974 = vmatprep.subr.mxu0 %v80
  %1975 = vmatpush1.msra.mxu0 %v79
  %1976 = vmatprep.subr.mxu0 %v74
  %1977 = vmatpush1.msra.mxu0 %v73
  %1978 = vmatprep.subr.mxu0 %v68
  %1979 = vmatpush1.msra.mxu0 %v67
  %1980 = vmatprep.subr.mxu0 %v62
  %1981 = vmatpush1.msra.mxu0 %v61
  %1982 = vmatprep.subr.mxu0 %v56
  %1983 = vmatpush1.msra.mxu0 %v55
  %1984 = vmatprep.subr.mxu0 %v50
  %1985 = vmatpush1.msra.mxu0 %v49
  %1986 = vmatprep.subr.mxu0 %v44
  %1987 = vmatpush1.msra.mxu0 %v43
  %1988 = vmatprep.subr.mxu0 %v38
  %1989 = vmatpush1.msra.mxu0 %v37
  %1990 = vmatprep.subr.mxu0 0.0
  %1991 = vmatpush2.msra.mxu0 0.0
  %1992 = vmatprep.subr.mxu0 0.0
  %1993 = vmatpush2.msra.mxu0 0.0
  %1994 = vmatprep.subr.mxu0 0.0
  %1995 = vmatpush2.msra.mxu0 0.0
  %1996 = vmatprep.subr.mxu0 0.0
  %1997 = vmatpush2.msra.mxu0 0.0
  %1998 = vmatprep.subr.mxu0 0.0
  %1999 = vmatpush2.msra.mxu0 0.0
  %2000 = vmatprep.subr.mxu0 0.0
  %2001 = vmatpush2.msra.mxu0 0.0
  %2002 = vmatprep.subr.mxu0 0.0
  %2003 = vmatpush2.msra.mxu0 0.0
  %2004 = vmatprep.subr.mxu0 0.0
  %2005 = vmatpush2.msra.mxu0 0.0
  %2006 = vmatprep.subr.mxu0 0.0
  %2007 = vmatpush2.msra.mxu0 0.0
  %2008 = vmatprep.subr.mxu0 0.0
  %2009 = vmatpush2.msra.mxu0 0.0
  %2010 = vmatprep.subr.mxu0 0.0
  %2011 = vmatpush2.msra.mxu0 0.0
  %2012 = vmatprep.subr.mxu0 0.0
  %2013 = vmatpush2.msra.mxu0 0.0
  %2014 = vmatprep.subr.mxu0 0.0
  %2015 = vmatpush2.msra.mxu0 0.0
  %2016 = vmatprep.subr.mxu0 0.0
  %2017 = vmatpush2.msra.mxu0 0.0
  %2018 = vmatprep.subr.mxu0 0.0
  %2019 = vmatpush2.msra.mxu0 0.0
  %2020 = vmatprep.subr.mxu0 0.0
  %2021 = vmatpush2.msra.mxu0 0.0
  %2022 = vmatprep.mubr.f32.mxu0 0.0
  %2023 = vmatmul.mubr.f32.gmra.mxu0 %v1808
  %v2024 = vpop.f32.mrf.mxu0
  %v2025 = vadd.f32 0.0, %v2024
  %v2026 = vpop.f32.mrf.mxu0
  %v2027 = vadd.f32 0.0, %v2026
  %2028 = vdwg.mxu0
  %v2029 = vadd.f32 %v1810, %v1883
  %v2030 = vadd.f32 %v1811, %v1885
  %v2031 = vadd.f32 %v1812, %v1954
  %v2032 = vadd.f32 %v1813, %v1956
  %v2033 = vadd.f32 %v1814, %v2025
  %v2034 = vadd.f32 %v1815, %v2027
  %v2035 = vxor.u32 %v2029, 2147483648
  %v2036 = vmul.f32 %v2035, 1.442695
  %v2037 = vpow.pop %v2036
  %v2038 = vadd.f32 %v2037, 1.0
  %v2039 = vrcp.pop %v2038
  %v2040 = vmul.f32 1.0, %v2039
  %v2041 = vxor.u32 %v2030, 2147483648
  %v2042 = vmul.f32 %v2041, 1.442695
  %v2043 = vpow.pop %v2042
  %v2044 = vadd.f32 %v2043, 1.0
  %v2045 = vrcp.pop %v2044
  %v2046 = vmul.f32 1.0, %v2045
  %v2047 = vtanh.pop %v2031
  %v2048 = vxor.u32 %v2032, 2147483648
  %v2049 = vmul.f32 %v2048, 1.442695
  %v2050 = vpow.pop %v2049
  %v2051 = vadd.f32 %v2050, 1.0
  %v2052 = vrcp.pop %v2051
  %v2053 = vmul.f32 1.0, %v2052
  %v2054 = vxor.u32 %v2033, 2147483648
  %v2055 = vmul.f32 %v2054, 1.442695
  %v2056 = vpow.pop %v2055
  %v2057 = vadd.f32 %v2056, 1.0
  %v2058 = vrcp.pop %v2057
  %v2059 = vmul.f32 1.0, %v2058
  %v2060 = vtanh.pop %v2034
  %v2061 = vmul.f32 %v2040, %v2047
  %v2062 = vmul.f32 %v2059, %v2060
  %v2063 = vmul.f32 %v2061, %v388
  %2064 = vadd.xlane.f32.xlu0 %v2063
  %v2065 = vpop.xlane.xlu0 %2064
  %v2066 = vadd.f32 %v2065, %v393
  %v2067 = vtanh.pop %v2066
  %v2068 = vmul.f32 %v2062, %v388
  %2069 = vadd.xlane.f32.xlu0 %v2068
  %v2070 = vpop.xlane.xlu0 %2069
  %v2071 = vadd.f32 %v2070, %v393
  %v2072 = vtanh.pop %v2071
  %v2073 = vsub.f32 %v2067, %v2072
  %v2074 = vxor.u32 %v2073, 2147483648
  %v2075 = vmul.f32 %v2074, 1.442695
  %v2076 = vpow.pop %v2075
  %v2077 = vadd.f32 %v2076, 1.0
  %v2078 = vrcp.pop %v2077
  %v2079 = vmul.f32 1.0, %v2078
  %v2080 = vsub.f32 %v2061, %v2062
  %v2081 = vmul.f32 %v2079, %v2080
  %v2082 = vadd.f32 %v2062, %v2081
  %v2083 = vmul.f32 %v2046, %v1806
  %v2084 = vadd.f32 %v2083, %v2082
  %v2085 = vtanh.pop %v2084
  %v2086 = vmul.f32 %v2053, %v2085
  %s2087 = scalar_lea.vmem %s0, 336
  %v2088 = vld [vmem:[%s2087] sm:$0xff]
  %v2089 = vld [vmem:[%s2087 + $0x8] sm:$0xff]
  %v2090 = vld [vmem:[%s2087 + $0x10] sm:$0xff]
  %v2091 = vld [vmem:[%s2087 + $0x18] sm:$0xff]
  %v2092 = vld [vmem:[%s2087 + $0x20] sm:$0xff]
  %v2093 = vld [vmem:[%s2087 + $0x28] sm:$0xff]
  %2094 = vmatprep.subr.mxu0 %v124
  %2095 = vmatpush1.msra.mxu0 %v123
  %2096 = vmatprep.subr.mxu0 %v118
  %2097 = vmatpush1.msra.mxu0 %v117
  %2098 = vmatprep.subr.mxu0 %v112
  %2099 = vmatpush1.msra.mxu0 %v111
  %2100 = vmatprep.subr.mxu0 %v106
  %2101 = vmatpush1.msra.mxu0 %v105
  %2102 = vmatprep.subr.mxu0 %v100
  %2103 = vmatpush1.msra.mxu0 %v99
  %2104 = vmatprep.subr.mxu0 %v94
  %2105 = vmatpush1.msra.mxu0 %v93
  %2106 = vmatprep.subr.mxu0 %v88
  %2107 = vmatpush1.msra.mxu0 %v87
  %2108 = vmatprep.subr.mxu0 %v82
  %2109 = vmatpush1.msra.mxu0 %v81
  %2110 = vmatprep.subr.mxu0 %v76
  %2111 = vmatpush1.msra.mxu0 %v75
  %2112 = vmatprep.subr.mxu0 %v70
  %2113 = vmatpush1.msra.mxu0 %v69
  %2114 = vmatprep.subr.mxu0 %v64
  %2115 = vmatpush1.msra.mxu0 %v63
  %2116 = vmatprep.subr.mxu0 %v58
  %2117 = vmatpush1.msra.mxu0 %v57
  %2118 = vmatprep.subr.mxu0 %v52
  %2119 = vmatpush1.msra.mxu0 %v51
  %2120 = vmatprep.subr.mxu0 %v46
  %2121 = vmatpush1.msra.mxu0 %v45
  %2122 = vmatprep.subr.mxu0 %v40
  %2123 = vmatpush1.msra.mxu0 %v39
  %2124 = vmatprep.subr.mxu0 %v34
  %2125 = vmatpush1.msra.mxu0 %v33
  %2126 = vmatprep.subr.mxu0 0.0
  %2127 = vmatpush2.msra.mxu0 0.0
  %2128 = vmatprep.subr.mxu0 0.0
  %2129 = vmatpush2.msra.mxu0 0.0
  %2130 = vmatprep.subr.mxu0 0.0
  %2131 = vmatpush2.msra.mxu0 0.0
  %2132 = vmatprep.subr.mxu0 0.0
  %2133 = vmatpush2.msra.mxu0 0.0
  %2134 = vmatprep.subr.mxu0 0.0
  %2135 = vmatpush2.msra.mxu0 0.0
  %2136 = vmatprep.subr.mxu0 0.0
  %2137 = vmatpush2.msra.mxu0 0.0
  %2138 = vmatprep.subr.mxu0 0.0
  %2139 = vmatpush2.msra.mxu0 0.0
  %2140 = vmatprep.subr.mxu0 0.0
  %2141 = vmatpush2.msra.mxu0 0.0
  %2142 = vmatprep.subr.mxu0 0.0
  %2143 = vmatpush2.msra.mxu0 0.0
  %2144 = vmatprep.subr.mxu0 0.0
  %2145 = vmatpush2.msra.mxu0 0.0
  %2146 = vmatprep.subr.mxu0 0.0
  %2147 = vmatpush2.msra.mxu0 0.0
  %2148 = vmatprep.subr.mxu0 0.0
  %2149 = vmatpush2.msra.mxu0 0.0
  %2150 = vmatprep.subr.mxu0 0.0
  %2151 = vmatpush2.msra.mxu0 0.0
  %2152 = vmatprep.subr.mxu0 0.0
  %2153 = vmatpush2.msra.mxu0 0.0
  %2154 = vmatprep.subr.mxu0 0.0
  %2155 = vmatpush2.msra.mxu0 0.0
  %2156 = vmatprep.subr.mxu0 0.0
  %2157 = vmatpush2.msra.mxu0 0.0
  %2158 = vmatprep.mubr.f32.mxu0 0.0
  %2159 = vmatmul.mubr.f32.gmra.mxu0 %v2086
  %v2160 = vpop.f32.mrf.mxu0
  %v2161 = vadd.f32 0.0, %v2160
  %v2162 = vpop.f32.mrf.mxu0
  %v2163 = vadd.f32 0.0, %v2162
  %2164 = vdwg.mxu0
  %2165 = vmatprep.subr.mxu0 %v126
  %2166 = vmatpush1.msra.mxu0 %v125
  %2167 = vmatprep.subr.mxu0 %v120
  %2168 = vmatpush1.msra.mxu0 %v119
  %2169 = vmatprep.subr.mxu0 %v114
  %2170 = vmatpush1.msra.mxu0 %v113
  %2171 = vmatprep.subr.mxu0 %v108
  %2172 = vmatpush1.msra.mxu0 %v107
  %2173 = vmatprep.subr.mxu0 %v102
  %2174 = vmatpush1.msra.mxu0 %v101
  %2175 = vmatprep.subr.mxu0 %v96
  %2176 = vmatpush1.msra.mxu0 %v95
  %2177 = vmatprep.subr.mxu0 %v90
  %2178 = vmatpush1.msra.mxu0 %v89
  %2179 = vmatprep.subr.mxu0 %v84
  %2180 = vmatpush1.msra.mxu0 %v83
  %2181 = vmatprep.subr.mxu0 %v78
  %2182 = vmatpush1.msra.mxu0 %v77
  %2183 = vmatprep.subr.mxu0 %v72
  %2184 = vmatpush1.msra.mxu0 %v71
  %2185 = vmatprep.subr.mxu0 %v66
  %2186 = vmatpush1.msra.mxu0 %v65
  %2187 = vmatprep.subr.mxu0 %v60
  %2188 = vmatpush1.msra.mxu0 %v59
  %2189 = vmatprep.subr.mxu0 %v54
  %2190 = vmatpush1.msra.mxu0 %v53
  %2191 = vmatprep.subr.mxu0 %v48
  %2192 = vmatpush1.msra.mxu0 %v47
  %2193 = vmatprep.subr.mxu0 %v42
  %2194 = vmatpush1.msra.mxu0 %v41
  %2195 = vmatprep.subr.mxu0 %v36
  %2196 = vmatpush1.msra.mxu0 %v35
  %2197 = vmatprep.subr.mxu0 0.0
  %2198 = vmatpush2.msra.mxu0 0.0
  %2199 = vmatprep.subr.mxu0 0.0
  %2200 = vmatpush2.msra.mxu0 0.0
  %2201 = vmatprep.subr.mxu0 0.0
  %2202 = vmatpush2.msra.mxu0 0.0
  %2203 = vmatprep.subr.mxu0 0.0
  %2204 = vmatpush2.msra.mxu0 0.0
  %2205 = vmatprep.subr.mxu0 0.0
  %2206 = vmatpush2.msra.mxu0 0.0
  %2207 = vmatprep.subr.mxu0 0.0
  %2208 = vmatpush2.msra.mxu0 0.0
  %2209 = vmatprep.subr.mxu0 0.0
  %2210 = vmatpush2.msra.mxu0 0.0
  %2211 = vmatprep.subr.mxu0 0.0
  %2212 = vmatpush2.msra.mxu0 0.0
  %2213 = vmatprep.subr.mxu0 0.0
  %2214 = vmatpush2.msra.mxu0 0.0
  %2215 = vmatprep.subr.mxu0 0.0
  %2216 = vmatpush2.msra.mxu0 0.0
  %2217 = vmatprep.subr.mxu0 0.0
  %2218 = vmatpush2.msra.mxu0 0.0
  %2219 = vmatprep.subr.mxu0 0.0
  %2220 = vmatpush2.msra.mxu0 0.0
  %2221 = vmatprep.subr.mxu0 0.0
  %2222 = vmatpush2.msra.mxu0 0.0
  %2223 = vmatprep.subr.mxu0 0.0
  %2224 = vmatpush2.msra.mxu0 0.0
  %2225 = vmatprep.subr.mxu0 0.0
  %2226 = vmatpush2.msra.mxu0 0.0
  %2227 = vmatprep.subr.mxu0 0.0
  %2228 = vmatpush2.msra.mxu0 0.0
  %2229 = vmatprep.mubr.f32.mxu0 0.0
  %2230 = vmatmul.mubr.f32.gmra.mxu0 %v2086
  %v2231 = vpop.f32.mrf.mxu0
  %v2232 = vadd.f32 0.0, %v2231
  %v2233 = vpop.f32.mrf.mxu0
  %v2234 = vadd.f32 0.0, %v2233
  %2235 = vdwg.mxu0
  %2236 = vmatprep.subr.mxu0 %v128
  %2237 = vmatpush1.msra.mxu0 %v127
  %2238 = vmatprep.subr.mxu0 %v122
  %2239 = vmatpush1.msra.mxu0 %v121
  %2240 = vmatprep.subr.mxu0 %v116
  %2241 = vmatpush1.msra.mxu0 %v115
  %2242 = vmatprep.subr.mxu0 %v110
  %2243 = vmatpush1.msra.mxu0 %v109
  %2244 = vmatprep.subr.mxu0 %v104
  %2245 = vmatpush1.msra.mxu0 %v103
  %2246 = vmatprep.subr.mxu0 %v98
  %2247 = vmatpush1.msra.mxu0 %v97
  %2248 = vmatprep.subr.mxu0 %v92
  %2249 = vmatpush1.msra.mxu0 %v91
  %2250 = vmatprep.subr.mxu0 %v86
  %2251 = vmatpush1.msra.mxu0 %v85
  %2252 = vmatprep.subr.mxu0 %v80
  %2253 = vmatpush1.msra.mxu0 %v79
  %2254 = vmatprep.subr.mxu0 %v74
  %2255 = vmatpush1.msra.mxu0 %v73
  %2256 = vmatprep.subr.mxu0 %v68
  %2257 = vmatpush1.msra.mxu0 %v67
  %2258 = vmatprep.subr.mxu0 %v62
  %2259 = vmatpush1.msra.mxu0 %v61
  %2260 = vmatprep.subr.mxu0 %v56
  %2261 = vmatpush1.msra.mxu0 %v55
  %2262 = vmatprep.subr.mxu0 %v50
  %2263 = vmatpush1.msra.mxu0 %v49
  %2264 = vmatprep.subr.mxu0 %v44
  %2265 = vmatpush1.msra.mxu0 %v43
  %2266 = vmatprep.subr.mxu0 %v38
  %2267 = vmatpush1.msra.mxu0 %v37
  %2268 = vmatprep.subr.mxu0 0.0
  %2269 = vmatpush2.msra.mxu0 0.0
  %2270 = vmatprep.subr.mxu0 0.0
  %2271 = vmatpush2.msra.mxu0 0.0
  %2272 = vmatprep.subr.mxu0 0.0
  %2273 = vmatpush2.msra.mxu0 0.0
  %2274 = vmatprep.subr.mxu0 0.0
  %2275 = vmatpush2.msra.mxu0 0.0
  %2276 = vmatprep.subr.mxu0 0.0
  %2277 = vmatpush2.msra.mxu0 0.0
  %2278 = vmatprep.subr.mxu0 0.0
  %2279 = vmatpush2.msra.mxu0 0.0
  %2280 = vmatprep.subr.mxu0 0.0
  %2281 = vmatpush2.msra.mxu0 0.0
  %2282 = vmatprep.subr.mxu0 0.0
  %2283 = vmatpush2.msra.mxu0 0.0
  %2284 = vmatprep.subr.mxu0 0.0
  %2285 = vmatpush2.msra.mxu0 0.0
  %2286 = vmatprep.subr.mxu0 0.0
  %2287 = vmatpush2.msra.mxu0 0.0
  %2288 = vmatprep.subr.mxu0 0.0
  %2289 = vmatpush2.msra.mxu0 0.0
  %2290 = vmatprep.subr.mxu0 0.0
  %2291 = vmatpush2.msra.mxu0 0.0
  %2292 = vmatprep.subr.mxu0 0.0
  %2293 = vmatpush2.msra.mxu0 0.0
  %2294 = vmatprep.subr.mxu0 0.0
  %2295 = vmatpush2.msra.mxu0 0.0
  %2296 = vmatprep.subr.mxu0 0.0
  %2297 = vmatpush2.msra.mxu0 0.0
  %2298 = vmatprep.subr.mxu0 0.0
  %2299 = vmatpush2.msra.mxu0 0.0
  %2300 = vmatprep.mubr.f32.mxu0 0.0
  %2301 = vmatmul.mubr.f32.gmra.mxu0 %v2086
  %v2302 = vpop.f32.mrf.mxu0
  %v2303 = vadd.f32 0.0, %v2302
  %v2304 = vpop.f32.mrf.mxu0
  %v2305 = vadd.f32 0.0, %v2304
  %2306 = vdwg.mxu0
  %v2307 = vadd.f32 %v2088, %v2161
  %v2308 = vadd.f32 %v2089, %v2163
  %v2309 = vadd.f32 %v2090, %v2232
  %v2310 = vadd.f32 %v2091, %v2234
  %v2311 = vadd.f32 %v2092, %v2303
  %v2312 = vadd.f32 %v2093, %v2305
  %v2313 = vxor.u32 %v2307, 2147483648
  %v2314 = vmul.f32 %v2313, 1.442695
  %v2315 = vpow.pop %v2314
  %v2316 = vadd.f32 %v2315, 1.0
  %v2317 = vrcp.pop %v2316
  %v2318 = vmul.f32 1.0, %v2317
  %v2319 = vxor.u32 %v2308, 2147483648
  %v2320 = vmul.f32 %v2319, 1.442695
  %v2321 = vpow.pop %v2320
  %v2322 = vadd.f32 %v2321, 1.0
  %v2323 = vrcp.pop %v2322
  %v2324 = vmul.f32 1.0, %v2323
  %v2325 = vtanh.pop %v2309
  %v2326 = vxor.u32 %v2310, 2147483648
  %v2327 = vmul.f32 %v2326, 1.442695
  %v2328 = vpow.pop %v2327
  %v2329 = vadd.f32 %v2328, 1.0
  %v2330 = vrcp.pop %v2329
  %v2331 = vmul.f32 1.0, %v2330
  %v2332 = vxor.u32 %v2311, 2147483648
  %v2333 = vmul.f32 %v2332, 1.442695
  %v2334 = vpow.pop %v2333
  %v2335 = vadd.f32 %v2334, 1.0
  %v2336 = vrcp.pop %v2335
  %v2337 = vmul.f32 1.0, %v2336
  %v2338 = vtanh.pop %v2312
  %v2339 = vmul.f32 %v2318, %v2325
  %v2340 = vmul.f32 %v2337, %v2338
  %v2341 = vmul.f32 %v2339, %v388
  %2342 = vadd.xlane.f32.xlu0 %v2341
  %v2343 = vpop.xlane.xlu0 %2342
  %v2344 = vadd.f32 %v2343, %v393
  %v2345 = vtanh.pop %v2344
  %v2346 = vmul.f32 %v2340, %v388
  %2347 = vadd.xlane.f32.xlu0 %v2346
  %v2348 = vpop.xlane.xlu0 %2347
  %v2349 = vadd.f32 %v2348, %v393
  %v2350 = vtanh.pop %v2349
  %v2351 = vsub.f32 %v2345, %v2350
  %v2352 = vxor.u32 %v2351, 2147483648
  %v2353 = vmul.f32 %v2352, 1.442695
  %v2354 = vpow.pop %v2353
  %v2355 = vadd.f32 %v2354, 1.0
  %v2356 = vrcp.pop %v2355
  %v2357 = vmul.f32 1.0, %v2356
  %v2358 = vsub.f32 %v2339, %v2340
  %v2359 = vmul.f32 %v2357, %v2358
  %v2360 = vadd.f32 %v2340, %v2359
  %v2361 = vmul.f32 %v2324, %v2084
  %v2362 = vadd.f32 %v2361, %v2360
  %v2363 = vtanh.pop %v2362
  %v2364 = vmul.f32 %v2331, %v2363
  // Predicated region
  $region34: #{milstm_forward.3} parent=0 // pred_check
    %p2365 = pneg %p24
  $region35: #{milstm_forward.3} parent=0 // pred_check_branch
    %2367 = sbr.rel (%p2365) target = $region37
  $region36: #{milstm_forward.3} parent=0 // pred_region
    %2368 = vst [vmem:[#allocation4] sm:$0x2] %v2364
  $region37: #{milstm_forward.3} parent=0 // pred_fallthru
    _
  %2369 = vst [vmem:[#allocation2] sm:$0xff] %v2364
  %2370 = vst [vmem:[#allocation3] sm:$0xff] %v2362
  // Predicated region
  $region38: #{milstm_forward.3} parent=0 // pred_check
    %p2371 = pneg %p24
  $region39: #{milstm_forward.3} parent=0 // pred_check_branch
    %2373 = sbr.rel (%p2371) target = $region41
  $region40: #{milstm_forward.3} parent=0 // pred_region
    %v2374 = vld [vmem:[#allocation4] sm:$0xff]
    %v2375 = vld [vmem:[%s4] sm:$0xff]
    %v2376 = vld [vmem:[%s4 + $0x8] sm:$0xff]
    %v2377 = vld [vmem:[%s4 + $0x10] sm:$0xff]
    %v2378 = vld [vmem:[%s4 + $0x18] sm:$0xff]
    %v2379 = vld [vmem:[%s4 + $0x20] sm:$0xff]
    %v2380 = vld [vmem:[%s4 + $0x28] sm:$0xff]
    %v2381 = vld [vmem:[%s4 + $0x30] sm:$0xff]
    %v2382 = vld [vmem:[%s4 + $0x38] sm:$0xff]
    %v2383 = vld [vmem:[%s4 + $0x40] sm:$0xff]
    %v2384 = vld [vmem:[%s4 + $0x48] sm:$0xff]
    %v2385 = vld [vmem:[%s4 + $0x50] sm:$0xff]
    %v2386 = vld [vmem:[%s4 + $0x58] sm:$0xff]
    %v2387 = vld [vmem:[%s4 + $0x60] sm:$0xff]
    %v2388 = vld [vmem:[%s4 + $0x68] sm:$0xff]
    %v2389 = vld [vmem:[%s4 + $0x70] sm:$0xff]
    %v2390 = vld [vmem:[%s4 + $0x78] sm:$0xff]
    %v2391 = vld [vmem:[%s5] sm:$0x1]
    %v2393 = vlaneseq
    %v2394 = vshrl.u32 %v2393, 7
    %v2395 = vsub.s32 0, %v2394
    %v2396 = vrot.slane %v2391, %v2395
    %2398 = vmatprep.subr.mxu0 0.0
    %2399 = vmatpush1.msra.mxu0 %v2390
    %2400 = vmatprep.subr.mxu0 0.0
    %2401 = vmatpush1.msra.mxu0 %v2389
    %2402 = vmatprep.subr.mxu0 0.0
    %2403 = vmatpush1.msra.mxu0 %v2388
    %2404 = vmatprep.subr.mxu0 0.0
    %2405 = vmatpush1.msra.mxu0 %v2387
    %2406 = vmatprep.subr.mxu0 0.0
    %2407 = vmatpush1.msra.mxu0 %v2386
    %2408 = vmatprep.subr.mxu0 0.0
    %2409 = vmatpush1.msra.mxu0 %v2385
    %2410 = vmatprep.subr.mxu0 0.0
    %2411 = vmatpush1.msra.mxu0 %v2384
    %2412 = vmatprep.subr.mxu0 0.0
    %2413 = vmatpush1.msra.mxu0 %v2383
    %2414 = vmatprep.subr.mxu0 0.0
    %2415 = vmatpush1.msra.mxu0 %v2382
    %2416 = vmatprep.subr.mxu0 0.0
    %2417 = vmatpush1.msra.mxu0 %v2381
    %2418 = vmatprep.subr.mxu0 0.0
    %2419 = vmatpush1.msra.mxu0 %v2380
    %2420 = vmatprep.subr.mxu0 0.0
    %2421 = vmatpush1.msra.mxu0 %v2379
    %2422 = vmatprep.subr.mxu0 0.0
    %2423 = vmatpush1.msra.mxu0 %v2378
    %2424 = vmatprep.subr.mxu0 0.0
    %2425 = vmatpush1.msra.mxu0 %v2377
    %2426 = vmatprep.subr.mxu0 0.0
    %2427 = vmatpush1.msra.mxu0 %v2376
    %2428 = vmatprep.subr.mxu0 0.0
    %2429 = vmatpush1.msra.mxu0 %v2375
    %2430 = vmatprep.subr.mxu0 0.0
    %2431 = vmatpush2.msra.mxu0 0.0
    %2432 = vmatprep.subr.mxu0 0.0
    %2433 = vmatpush2.msra.mxu0 0.0
    %2434 = vmatprep.subr.mxu0 0.0
    %2435 = vmatpush2.msra.mxu0 0.0
    %2436 = vmatprep.subr.mxu0 0.0
    %2437 = vmatpush2.msra.mxu0 0.0
    %2438 = vmatprep.subr.mxu0 0.0
    %2439 = vmatpush2.msra.mxu0 0.0
    %2440 = vmatprep.subr.mxu0 0.0
    %2441 = vmatpush2.msra.mxu0 0.0
    %2442 = vmatprep.subr.mxu0 0.0
    %2443 = vmatpush2.msra.mxu0 0.0
    %2444 = vmatprep.subr.mxu0 0.0
    %2445 = vmatpush2.msra.mxu0 0.0
    %2446 = vmatprep.subr.mxu0 0.0
    %2447 = vmatpush2.msra.mxu0 0.0
    %2448 = vmatprep.subr.mxu0 0.0
    %2449 = vmatpush2.msra.mxu0 0.0
    %2450 = vmatprep.subr.mxu0 0.0
    %2451 = vmatpush2.msra.mxu0 0.0
    %2452 = vmatprep.subr.mxu0 0.0
    %2453 = vmatpush2.msra.mxu0 0.0
    %2454 = vmatprep.subr.mxu0 0.0
    %2455 = vmatpush2.msra.mxu0 0.0
    %2456 = vmatprep.subr.mxu0 0.0
    %2457 = vmatpush2.msra.mxu0 0.0
    %2458 = vmatprep.subr.mxu0 0.0
    %2459 = vmatpush2.msra.mxu0 0.0
    %2460 = vmatprep.subr.mxu0 0.0
    %2461 = vmatpush2.msra.mxu0 0.0
    %2462 = vmatprep.mubr.f32.mxu0 0.0
    %2463 = vmatmul.mubr.f32.gmra.mxu0 %v2374
    %v2464 = vpop.f32.mrf.mxu0
    %v2465 = vadd.f32 %v2396, %v2464
    %v2466 = vpop.f32.mrf.mxu0
    %2467 = vdwg.mxu0
    %2468 = vst [vmem:[%s6] sm:$0xff] %v2465
  $region41: #{milstm_forward.3} parent=0 // pred_fallthru
    _
  // Predicated region
  $region42: #{milstm_forward.3} parent=0 // pred_check
    _
  $region43: #{milstm_forward.3} parent=0 // pred_check_branch
    %2470 = sbr.rel (0) target = $region45
  $region44: #{milstm_forward.3} parent=0 // pred_region
    _
  $region45: #{milstm_forward.3} parent=0 // pred_fallthru
    _
  // Predicated region
  $region46: #{milstm_forward.3} parent=0 // pred_check
    _
  $region47: #{milstm_forward.3} parent=0 // pred_check_branch
    %2472 = sbr.rel (0) target = $region49
  $region48: #{milstm_forward.3} parent=0 // pred_region
    _
  $region49: #{milstm_forward.3} parent=0 // pred_fallthru
    _

</llo_original>
